<compile_context>
chip_gen: v6e
topology: v6e:2x2x1
jax: 0.10.0
libtpu: 0.0.40
codegen_flags: <defaults>
</compile_context>

<pallas_src>
import functools

import jax
import jax.numpy as jnp
import numpy as np
from jax import lax
from jax.experimental import pallas as pl
from jax.experimental.pallas import tpu as pltpu


# ----------------------------------------------------------------------------
# Pallas kernel: one grid step == one layer.
# ----------------------------------------------------------------------------
def _cka_layer_kernel(t_ref, s_ref, inter_ref, exter_ref, *, matmul_dtype):
    f32 = jnp.float32
    _, B, S, H = t_ref.shape
    nt = (((1,), (1,)), ((), ()))   # A @ B^T   (contract hidden axis)
    tn = (((0,), (0,)), ((), ()))   # A^T @ B   (contract sequence axis)
    tiny = f32(1e-30)

    # --- centering prologue (f32 temporary is transient, not pinned) --------
    def centered(ref):
        Xf = ref[0].astype(f32)                                   # [B,S,H]
        # centering(X X^T) == (X - mean)(X - mean)^T, so center once and skip
        # the H @ K @ H centering matmuls entirely.
        xc = (Xf - jnp.mean(Xf, axis=1, keepdims=True)).astype(matmul_dtype)
        xg = Xf - jnp.mean(Xf, axis=0, keepdims=True)             # f32 (VPU)
        return xc, xg

    Xc, Xg = centered(t_ref)   # Xc: seq-centered (inter/MXU), Xg: batch-centered
    Yc, Yg = centered(s_ref)   # (exter/VPU)

    ratio_sum = jnp.zeros((1, 1), f32)
    exy = jnp.zeros((1, 1), f32)
    exx = jnp.zeros((1, 1), f32)
    eyy = jnp.zeros((1, 1), f32)
    inv_n = f32(1.0 / (S * H))       # scale cancels in the ratio; guards f32 range

    # One iteration per sample: MXU Grams (inter) and VPU Gram rows (exter)
    # are independent and co-issue in the VLIW bundles.  Leading-dim slices
    # Xc[b] / Xg[b] are free (no relayout).
    for b in range(B):
        Xb = Xc[b]                   # [S, H]
        Yb = Yc[b]
        if S <= H:
            # Gram-space: [S,S] centered Grams, reduced immediately.
            Kxb = lax.dot_general(Xb, Xb, nt, preferred_element_type=f32)
            Kyb = lax.dot_general(Yb, Yb, nt, preferred_element_type=f32)
            hxy = jnp.sum(Kxb * Kyb, keepdims=True)
            hxx = jnp.sum(Kxb * Kxb, keepdims=True)
            hyy = jnp.sum(Kyb * Kyb, keepdims=True)
        else:
            # Feature-space: tr(Kx Ky) == ||Xc^T Yc||_F^2 with [H,H]
            # covariances; transpose folded into the dot_general dims.
            Cxy = lax.dot_general(Xb, Yb, tn, preferred_element_type=f32)
            Cxx = lax.dot_general(Xb, Xb, tn, preferred_element_type=f32)
            Cyy = lax.dot_general(Yb, Yb, tn, preferred_element_type=f32)
            hxy = jnp.sum(Cxy * Cxy, keepdims=True)
            hxx = jnp.sum(Cxx * Cxx, keepdims=True)
            hyy = jnp.sum(Cyy * Cyy, keepdims=True)
        ratio_sum = ratio_sum + (jnp.abs(hxy)
                                 * lax.rsqrt(hxx + tiny)
                                 * lax.rsqrt(hyy + tiny))

        # exter Gram row b: Kx2[b, :] = <Xg[b], Xg[j]>_{s,h} for all j.
        # Broadcast multiply over the leading (batch) dim + f32 reductions.
        kx = jnp.sum(jnp.sum(Xg[b] * Xg, axis=-1), axis=-1, keepdims=True)  # [B,1]
        ky = jnp.sum(jnp.sum(Yg[b] * Yg, axis=-1), axis=-1, keepdims=True)
        kx = kx * inv_n
        ky = ky * inv_n
        exy = exy + jnp.sum(kx * ky, keepdims=True)
        exx = exx + jnp.sum(kx * kx, keepdims=True)
        eyy = eyy + jnp.sum(ky * ky, keepdims=True)

    # /(B^2-1) HSIC normalization and the 1/(S*H) row scaling cancel in the
    # ratios, so they are dropped / applied only for f32-range safety.
    cka_inter = -jnp.log(ratio_sum * f32(1.0 / B) + 1e-8)
    cka_exter = -jnp.log(jnp.abs(exy)
                         * lax.rsqrt(exx + tiny)
                         * lax.rsqrt(eyy + tiny) + 1e-8)

    inter_ref[...] = cka_inter.reshape(1, 1, 1)
    exter_ref[...] = cka_exter.reshape(1, 1, 1)


# ----------------------------------------------------------------------------
# Wrapper.
# ----------------------------------------------------------------------------
def _vmem_capacity_bytes():
    try:
        info = pltpu.get_tpu_info()
        cap = getattr(info, "vmem_capacity_bytes", None)
        if cap:
            return int(cap)
    except Exception:
        pass
    return 128 * 1024 * 1024


def _as_stacked(x):
    if isinstance(x, (list, tuple)):
        return jnp.stack(x)
    x = jnp.asarray(x)
    assert x.ndim == 4, "expected pre-stacked [L, B, S, H] activations"
    return x


def cka_mixed_loss(teacher, student, per_gpu_train_batch_size, *,
                   matmul_dtype=jnp.bfloat16):
    """teacher/student: lists of [B,S,H] activations or pre-stacked [L,B,S,H]."""
    t = _as_stacked(teacher)         # accepting pre-stacked avoids an HBM copy
    s = _as_stacked(student)
    assert t.shape == s.shape
    L, B, S, Hd = t.shape
    assert B == per_gpu_train_batch_size
    matmul_dtype = jnp.dtype(matmul_dtype)

    kernel = functools.partial(_cka_layer_kernel, matmul_dtype=matmul_dtype)

    grid_spec = pltpu.PrefetchScalarGridSpec(
        num_scalar_prefetch=0,
        grid=(L,),
        in_specs=[
            pl.BlockSpec((1, B, S, Hd), lambda l: (l, 0, 0, 0)),
            pl.BlockSpec((1, B, S, Hd), lambda l: (l, 0, 0, 0)),
        ],
        out_specs=[
            pl.BlockSpec((1, 1, 1), lambda l: (l, 0, 0)),
            pl.BlockSpec((1, 1, 1), lambda l: (l, 0, 0)),
        ],
    )

    # Per-layer VMEM working-set estimate (used only to raise the scoped limit).
    in_blk = B * S * Hd * t.dtype.itemsize
    mm_blk = B * S * Hd * matmul_dtype.itemsize
    f32_blk = B * S * Hd * 4
    grams = 3 * (min(S, Hd) ** 2) * 4            # per-sample Grams + product temp
    means = 2 * (B * Hd + S * Hd) * 4
    vmem_est = (2 * 2 * in_blk                   # 2 inputs x 2 pipeline buffers
                + f32_blk                        # transient f32 centering copy
                + 2 * mm_blk                     # Xc, Yc (MXU operands)
                + 2 * f32_blk                    # Xg, Yg (f32 VPU exter path)
                + f32_blk                        # per-row broadcast product temp
                + grams + means)
    vmem_est = int(vmem_est * 5 // 4)            # slack for compiler temporaries

    cp = dict(dimension_semantics=("parallel",))  # layers are independent
    if vmem_est > 16 * 1024 * 1024:
        # Generation-aware cap: ~48 MiB on v7x (64 MiB physical), ~96 MiB on
        # v5e/v6e (128 MiB physical), leaving headroom for compiler scratch.
        cap = (_vmem_capacity_bytes() * 3) // 4
        # TODO(synk): if vmem_est > cap (production B,S,H on v7x), tile the
        # sequence axis with an extra grid dimension + scratch accumulators
        # instead of only raising the limit.
        cp["vmem_limit_bytes"] = int(min(vmem_est, cap))

    inter_layers, exter_layers = pl.pallas_call(
        kernel,
        out_shape=(
            jax.ShapeDtypeStruct((L, 1, 1), jnp.float32),
            jax.ShapeDtypeStruct((L, 1, 1), jnp.float32),
        ),
        grid_spec=grid_spec,
        compiler_params=pltpu.CompilerParams(**cp),
    )(t, s)

    inv_l = jnp.float32(1.0 / L)
    return jnp.sum(inter_layers) * inv_l, jnp.sum(exter_layers) * inv_l


# ----------------------------------------------------------------------------
# Pure-JAX reference (literal translation of the PyTorch code) for checking.
# ----------------------------------------------------------------------------
def _centering_ref(K):
    n = K.shape[-1]
    Hm = jnp.eye(n, dtype=jnp.float32) - 1.0 / n
    return jnp.matmul(jnp.matmul(Hm, K), Hm)


def _linear_hsic_ref(X, Y):
    if X.ndim >= 3 and Y.ndim >= 3:
        Lx = jnp.matmul(X, jnp.swapaxes(X, -2, -1))
        Ly = jnp.matmul(Y, jnp.swapaxes(Y, -2, -1))
        return jnp.sum(_centering_ref(Lx) * _centering_ref(Ly), axis=(-2, -1))
    Lx = jnp.matmul(X, X.T)
    Ly = jnp.matmul(Y, Y.T)
    sx = _centering_ref(Lx)
    sy = _centering_ref(Ly)
    return jnp.trace(jnp.matmul(sx, sy)) / (X.shape[-2] ** 2 - 1)


def _linear_cka_loss_ref(X, Y):
    hsic = _linear_hsic_ref(X, Y)
    v1 = jnp.sqrt(_linear_hsic_ref(X, X))
    v2 = jnp.sqrt(_linear_hsic_ref(Y, Y))
    return -jnp.log(jnp.mean(jnp.abs(hsic / (v1 * v2))) + 1e-8)


def cka_mixed_loss_ref(teacher, student, batch_size, length):
    inter, exter = 0.0, 0.0
    for i in range(length):
        inter += _linear_cka_loss_ref(teacher[i], student[i])
        exter += _linear_cka_loss_ref(teacher[i].reshape(batch_size, -1),
                                      student[i].reshape(batch_size, -1))
    return inter / length, exter / length


# ----------------------------------------------------------------------------
if __name__ == "__main__":
    key = jax.random.PRNGKey(0)

    def make_inputs(k, L, B, S, Hd):
        kt, ks = jax.random.split(k)
        teacher = [
            jax.random.normal(jax.random.fold_in(kt, i), (B, S, Hd), jnp.float32)
            for i in range(L)
        ]
        student = [
            0.5 * teacher[i]
            + 0.5 * jax.random.normal(jax.random.fold_in(ks, i), (B, S, Hd),
                                      jnp.float32)
            for i in range(L)
        ]
        return teacher, student

    # Case 1: S <= H -> Gram-space inter path.
    L1, B1, S1, H1 = 5, 8, 8, 128
    teacher1, student1 = make_inputs(jax.random.fold_in(key, 1), L1, B1, S1, H1)

    with jax.default_matmul_precision("highest"):
        ref_i1, ref_e1 = jax.block_until_ready(
            cka_mixed_loss_ref(teacher1, student1, B1, L1))

    # Default path (bf16 MXU operands, f32 accumulation).
    inter1, exter1 = jax.block_until_ready(cka_mixed_loss(teacher1, student1, B1))
    np.testing.assert_allclose(np.asarray(inter1), np.asarray(ref_i1),
                               rtol=5e-2, atol=5e-2)
    np.testing.assert_allclose(np.asarray(exter1), np.asarray(ref_e1),
                               rtol=5e-2, atol=5e-2)

    # Full-f32 MXU variant (tighter tolerance).
    inter1f, exter1f = jax.block_until_ready(
        cka_mixed_loss(teacher1, student1, B1, matmul_dtype=jnp.float32))
    np.testing.assert_allclose(np.asarray(inter1f), np.asarray(ref_i1),
                               rtol=1e-2, atol=1e-2)
    np.testing.assert_allclose(np.asarray(exter1f), np.asarray(ref_e1),
                               rtol=1e-2, atol=1e-2)

    # Case 2: S > H -> feature-space inter path ([H,H] covariances, folded
    # transposes); also exercises the pre-stacked [L,B,S,H] input path.
    L2, B2, S2, H2 = 3, 4, 32, 16
    teacher2, student2 = make_inputs(jax.random.fold_in(key, 2), L2, B2, S2, H2)

    with jax.default_matmul_precision("highest"):
        ref_i2, ref_e2 = jax.block_until_ready(
            cka_mixed_loss_ref(teacher2, student2, B2, L2))

    inter2, exter2 = jax.block_until_ready(
        cka_mixed_loss(jnp.stack(teacher2), jnp.stack(student2), B2))
    np.testing.assert_allclose(np.asarray(inter2), np.asarray(ref_i2),
                               rtol=5e-2, atol=5e-2)
    np.testing.assert_allclose(np.asarray(exter2), np.asarray(ref_e2),
                               rtol=5e-2, atol=5e-2)

    print("KERNEL_OK")
</pallas_src>

<mosaic_0001>
module attributes {stable_mosaic.version = 11 : i64} {
  func.func @_cka_layer_kernel(%arg0: i32, %arg1: memref<1x8x8x128xf32, #tpu.memory_space<vmem>>, %arg2: memref<1x8x8x128xf32, #tpu.memory_space<vmem>>, %arg3: memref<1x1x1xf32, #tpu.memory_space<vmem>>, %arg4: memref<1x1x1xf32, #tpu.memory_space<vmem>>) attributes {dimension_semantics = [#tpu.dimension_semantics<parallel>], iteration_bounds = array<i64: 5>, scalar_prefetch = 0 : i64, scratch_operands = 0 : i64, tpu.core_type = #tpu.core_type<tc>, window_params = [{transform_indices = @transform_0, window_bounds = array<i64: 1, 8, 8, 128>}, {transform_indices = @transform_1, window_bounds = array<i64: 1, 8, 8, 128>}, {transform_indices = @transform_2, window_bounds = array<i64: 1, 1, 1>}, {transform_indices = @transform_3, window_bounds = array<i64: 1, 1, 1>}]} {
    %c0 = arith.constant 0 : index
    %c0_0 = arith.constant 0 : index
    %c0_1 = arith.constant 0 : index
    %c0_2 = arith.constant 0 : index
    %0 = vector.load %arg1[%c0, %c0_0, %c0_1, %c0_2] : memref<1x8x8x128xf32, #tpu.memory_space<vmem>>, vector<1x8x8x128xf32>
    %1 = vector.shape_cast %0 : vector<1x8x8x128xf32> to vector<8x8x128xf32>
    %cst = arith.constant dense<0.000000e+00> : vector<8x128xf32>
    %2 = vector.multi_reduction <add>, %1, %cst [1] : vector<8x8x128xf32> to vector<8x128xf32>
    %3 = vector.shape_cast %2 : vector<8x128xf32> to vector<8x1x128xf32>
    %cst_3 = arith.constant 8.000000e+00 : f32
    %4 = vector.broadcast %cst_3 : f32 to vector<8x1x128xf32>
    %5 = arith.divf %3, %4 : vector<8x1x128xf32>
    %6 = vector.broadcast %5 : vector<8x1x128xf32> to vector<8x8x128xf32>
    %7 = arith.subf %1, %6 : vector<8x8x128xf32>
    %8 = arith.truncf %7 : vector<8x8x128xf32> to vector<8x8x128xbf16>
    %cst_4 = arith.constant dense<0.000000e+00> : vector<8x128xf32>
    %9 = vector.multi_reduction <add>, %1, %cst_4 [0] : vector<8x8x128xf32> to vector<8x128xf32>
    %10 = vector.shape_cast %9 : vector<8x128xf32> to vector<1x8x128xf32>
    %cst_5 = arith.constant 8.000000e+00 : f32
    %11 = vector.broadcast %cst_5 : f32 to vector<1x8x128xf32>
    %12 = arith.divf %10, %11 : vector<1x8x128xf32>
    %13 = vector.broadcast %12 : vector<1x8x128xf32> to vector<8x8x128xf32>
    %14 = arith.subf %1, %13 : vector<8x8x128xf32>
    %c0_6 = arith.constant 0 : index
    %c0_7 = arith.constant 0 : index
    %c0_8 = arith.constant 0 : index
    %c0_9 = arith.constant 0 : index
    %15 = vector.load %arg2[%c0_6, %c0_7, %c0_8, %c0_9] : memref<1x8x8x128xf32, #tpu.memory_space<vmem>>, vector<1x8x8x128xf32>
    %16 = vector.shape_cast %15 : vector<1x8x8x128xf32> to vector<8x8x128xf32>
    %cst_10 = arith.constant dense<0.000000e+00> : vector<8x128xf32>
    %17 = vector.multi_reduction <add>, %16, %cst_10 [1] : vector<8x8x128xf32> to vector<8x128xf32>
    %18 = vector.shape_cast %17 : vector<8x128xf32> to vector<8x1x128xf32>
    %cst_11 = arith.constant 8.000000e+00 : f32
    %19 = vector.broadcast %cst_11 : f32 to vector<8x1x128xf32>
    %20 = arith.divf %18, %19 : vector<8x1x128xf32>
    %21 = vector.broadcast %20 : vector<8x1x128xf32> to vector<8x8x128xf32>
    %22 = arith.subf %16, %21 : vector<8x8x128xf32>
    %23 = arith.truncf %22 : vector<8x8x128xf32> to vector<8x8x128xbf16>
    %cst_12 = arith.constant dense<0.000000e+00> : vector<8x128xf32>
    %24 = vector.multi_reduction <add>, %16, %cst_12 [0] : vector<8x8x128xf32> to vector<8x128xf32>
    %25 = vector.shape_cast %24 : vector<8x128xf32> to vector<1x8x128xf32>
    %cst_13 = arith.constant 8.000000e+00 : f32
    %26 = vector.broadcast %cst_13 : f32 to vector<1x8x128xf32>
    %27 = arith.divf %25, %26 : vector<1x8x128xf32>
    %28 = vector.broadcast %27 : vector<1x8x128xf32> to vector<8x8x128xf32>
    %29 = arith.subf %16, %28 : vector<8x8x128xf32>
    %cst_14 = arith.constant 0.000000e+00 : f32
    %30 = vector.broadcast %cst_14 : f32 to vector<1x1xf32>
    %cst_15 = arith.constant 0.000000e+00 : f32
    %31 = vector.broadcast %cst_15 : f32 to vector<1x1xf32>
    %cst_16 = arith.constant 0.000000e+00 : f32
    %32 = vector.broadcast %cst_16 : f32 to vector<1x1xf32>
    %cst_17 = arith.constant 0.000000e+00 : f32
    %33 = vector.broadcast %cst_17 : f32 to vector<1x1xf32>
    %34 = vector.extract_strided_slice %8 {offsets = [0, 0, 0], sizes = [1, 8, 128], strides = [1, 1, 1]} : vector<8x8x128xbf16> to vector<1x8x128xbf16>
    %35 = vector.shape_cast %34 : vector<1x8x128xbf16> to vector<8x128xbf16>
    %36 = vector.extract_strided_slice %23 {offsets = [0, 0, 0], sizes = [1, 8, 128], strides = [1, 1, 1]} : vector<8x8x128xbf16> to vector<1x8x128xbf16>
    %37 = vector.shape_cast %36 : vector<1x8x128xbf16> to vector<8x128xbf16>
    %cst_18 = arith.constant dense<0.000000e+00> : vector<8x8xf32>
    %38 = tpu.matmul %35, %35, %cst_18 {dimension_numbers = #tpu.dot_dimension_numbers<[1], [1], [0], [0], [0, 0, 1, 0], [], []>} : vector<8x128xbf16>, vector<8x128xbf16>, vector<8x8xf32> -> vector<8x8xf32>
    %cst_19 = arith.constant dense<0.000000e+00> : vector<8x8xf32>
    %39 = tpu.matmul %37, %37, %cst_19 {dimension_numbers = #tpu.dot_dimension_numbers<[1], [1], [0], [0], [0, 0, 1, 0], [], []>} : vector<8x128xbf16>, vector<8x128xbf16>, vector<8x8xf32> -> vector<8x8xf32>
    %40 = arith.mulf %38, %39 : vector<8x8xf32>
    %41 = vector.shape_cast %40 : vector<8x8xf32> to vector<1x8x8xf32>
    %cst_20 = arith.constant dense<0.000000e+00> : vector<1xf32>
    %42 = vector.multi_reduction <add>, %41, %cst_20 [1, 2] : vector<1x8x8xf32> to vector<1xf32>
    %43 = vector.shape_cast %42 : vector<1xf32> to vector<1x1x1xf32>
    %44 = vector.extract %43[0, 0, 0] : f32 from vector<1x1x1xf32>
    %45 = vector.broadcast %44 : f32 to vector<1x1xf32>
    %46 = arith.mulf %38, %38 : vector<8x8xf32>
    %47 = vector.shape_cast %46 : vector<8x8xf32> to vector<1x8x8xf32>
    %cst_21 = arith.constant dense<0.000000e+00> : vector<1xf32>
    %48 = vector.multi_reduction <add>, %47, %cst_21 [1, 2] : vector<1x8x8xf32> to vector<1xf32>
    %49 = vector.shape_cast %48 : vector<1xf32> to vector<1x1x1xf32>
    %50 = vector.extract %49[0, 0, 0] : f32 from vector<1x1x1xf32>
    %51 = vector.broadcast %50 : f32 to vector<1x1xf32>
    %52 = arith.mulf %39, %39 : vector<8x8xf32>
    %53 = vector.shape_cast %52 : vector<8x8xf32> to vector<1x8x8xf32>
    %cst_22 = arith.constant dense<0.000000e+00> : vector<1xf32>
    %54 = vector.multi_reduction <add>, %53, %cst_22 [1, 2] : vector<1x8x8xf32> to vector<1xf32>
    %55 = vector.shape_cast %54 : vector<1xf32> to vector<1x1x1xf32>
    %56 = vector.extract %55[0, 0, 0] : f32 from vector<1x1x1xf32>
    %57 = vector.broadcast %56 : f32 to vector<1x1xf32>
    %58 = math.absf %45 : vector<1x1xf32>
    %cst_23 = arith.constant 1.000000e-30 : f32
    %59 = vector.broadcast %cst_23 : f32 to vector<1x1xf32>
    %60 = arith.addf %51, %59 : vector<1x1xf32>
    %61 = math.rsqrt %60 : vector<1x1xf32>
    %62 = arith.mulf %58, %61 : vector<1x1xf32>
    %cst_24 = arith.constant 1.000000e-30 : f32
    %63 = vector.broadcast %cst_24 : f32 to vector<1x1xf32>
    %64 = arith.addf %57, %63 : vector<1x1xf32>
    %65 = math.rsqrt %64 : vector<1x1xf32>
    %66 = arith.mulf %62, %65 : vector<1x1xf32>
    %67 = arith.addf %30, %66 : vector<1x1xf32>
    %68 = vector.extract_strided_slice %14 {offsets = [0, 0, 0], sizes = [1, 8, 128], strides = [1, 1, 1]} : vector<8x8x128xf32> to vector<1x8x128xf32>
    %69 = vector.shape_cast %68 : vector<1x8x128xf32> to vector<8x128xf32>
    %70 = vector.shape_cast %69 : vector<8x128xf32> to vector<1x8x128xf32>
    %71 = vector.broadcast %70 : vector<1x8x128xf32> to vector<8x8x128xf32>
    %72 = arith.mulf %71, %14 : vector<8x8x128xf32>
    %cst_25 = arith.constant dense<0.000000e+00> : vector<8x8xf32>
    %73 = vector.multi_reduction <add>, %72, %cst_25 [2] : vector<8x8x128xf32> to vector<8x8xf32>
    %cst_26 = arith.constant dense<0.000000e+00> : vector<8xf32>
    %74 = vector.multi_reduction <add>, %73, %cst_26 [1] : vector<8x8xf32> to vector<8xf32>
    %75 = vector.shape_cast %74 : vector<8xf32> to vector<8x1xf32>
    %76 = vector.extract_strided_slice %29 {offsets = [0, 0, 0], sizes = [1, 8, 128], strides = [1, 1, 1]} : vector<8x8x128xf32> to vector<1x8x128xf32>
    %77 = vector.shape_cast %76 : vector<1x8x128xf32> to vector<8x128xf32>
    %78 = vector.shape_cast %77 : vector<8x128xf32> to vector<1x8x128xf32>
    %79 = vector.broadcast %78 : vector<1x8x128xf32> to vector<8x8x128xf32>
    %80 = arith.mulf %79, %29 : vector<8x8x128xf32>
    %cst_27 = arith.constant dense<0.000000e+00> : vector<8x8xf32>
    %81 = vector.multi_reduction <add>, %80, %cst_27 [2] : vector<8x8x128xf32> to vector<8x8xf32>
    %cst_28 = arith.constant dense<0.000000e+00> : vector<8xf32>
    %82 = vector.multi_reduction <add>, %81, %cst_28 [1] : vector<8x8xf32> to vector<8xf32>
    %83 = vector.shape_cast %82 : vector<8xf32> to vector<8x1xf32>
    %cst_29 = arith.constant 9.765625E-4 : f32
    %84 = vector.broadcast %cst_29 : f32 to vector<8x1xf32>
    %85 = arith.mulf %75, %84 : vector<8x1xf32>
    %cst_30 = arith.constant 9.765625E-4 : f32
    %86 = vector.broadcast %cst_30 : f32 to vector<8x1xf32>
    %87 = arith.mulf %83, %86 : vector<8x1xf32>
    %88 = arith.mulf %85, %87 : vector<8x1xf32>
    %89 = vector.shape_cast %88 : vector<8x1xf32> to vector<1x8x1xf32>
    %cst_31 = arith.constant dense<0.000000e+00> : vector<1xf32>
    %90 = vector.multi_reduction <add>, %89, %cst_31 [1, 2] : vector<1x8x1xf32> to vector<1xf32>
    %91 = vector.shape_cast %90 : vector<1xf32> to vector<1x1x1xf32>
    %92 = vector.extract %91[0, 0, 0] : f32 from vector<1x1x1xf32>
    %93 = vector.broadcast %92 : f32 to vector<1x1xf32>
    %94 = arith.addf %31, %93 : vector<1x1xf32>
    %95 = arith.mulf %85, %85 : vector<8x1xf32>
    %96 = vector.shape_cast %95 : vector<8x1xf32> to vector<1x8x1xf32>
    %cst_32 = arith.constant dense<0.000000e+00> : vector<1xf32>
    %97 = vector.multi_reduction <add>, %96, %cst_32 [1, 2] : vector<1x8x1xf32> to vector<1xf32>
    %98 = vector.shape_cast %97 : vector<1xf32> to vector<1x1x1xf32>
    %99 = vector.extract %98[0, 0, 0] : f32 from vector<1x1x1xf32>
    %100 = vector.broadcast %99 : f32 to vector<1x1xf32>
    %101 = arith.addf %32, %100 : vector<1x1xf32>
    %102 = arith.mulf %87, %87 : vector<8x1xf32>
    %103 = vector.shape_cast %102 : vector<8x1xf32> to vector<1x8x1xf32>
    %cst_33 = arith.constant dense<0.000000e+00> : vector<1xf32>
    %104 = vector.multi_reduction <add>, %103, %cst_33 [1, 2] : vector<1x8x1xf32> to vector<1xf32>
    %105 = vector.shape_cast %104 : vector<1xf32> to vector<1x1x1xf32>
    %106 = vector.extract %105[0, 0, 0] : f32 from vector<1x1x1xf32>
    %107 = vector.broadcast %106 : f32 to vector<1x1xf32>
    %108 = arith.addf %33, %107 : vector<1x1xf32>
    %109 = vector.extract_strided_slice %8 {offsets = [1, 0, 0], sizes = [1, 8, 128], strides = [1, 1, 1]} : vector<8x8x128xbf16> to vector<1x8x128xbf16>
    %110 = vector.shape_cast %109 : vector<1x8x128xbf16> to vector<8x128xbf16>
    %111 = vector.extract_strided_slice %23 {offsets = [1, 0, 0], sizes = [1, 8, 128], strides = [1, 1, 1]} : vector<8x8x128xbf16> to vector<1x8x128xbf16>
    %112 = vector.shape_cast %111 : vector<1x8x128xbf16> to vector<8x128xbf16>
    %cst_34 = arith.constant dense<0.000000e+00> : vector<8x8xf32>
    %113 = tpu.matmul %110, %110, %cst_34 {dimension_numbers = #tpu.dot_dimension_numbers<[1], [1], [0], [0], [0, 0, 1, 0], [], []>} : vector<8x128xbf16>, vector<8x128xbf16>, vector<8x8xf32> -> vector<8x8xf32>
    %cst_35 = arith.constant dense<0.000000e+00> : vector<8x8xf32>
    %114 = tpu.matmul %112, %112, %cst_35 {dimension_numbers = #tpu.dot_dimension_numbers<[1], [1], [0], [0], [0, 0, 1, 0], [], []>} : vector<8x128xbf16>, vector<8x128xbf16>, vector<8x8xf32> -> vector<8x8xf32>
    %115 = arith.mulf %113, %114 : vector<8x8xf32>
    %116 = vector.shape_cast %115 : vector<8x8xf32> to vector<1x8x8xf32>
    %cst_36 = arith.constant dense<0.000000e+00> : vector<1xf32>
    %117 = vector.multi_reduction <add>, %116, %cst_36 [1, 2] : vector<1x8x8xf32> to vector<1xf32>
    %118 = vector.shape_cast %117 : vector<1xf32> to vector<1x1x1xf32>
    %119 = vector.extract %118[0, 0, 0] : f32 from vector<1x1x1xf32>
    %120 = vector.broadcast %119 : f32 to vector<1x1xf32>
    %121 = arith.mulf %113, %113 : vector<8x8xf32>
    %122 = vector.shape_cast %121 : vector<8x8xf32> to vector<1x8x8xf32>
    %cst_37 = arith.constant dense<0.000000e+00> : vector<1xf32>
    %123 = vector.multi_reduction <add>, %122, %cst_37 [1, 2] : vector<1x8x8xf32> to vector<1xf32>
    %124 = vector.shape_cast %123 : vector<1xf32> to vector<1x1x1xf32>
    %125 = vector.extract %124[0, 0, 0] : f32 from vector<1x1x1xf32>
    %126 = vector.broadcast %125 : f32 to vector<1x1xf32>
    %127 = arith.mulf %114, %114 : vector<8x8xf32>
    %128 = vector.shape_cast %127 : vector<8x8xf32> to vector<1x8x8xf32>
    %cst_38 = arith.constant dense<0.000000e+00> : vector<1xf32>
    %129 = vector.multi_reduction <add>, %128, %cst_38 [1, 2] : vector<1x8x8xf32> to vector<1xf32>
    %130 = vector.shape_cast %129 : vector<1xf32> to vector<1x1x1xf32>
    %131 = vector.extract %130[0, 0, 0] : f32 from vector<1x1x1xf32>
    %132 = vector.broadcast %131 : f32 to vector<1x1xf32>
    %133 = math.absf %120 : vector<1x1xf32>
    %cst_39 = arith.constant 1.000000e-30 : f32
    %134 = vector.broadcast %cst_39 : f32 to vector<1x1xf32>
    %135 = arith.addf %126, %134 : vector<1x1xf32>
    %136 = math.rsqrt %135 : vector<1x1xf32>
    %137 = arith.mulf %133, %136 : vector<1x1xf32>
    %cst_40 = arith.constant 1.000000e-30 : f32
    %138 = vector.broadcast %cst_40 : f32 to vector<1x1xf32>
    %139 = arith.addf %132, %138 : vector<1x1xf32>
    %140 = math.rsqrt %139 : vector<1x1xf32>
    %141 = arith.mulf %137, %140 : vector<1x1xf32>
    %142 = arith.addf %67, %141 : vector<1x1xf32>
    %143 = vector.extract_strided_slice %14 {offsets = [1, 0, 0], sizes = [1, 8, 128], strides = [1, 1, 1]} : vector<8x8x128xf32> to vector<1x8x128xf32>
    %144 = vector.shape_cast %143 : vector<1x8x128xf32> to vector<8x128xf32>
    %145 = vector.shape_cast %144 : vector<8x128xf32> to vector<1x8x128xf32>
    %146 = vector.broadcast %145 : vector<1x8x128xf32> to vector<8x8x128xf32>
    %147 = arith.mulf %146, %14 : vector<8x8x128xf32>
    %cst_41 = arith.constant dense<0.000000e+00> : vector<8x8xf32>
    %148 = vector.multi_reduction <add>, %147, %cst_41 [2] : vector<8x8x128xf32> to vector<8x8xf32>
    %cst_42 = arith.constant dense<0.000000e+00> : vector<8xf32>
    %149 = vector.multi_reduction <add>, %148, %cst_42 [1] : vector<8x8xf32> to vector<8xf32>
    %150 = vector.shape_cast %149 : vector<8xf32> to vector<8x1xf32>
    %151 = vector.extract_strided_slice %29 {offsets = [1, 0, 0], sizes = [1, 8, 128], strides = [1, 1, 1]} : vector<8x8x128xf32> to vector<1x8x128xf32>
    %152 = vector.shape_cast %151 : vector<1x8x128xf32> to vector<8x128xf32>
    %153 = vector.shape_cast %152 : vector<8x128xf32> to vector<1x8x128xf32>
    %154 = vector.broadcast %153 : vector<1x8x128xf32> to vector<8x8x128xf32>
    %155 = arith.mulf %154, %29 : vector<8x8x128xf32>
    %cst_43 = arith.constant dense<0.000000e+00> : vector<8x8xf32>
    %156 = vector.multi_reduction <add>, %155, %cst_43 [2] : vector<8x8x128xf32> to vector<8x8xf32>
    %cst_44 = arith.constant dense<0.000000e+00> : vector<8xf32>
    %157 = vector.multi_reduction <add>, %156, %cst_44 [1] : vector<8x8xf32> to vector<8xf32>
    %158 = vector.shape_cast %157 : vector<8xf32> to vector<8x1xf32>
    %cst_45 = arith.constant 9.765625E-4 : f32
    %159 = vector.broadcast %cst_45 : f32 to vector<8x1xf32>
    %160 = arith.mulf %150, %159 : vector<8x1xf32>
    %cst_46 = arith.constant 9.765625E-4 : f32
    %161 = vector.broadcast %cst_46 : f32 to vector<8x1xf32>
    %162 = arith.mulf %158, %161 : vector<8x1xf32>
    %163 = arith.mulf %160, %162 : vector<8x1xf32>
    %164 = vector.shape_cast %163 : vector<8x1xf32> to vector<1x8x1xf32>
    %cst_47 = arith.constant dense<0.000000e+00> : vector<1xf32>
    %165 = vector.multi_reduction <add>, %164, %cst_47 [1, 2] : vector<1x8x1xf32> to vector<1xf32>
    %166 = vector.shape_cast %165 : vector<1xf32> to vector<1x1x1xf32>
    %167 = vector.extract %166[0, 0, 0] : f32 from vector<1x1x1xf32>
    %168 = vector.broadcast %167 : f32 to vector<1x1xf32>
    %169 = arith.addf %94, %168 : vector<1x1xf32>
    %170 = arith.mulf %160, %160 : vector<8x1xf32>
    %171 = vector.shape_cast %170 : vector<8x1xf32> to vector<1x8x1xf32>
    %cst_48 = arith.constant dense<0.000000e+00> : vector<1xf32>
    %172 = vector.multi_reduction <add>, %171, %cst_48 [1, 2] : vector<1x8x1xf32> to vector<1xf32>
    %173 = vector.shape_cast %172 : vector<1xf32> to vector<1x1x1xf32>
    %174 = vector.extract %173[0, 0, 0] : f32 from vector<1x1x1xf32>
    %175 = vector.broadcast %174 : f32 to vector<1x1xf32>
    %176 = arith.addf %101, %175 : vector<1x1xf32>
    %177 = arith.mulf %162, %162 : vector<8x1xf32>
    %178 = vector.shape_cast %177 : vector<8x1xf32> to vector<1x8x1xf32>
    %cst_49 = arith.constant dense<0.000000e+00> : vector<1xf32>
    %179 = vector.multi_reduction <add>, %178, %cst_49 [1, 2] : vector<1x8x1xf32> to vector<1xf32>
    %180 = vector.shape_cast %179 : vector<1xf32> to vector<1x1x1xf32>
    %181 = vector.extract %180[0, 0, 0] : f32 from vector<1x1x1xf32>
    %182 = vector.broadcast %181 : f32 to vector<1x1xf32>
    %183 = arith.addf %108, %182 : vector<1x1xf32>
    %184 = vector.extract_strided_slice %8 {offsets = [2, 0, 0], sizes = [1, 8, 128], strides = [1, 1, 1]} : vector<8x8x128xbf16> to vector<1x8x128xbf16>
    %185 = vector.shape_cast %184 : vector<1x8x128xbf16> to vector<8x128xbf16>
    %186 = vector.extract_strided_slice %23 {offsets = [2, 0, 0], sizes = [1, 8, 128], strides = [1, 1, 1]} : vector<8x8x128xbf16> to vector<1x8x128xbf16>
    %187 = vector.shape_cast %186 : vector<1x8x128xbf16> to vector<8x128xbf16>
    %cst_50 = arith.constant dense<0.000000e+00> : vector<8x8xf32>
    %188 = tpu.matmul %185, %185, %cst_50 {dimension_numbers = #tpu.dot_dimension_numbers<[1], [1], [0], [0], [0, 0, 1, 0], [], []>} : vector<8x128xbf16>, vector<8x128xbf16>, vector<8x8xf32> -> vector<8x8xf32>
    %cst_51 = arith.constant dense<0.000000e+00> : vector<8x8xf32>
    %189 = tpu.matmul %187, %187, %cst_51 {dimension_numbers = #tpu.dot_dimension_numbers<[1], [1], [0], [0], [0, 0, 1, 0], [], []>} : vector<8x128xbf16>, vector<8x128xbf16>, vector<8x8xf32> -> vector<8x8xf32>
    %190 = arith.mulf %188, %189 : vector<8x8xf32>
    %191 = vector.shape_cast %190 : vector<8x8xf32> to vector<1x8x8xf32>
    %cst_52 = arith.constant dense<0.000000e+00> : vector<1xf32>
    %192 = vector.multi_reduction <add>, %191, %cst_52 [1, 2] : vector<1x8x8xf32> to vector<1xf32>
    %193 = vector.shape_cast %192 : vector<1xf32> to vector<1x1x1xf32>
    %194 = vector.extract %193[0, 0, 0] : f32 from vector<1x1x1xf32>
    %195 = vector.broadcast %194 : f32 to vector<1x1xf32>
    %196 = arith.mulf %188, %188 : vector<8x8xf32>
    %197 = vector.shape_cast %196 : vector<8x8xf32> to vector<1x8x8xf32>
    %cst_53 = arith.constant dense<0.000000e+00> : vector<1xf32>
    %198 = vector.multi_reduction <add>, %197, %cst_53 [1, 2] : vector<1x8x8xf32> to vector<1xf32>
    %199 = vector.shape_cast %198 : vector<1xf32> to vector<1x1x1xf32>
    %200 = vector.extract %199[0, 0, 0] : f32 from vector<1x1x1xf32>
    %201 = vector.broadcast %200 : f32 to vector<1x1xf32>
    %202 = arith.mulf %189, %189 : vector<8x8xf32>
    %203 = vector.shape_cast %202 : vector<8x8xf32> to vector<1x8x8xf32>
    %cst_54 = arith.constant dense<0.000000e+00> : vector<1xf32>
    %204 = vector.multi_reduction <add>, %203, %cst_54 [1, 2] : vector<1x8x8xf32> to vector<1xf32>
    %205 = vector.shape_cast %204 : vector<1xf32> to vector<1x1x1xf32>
    %206 = vector.extract %205[0, 0, 0] : f32 from vector<1x1x1xf32>
    %207 = vector.broadcast %206 : f32 to vector<1x1xf32>
    %208 = math.absf %195 : vector<1x1xf32>
    %cst_55 = arith.constant 1.000000e-30 : f32
    %209 = vector.broadcast %cst_55 : f32 to vector<1x1xf32>
    %210 = arith.addf %201, %209 : vector<1x1xf32>
    %211 = math.rsqrt %210 : vector<1x1xf32>
    %212 = arith.mulf %208, %211 : vector<1x1xf32>
    %cst_56 = arith.constant 1.000000e-30 : f32
    %213 = vector.broadcast %cst_56 : f32 to vector<1x1xf32>
    %214 = arith.addf %207, %213 : vector<1x1xf32>
    %215 = math.rsqrt %214 : vector<1x1xf32>
    %216 = arith.mulf %212, %215 : vector<1x1xf32>
    %217 = arith.addf %142, %216 : vector<1x1xf32>
    %218 = vector.extract_strided_slice %14 {offsets = [2, 0, 0], sizes = [1, 8, 128], strides = [1, 1, 1]} : vector<8x8x128xf32> to vector<1x8x128xf32>
    %219 = vector.shape_cast %218 : vector<1x8x128xf32> to vector<8x128xf32>
    %220 = vector.shape_cast %219 : vector<8x128xf32> to vector<1x8x128xf32>
    %221 = vector.broadcast %220 : vector<1x8x128xf32> to vector<8x8x128xf32>
    %222 = arith.mulf %221, %14 : vector<8x8x128xf32>
    %cst_57 = arith.constant dense<0.000000e+00> : vector<8x8xf32>
    %223 = vector.multi_reduction <add>, %222, %cst_57 [2] : vector<8x8x128xf32> to vector<8x8xf32>
    %cst_58 = arith.constant dense<0.000000e+00> : vector<8xf32>
    %224 = vector.multi_reduction <add>, %223, %cst_58 [1] : vector<8x8xf32> to vector<8xf32>
    %225 = vector.shape_cast %224 : vector<8xf32> to vector<8x1xf32>
    %226 = vector.extract_strided_slice %29 {offsets = [2, 0, 0], sizes = [1, 8, 128], strides = [1, 1, 1]} : vector<8x8x128xf32> to vector<1x8x128xf32>
    %227 = vector.shape_cast %226 : vector<1x8x128xf32> to vector<8x128xf32>
    %228 = vector.shape_cast %227 : vector<8x128xf32> to vector<1x8x128xf32>
    %229 = vector.broadcast %228 : vector<1x8x128xf32> to vector<8x8x128xf32>
    %230 = arith.mulf %229, %29 : vector<8x8x128xf32>
    %cst_59 = arith.constant dense<0.000000e+00> : vector<8x8xf32>
    %231 = vector.multi_reduction <add>, %230, %cst_59 [2] : vector<8x8x128xf32> to vector<8x8xf32>
    %cst_60 = arith.constant dense<0.000000e+00> : vector<8xf32>
    %232 = vector.multi_reduction <add>, %231, %cst_60 [1] : vector<8x8xf32> to vector<8xf32>
    %233 = vector.shape_cast %232 : vector<8xf32> to vector<8x1xf32>
    %cst_61 = arith.constant 9.765625E-4 : f32
    %234 = vector.broadcast %cst_61 : f32 to vector<8x1xf32>
    %235 = arith.mulf %225, %234 : vector<8x1xf32>
    %cst_62 = arith.constant 9.765625E-4 : f32
    %236 = vector.broadcast %cst_62 : f32 to vector<8x1xf32>
    %237 = arith.mulf %233, %236 : vector<8x1xf32>
    %238 = arith.mulf %235, %237 : vector<8x1xf32>
    %239 = vector.shape_cast %238 : vector<8x1xf32> to vector<1x8x1xf32>
    %cst_63 = arith.constant dense<0.000000e+00> : vector<1xf32>
    %240 = vector.multi_reduction <add>, %239, %cst_63 [1, 2] : vector<1x8x1xf32> to vector<1xf32>
    %241 = vector.shape_cast %240 : vector<1xf32> to vector<1x1x1xf32>
    %242 = vector.extract %241[0, 0, 0] : f32 from vector<1x1x1xf32>
    %243 = vector.broadcast %242 : f32 to vector<1x1xf32>
    %244 = arith.addf %169, %243 : vector<1x1xf32>
    %245 = arith.mulf %235, %235 : vector<8x1xf32>
    %246 = vector.shape_cast %245 : vector<8x1xf32> to vector<1x8x1xf32>
    %cst_64 = arith.constant dense<0.000000e+00> : vector<1xf32>
    %247 = vector.multi_reduction <add>, %246, %cst_64 [1, 2] : vector<1x8x1xf32> to vector<1xf32>
    %248 = vector.shape_cast %247 : vector<1xf32> to vector<1x1x1xf32>
    %249 = vector.extract %248[0, 0, 0] : f32 from vector<1x1x1xf32>
    %250 = vector.broadcast %249 : f32 to vector<1x1xf32>
    %251 = arith.addf %176, %250 : vector<1x1xf32>
    %252 = arith.mulf %237, %237 : vector<8x1xf32>
    %253 = vector.shape_cast %252 : vector<8x1xf32> to vector<1x8x1xf32>
    %cst_65 = arith.constant dense<0.000000e+00> : vector<1xf32>
    %254 = vector.multi_reduction <add>, %253, %cst_65 [1, 2] : vector<1x8x1xf32> to vector<1xf32>
    %255 = vector.shape_cast %254 : vector<1xf32> to vector<1x1x1xf32>
    %256 = vector.extract %255[0, 0, 0] : f32 from vector<1x1x1xf32>
    %257 = vector.broadcast %256 : f32 to vector<1x1xf32>
    %258 = arith.addf %183, %257 : vector<1x1xf32>
    %259 = vector.extract_strided_slice %8 {offsets = [3, 0, 0], sizes = [1, 8, 128], strides = [1, 1, 1]} : vector<8x8x128xbf16> to vector<1x8x128xbf16>
    %260 = vector.shape_cast %259 : vector<1x8x128xbf16> to vector<8x128xbf16>
    %261 = vector.extract_strided_slice %23 {offsets = [3, 0, 0], sizes = [1, 8, 128], strides = [1, 1, 1]} : vector<8x8x128xbf16> to vector<1x8x128xbf16>
    %262 = vector.shape_cast %261 : vector<1x8x128xbf16> to vector<8x128xbf16>
    %cst_66 = arith.constant dense<0.000000e+00> : vector<8x8xf32>
    %263 = tpu.matmul %260, %260, %cst_66 {dimension_numbers = #tpu.dot_dimension_numbers<[1], [1], [0], [0], [0, 0, 1, 0], [], []>} : vector<8x128xbf16>, vector<8x128xbf16>, vector<8x8xf32> -> vector<8x8xf32>
    %cst_67 = arith.constant dense<0.000000e+00> : vector<8x8xf32>
    %264 = tpu.matmul %262, %262, %cst_67 {dimension_numbers = #tpu.dot_dimension_numbers<[1], [1], [0], [0], [0, 0, 1, 0], [], []>} : vector<8x128xbf16>, vector<8x128xbf16>, vector<8x8xf32> -> vector<8x8xf32>
    %265 = arith.mulf %263, %264 : vector<8x8xf32>
    %266 = vector.shape_cast %265 : vector<8x8xf32> to vector<1x8x8xf32>
    %cst_68 = arith.constant dense<0.000000e+00> : vector<1xf32>
    %267 = vector.multi_reduction <add>, %266, %cst_68 [1, 2] : vector<1x8x8xf32> to vector<1xf32>
    %268 = vector.shape_cast %267 : vector<1xf32> to vector<1x1x1xf32>
    %269 = vector.extract %268[0, 0, 0] : f32 from vector<1x1x1xf32>
    %270 = vector.broadcast %269 : f32 to vector<1x1xf32>
    %271 = arith.mulf %263, %263 : vector<8x8xf32>
    %272 = vector.shape_cast %271 : vector<8x8xf32> to vector<1x8x8xf32>
    %cst_69 = arith.constant dense<0.000000e+00> : vector<1xf32>
    %273 = vector.multi_reduction <add>, %272, %cst_69 [1, 2] : vector<1x8x8xf32> to vector<1xf32>
    %274 = vector.shape_cast %273 : vector<1xf32> to vector<1x1x1xf32>
    %275 = vector.extract %274[0, 0, 0] : f32 from vector<1x1x1xf32>
    %276 = vector.broadcast %275 : f32 to vector<1x1xf32>
    %277 = arith.mulf %264, %264 : vector<8x8xf32>
    %278 = vector.shape_cast %277 : vector<8x8xf32> to vector<1x8x8xf32>
    %cst_70 = arith.constant dense<0.000000e+00> : vector<1xf32>
    %279 = vector.multi_reduction <add>, %278, %cst_70 [1, 2] : vector<1x8x8xf32> to vector<1xf32>
    %280 = vector.shape_cast %279 : vector<1xf32> to vector<1x1x1xf32>
    %281 = vector.extract %280[0, 0, 0] : f32 from vector<1x1x1xf32>
    %282 = vector.broadcast %281 : f32 to vector<1x1xf32>
    %283 = math.absf %270 : vector<1x1xf32>
    %cst_71 = arith.constant 1.000000e-30 : f32
    %284 = vector.broadcast %cst_71 : f32 to vector<1x1xf32>
    %285 = arith.addf %276, %284 : vector<1x1xf32>
    %286 = math.rsqrt %285 : vector<1x1xf32>
    %287 = arith.mulf %283, %286 : vector<1x1xf32>
    %cst_72 = arith.constant 1.000000e-30 : f32
    %288 = vector.broadcast %cst_72 : f32 to vector<1x1xf32>
    %289 = arith.addf %282, %288 : vector<1x1xf32>
    %290 = math.rsqrt %289 : vector<1x1xf32>
    %291 = arith.mulf %287, %290 : vector<1x1xf32>
    %292 = arith.addf %217, %291 : vector<1x1xf32>
    %293 = vector.extract_strided_slice %14 {offsets = [3, 0, 0], sizes = [1, 8, 128], strides = [1, 1, 1]} : vector<8x8x128xf32> to vector<1x8x128xf32>
    %294 = vector.shape_cast %293 : vector<1x8x128xf32> to vector<8x128xf32>
    %295 = vector.shape_cast %294 : vector<8x128xf32> to vector<1x8x128xf32>
    %296 = vector.broadcast %295 : vector<1x8x128xf32> to vector<8x8x128xf32>
    %297 = arith.mulf %296, %14 : vector<8x8x128xf32>
    %cst_73 = arith.constant dense<0.000000e+00> : vector<8x8xf32>
    %298 = vector.multi_reduction <add>, %297, %cst_73 [2] : vector<8x8x128xf32> to vector<8x8xf32>
    %cst_74 = arith.constant dense<0.000000e+00> : vector<8xf32>
    %299 = vector.multi_reduction <add>, %298, %cst_74 [1] : vector<8x8xf32> to vector<8xf32>
    %300 = vector.shape_cast %299 : vector<8xf32> to vector<8x1xf32>
    %301 = vector.extract_strided_slice %29 {offsets = [3, 0, 0], sizes = [1, 8, 128], strides = [1, 1, 1]} : vector<8x8x128xf32> to vector<1x8x128xf32>
    %302 = vector.shape_cast %301 : vector<1x8x128xf32> to vector<8x128xf32>
    %303 = vector.shape_cast %302 : vector<8x128xf32> to vector<1x8x128xf32>
    %304 = vector.broadcast %303 : vector<1x8x128xf32> to vector<8x8x128xf32>
    %305 = arith.mulf %304, %29 : vector<8x8x128xf32>
    %cst_75 = arith.constant dense<0.000000e+00> : vector<8x8xf32>
    %306 = vector.multi_reduction <add>, %305, %cst_75 [2] : vector<8x8x128xf32> to vector<8x8xf32>
    %cst_76 = arith.constant dense<0.000000e+00> : vector<8xf32>
    %307 = vector.multi_reduction <add>, %306, %cst_76 [1] : vector<8x8xf32> to vector<8xf32>
    %308 = vector.shape_cast %307 : vector<8xf32> to vector<8x1xf32>
    %cst_77 = arith.constant 9.765625E-4 : f32
    %309 = vector.broadcast %cst_77 : f32 to vector<8x1xf32>
    %310 = arith.mulf %300, %309 : vector<8x1xf32>
    %cst_78 = arith.constant 9.765625E-4 : f32
    %311 = vector.broadcast %cst_78 : f32 to vector<8x1xf32>
    %312 = arith.mulf %308, %311 : vector<8x1xf32>
    %313 = arith.mulf %310, %312 : vector<8x1xf32>
    %314 = vector.shape_cast %313 : vector<8x1xf32> to vector<1x8x1xf32>
    %cst_79 = arith.constant dense<0.000000e+00> : vector<1xf32>
    %315 = vector.multi_reduction <add>, %314, %cst_79 [1, 2] : vector<1x8x1xf32> to vector<1xf32>
    %316 = vector.shape_cast %315 : vector<1xf32> to vector<1x1x1xf32>
    %317 = vector.extract %316[0, 0, 0] : f32 from vector<1x1x1xf32>
    %318 = vector.broadcast %317 : f32 to vector<1x1xf32>
    %319 = arith.addf %244, %318 : vector<1x1xf32>
    %320 = arith.mulf %310, %310 : vector<8x1xf32>
    %321 = vector.shape_cast %320 : vector<8x1xf32> to vector<1x8x1xf32>
    %cst_80 = arith.constant dense<0.000000e+00> : vector<1xf32>
    %322 = vector.multi_reduction <add>, %321, %cst_80 [1, 2] : vector<1x8x1xf32> to vector<1xf32>
    %323 = vector.shape_cast %322 : vector<1xf32> to vector<1x1x1xf32>
    %324 = vector.extract %323[0, 0, 0] : f32 from vector<1x1x1xf32>
    %325 = vector.broadcast %324 : f32 to vector<1x1xf32>
    %326 = arith.addf %251, %325 : vector<1x1xf32>
    %327 = arith.mulf %312, %312 : vector<8x1xf32>
    %328 = vector.shape_cast %327 : vector<8x1xf32> to vector<1x8x1xf32>
    %cst_81 = arith.constant dense<0.000000e+00> : vector<1xf32>
    %329 = vector.multi_reduction <add>, %328, %cst_81 [1, 2] : vector<1x8x1xf32> to vector<1xf32>
    %330 = vector.shape_cast %329 : vector<1xf32> to vector<1x1x1xf32>
    %331 = vector.extract %330[0, 0, 0] : f32 from vector<1x1x1xf32>
    %332 = vector.broadcast %331 : f32 to vector<1x1xf32>
    %333 = arith.addf %258, %332 : vector<1x1xf32>
    %334 = vector.extract_strided_slice %8 {offsets = [4, 0, 0], sizes = [1, 8, 128], strides = [1, 1, 1]} : vector<8x8x128xbf16> to vector<1x8x128xbf16>
    %335 = vector.shape_cast %334 : vector<1x8x128xbf16> to vector<8x128xbf16>
    %336 = vector.extract_strided_slice %23 {offsets = [4, 0, 0], sizes = [1, 8, 128], strides = [1, 1, 1]} : vector<8x8x128xbf16> to vector<1x8x128xbf16>
    %337 = vector.shape_cast %336 : vector<1x8x128xbf16> to vector<8x128xbf16>
    %cst_82 = arith.constant dense<0.000000e+00> : vector<8x8xf32>
    %338 = tpu.matmul %335, %335, %cst_82 {dimension_numbers = #tpu.dot_dimension_numbers<[1], [1], [0], [0], [0, 0, 1, 0], [], []>} : vector<8x128xbf16>, vector<8x128xbf16>, vector<8x8xf32> -> vector<8x8xf32>
    %cst_83 = arith.constant dense<0.000000e+00> : vector<8x8xf32>
    %339 = tpu.matmul %337, %337, %cst_83 {dimension_numbers = #tpu.dot_dimension_numbers<[1], [1], [0], [0], [0, 0, 1, 0], [], []>} : vector<8x128xbf16>, vector<8x128xbf16>, vector<8x8xf32> -> vector<8x8xf32>
    %340 = arith.mulf %338, %339 : vector<8x8xf32>
    %341 = vector.shape_cast %340 : vector<8x8xf32> to vector<1x8x8xf32>
    %cst_84 = arith.constant dense<0.000000e+00> : vector<1xf32>
    %342 = vector.multi_reduction <add>, %341, %cst_84 [1, 2] : vector<1x8x8xf32> to vector<1xf32>
    %343 = vector.shape_cast %342 : vector<1xf32> to vector<1x1x1xf32>
    %344 = vector.extract %343[0, 0, 0] : f32 from vector<1x1x1xf32>
    %345 = vector.broadcast %344 : f32 to vector<1x1xf32>
    %346 = arith.mulf %338, %338 : vector<8x8xf32>
    %347 = vector.shape_cast %346 : vector<8x8xf32> to vector<1x8x8xf32>
    %cst_85 = arith.constant dense<0.000000e+00> : vector<1xf32>
    %348 = vector.multi_reduction <add>, %347, %cst_85 [1, 2] : vector<1x8x8xf32> to vector<1xf32>
    %349 = vector.shape_cast %348 : vector<1xf32> to vector<1x1x1xf32>
    %350 = vector.extract %349[0, 0, 0] : f32 from vector<1x1x1xf32>
    %351 = vector.broadcast %350 : f32 to vector<1x1xf32>
    %352 = arith.mulf %339, %339 : vector<8x8xf32>
    %353 = vector.shape_cast %352 : vector<8x8xf32> to vector<1x8x8xf32>
    %cst_86 = arith.constant dense<0.000000e+00> : vector<1xf32>
    %354 = vector.multi_reduction <add>, %353, %cst_86 [1, 2] : vector<1x8x8xf32> to vector<1xf32>
    %355 = vector.shape_cast %354 : vector<1xf32> to vector<1x1x1xf32>
    %356 = vector.extract %355[0, 0, 0] : f32 from vector<1x1x1xf32>
    %357 = vector.broadcast %356 : f32 to vector<1x1xf32>
    %358 = math.absf %345 : vector<1x1xf32>
    %cst_87 = arith.constant 1.000000e-30 : f32
    %359 = vector.broadcast %cst_87 : f32 to vector<1x1xf32>
    %360 = arith.addf %351, %359 : vector<1x1xf32>
    %361 = math.rsqrt %360 : vector<1x1xf32>
    %362 = arith.mulf %358, %361 : vector<1x1xf32>
    %cst_88 = arith.constant 1.000000e-30 : f32
    %363 = vector.broadcast %cst_88 : f32 to vector<1x1xf32>
    %364 = arith.addf %357, %363 : vector<1x1xf32>
    %365 = math.rsqrt %364 : vector<1x1xf32>
    %366 = arith.mulf %362, %365 : vector<1x1xf32>
    %367 = arith.addf %292, %366 : vector<1x1xf32>
    %368 = vector.extract_strided_slice %14 {offsets = [4, 0, 0], sizes = [1, 8, 128], strides = [1, 1, 1]} : vector<8x8x128xf32> to vector<1x8x128xf32>
    %369 = vector.shape_cast %368 : vector<1x8x128xf32> to vector<8x128xf32>
    %370 = vector.shape_cast %369 : vector<8x128xf32> to vector<1x8x128xf32>
    %371 = vector.broadcast %370 : vector<1x8x128xf32> to vector<8x8x128xf32>
    %372 = arith.mulf %371, %14 : vector<8x8x128xf32>
    %cst_89 = arith.constant dense<0.000000e+00> : vector<8x8xf32>
    %373 = vector.multi_reduction <add>, %372, %cst_89 [2] : vector<8x8x128xf32> to vector<8x8xf32>
    %cst_90 = arith.constant dense<0.000000e+00> : vector<8xf32>
    %374 = vector.multi_reduction <add>, %373, %cst_90 [1] : vector<8x8xf32> to vector<8xf32>
    %375 = vector.shape_cast %374 : vector<8xf32> to vector<8x1xf32>
    %376 = vector.extract_strided_slice %29 {offsets = [4, 0, 0], sizes = [1, 8, 128], strides = [1, 1, 1]} : vector<8x8x128xf32> to vector<1x8x128xf32>
    %377 = vector.shape_cast %376 : vector<1x8x128xf32> to vector<8x128xf32>
    %378 = vector.shape_cast %377 : vector<8x128xf32> to vector<1x8x128xf32>
    %379 = vector.broadcast %378 : vector<1x8x128xf32> to vector<8x8x128xf32>
    %380 = arith.mulf %379, %29 : vector<8x8x128xf32>
    %cst_91 = arith.constant dense<0.000000e+00> : vector<8x8xf32>
    %381 = vector.multi_reduction <add>, %380, %cst_91 [2] : vector<8x8x128xf32> to vector<8x8xf32>
    %cst_92 = arith.constant dense<0.000000e+00> : vector<8xf32>
    %382 = vector.multi_reduction <add>, %381, %cst_92 [1] : vector<8x8xf32> to vector<8xf32>
    %383 = vector.shape_cast %382 : vector<8xf32> to vector<8x1xf32>
    %cst_93 = arith.constant 9.765625E-4 : f32
    %384 = vector.broadcast %cst_93 : f32 to vector<8x1xf32>
    %385 = arith.mulf %375, %384 : vector<8x1xf32>
    %cst_94 = arith.constant 9.765625E-4 : f32
    %386 = vector.broadcast %cst_94 : f32 to vector<8x1xf32>
    %387 = arith.mulf %383, %386 : vector<8x1xf32>
    %388 = arith.mulf %385, %387 : vector<8x1xf32>
    %389 = vector.shape_cast %388 : vector<8x1xf32> to vector<1x8x1xf32>
    %cst_95 = arith.constant dense<0.000000e+00> : vector<1xf32>
    %390 = vector.multi_reduction <add>, %389, %cst_95 [1, 2] : vector<1x8x1xf32> to vector<1xf32>
    %391 = vector.shape_cast %390 : vector<1xf32> to vector<1x1x1xf32>
    %392 = vector.extract %391[0, 0, 0] : f32 from vector<1x1x1xf32>
    %393 = vector.broadcast %392 : f32 to vector<1x1xf32>
    %394 = arith.addf %319, %393 : vector<1x1xf32>
    %395 = arith.mulf %385, %385 : vector<8x1xf32>
    %396 = vector.shape_cast %395 : vector<8x1xf32> to vector<1x8x1xf32>
    %cst_96 = arith.constant dense<0.000000e+00> : vector<1xf32>
    %397 = vector.multi_reduction <add>, %396, %cst_96 [1, 2] : vector<1x8x1xf32> to vector<1xf32>
    %398 = vector.shape_cast %397 : vector<1xf32> to vector<1x1x1xf32>
    %399 = vector.extract %398[0, 0, 0] : f32 from vector<1x1x1xf32>
    %400 = vector.broadcast %399 : f32 to vector<1x1xf32>
    %401 = arith.addf %326, %400 : vector<1x1xf32>
    %402 = arith.mulf %387, %387 : vector<8x1xf32>
    %403 = vector.shape_cast %402 : vector<8x1xf32> to vector<1x8x1xf32>
    %cst_97 = arith.constant dense<0.000000e+00> : vector<1xf32>
    %404 = vector.multi_reduction <add>, %403, %cst_97 [1, 2] : vector<1x8x1xf32> to vector<1xf32>
    %405 = vector.shape_cast %404 : vector<1xf32> to vector<1x1x1xf32>
    %406 = vector.extract %405[0, 0, 0] : f32 from vector<1x1x1xf32>
    %407 = vector.broadcast %406 : f32 to vector<1x1xf32>
    %408 = arith.addf %333, %407 : vector<1x1xf32>
    %409 = vector.extract_strided_slice %8 {offsets = [5, 0, 0], sizes = [1, 8, 128], strides = [1, 1, 1]} : vector<8x8x128xbf16> to vector<1x8x128xbf16>
    %410 = vector.shape_cast %409 : vector<1x8x128xbf16> to vector<8x128xbf16>
    %411 = vector.extract_strided_slice %23 {offsets = [5, 0, 0], sizes = [1, 8, 128], strides = [1, 1, 1]} : vector<8x8x128xbf16> to vector<1x8x128xbf16>
    %412 = vector.shape_cast %411 : vector<1x8x128xbf16> to vector<8x128xbf16>
    %cst_98 = arith.constant dense<0.000000e+00> : vector<8x8xf32>
    %413 = tpu.matmul %410, %410, %cst_98 {dimension_numbers = #tpu.dot_dimension_numbers<[1], [1], [0], [0], [0, 0, 1, 0], [], []>} : vector<8x128xbf16>, vector<8x128xbf16>, vector<8x8xf32> -> vector<8x8xf32>
    %cst_99 = arith.constant dense<0.000000e+00> : vector<8x8xf32>
    %414 = tpu.matmul %412, %412, %cst_99 {dimension_numbers = #tpu.dot_dimension_numbers<[1], [1], [0], [0], [0, 0, 1, 0], [], []>} : vector<8x128xbf16>, vector<8x128xbf16>, vector<8x8xf32> -> vector<8x8xf32>
    %415 = arith.mulf %413, %414 : vector<8x8xf32>
    %416 = vector.shape_cast %415 : vector<8x8xf32> to vector<1x8x8xf32>
    %cst_100 = arith.constant dense<0.000000e+00> : vector<1xf32>
    %417 = vector.multi_reduction <add>, %416, %cst_100 [1, 2] : vector<1x8x8xf32> to vector<1xf32>
    %418 = vector.shape_cast %417 : vector<1xf32> to vector<1x1x1xf32>
    %419 = vector.extract %418[0, 0, 0] : f32 from vector<1x1x1xf32>
    %420 = vector.broadcast %419 : f32 to vector<1x1xf32>
    %421 = arith.mulf %413, %413 : vector<8x8xf32>
    %422 = vector.shape_cast %421 : vector<8x8xf32> to vector<1x8x8xf32>
    %cst_101 = arith.constant dense<0.000000e+00> : vector<1xf32>
    %423 = vector.multi_reduction <add>, %422, %cst_101 [1, 2] : vector<1x8x8xf32> to vector<1xf32>
    %424 = vector.shape_cast %423 : vector<1xf32> to vector<1x1x1xf32>
    %425 = vector.extract %424[0, 0, 0] : f32 from vector<1x1x1xf32>
    %426 = vector.broadcast %425 : f32 to vector<1x1xf32>
    %427 = arith.mulf %414, %414 : vector<8x8xf32>
    %428 = vector.shape_cast %427 : vector<8x8xf32> to vector<1x8x8xf32>
    %cst_102 = arith.constant dense<0.000000e+00> : vector<1xf32>
    %429 = vector.multi_reduction <add>, %428, %cst_102 [1, 2] : vector<1x8x8xf32> to vector<1xf32>
    %430 = vector.shape_cast %429 : vector<1xf32> to vector<1x1x1xf32>
    %431 = vector.extract %430[0, 0, 0] : f32 from vector<1x1x1xf32>
    %432 = vector.broadcast %431 : f32 to vector<1x1xf32>
    %433 = math.absf %420 : vector<1x1xf32>
    %cst_103 = arith.constant 1.000000e-30 : f32
    %434 = vector.broadcast %cst_103 : f32 to vector<1x1xf32>
    %435 = arith.addf %426, %434 : vector<1x1xf32>
    %436 = math.rsqrt %435 : vector<1x1xf32>
    %437 = arith.mulf %433, %436 : vector<1x1xf32>
    %cst_104 = arith.constant 1.000000e-30 : f32
    %438 = vector.broadcast %cst_104 : f32 to vector<1x1xf32>
    %439 = arith.addf %432, %438 : vector<1x1xf32>
    %440 = math.rsqrt %439 : vector<1x1xf32>
    %441 = arith.mulf %437, %440 : vector<1x1xf32>
    %442 = arith.addf %367, %441 : vector<1x1xf32>
    %443 = vector.extract_strided_slice %14 {offsets = [5, 0, 0], sizes = [1, 8, 128], strides = [1, 1, 1]} : vector<8x8x128xf32> to vector<1x8x128xf32>
    %444 = vector.shape_cast %443 : vector<1x8x128xf32> to vector<8x128xf32>
    %445 = vector.shape_cast %444 : vector<8x128xf32> to vector<1x8x128xf32>
    %446 = vector.broadcast %445 : vector<1x8x128xf32> to vector<8x8x128xf32>
    %447 = arith.mulf %446, %14 : vector<8x8x128xf32>
    %cst_105 = arith.constant dense<0.000000e+00> : vector<8x8xf32>
    %448 = vector.multi_reduction <add>, %447, %cst_105 [2] : vector<8x8x128xf32> to vector<8x8xf32>
    %cst_106 = arith.constant dense<0.000000e+00> : vector<8xf32>
    %449 = vector.multi_reduction <add>, %448, %cst_106 [1] : vector<8x8xf32> to vector<8xf32>
    %450 = vector.shape_cast %449 : vector<8xf32> to vector<8x1xf32>
    %451 = vector.extract_strided_slice %29 {offsets = [5, 0, 0], sizes = [1, 8, 128], strides = [1, 1, 1]} : vector<8x8x128xf32> to vector<1x8x128xf32>
    %452 = vector.shape_cast %451 : vector<1x8x128xf32> to vector<8x128xf32>
    %453 = vector.shape_cast %452 : vector<8x128xf32> to vector<1x8x128xf32>
    %454 = vector.broadcast %453 : vector<1x8x128xf32> to vector<8x8x128xf32>
    %455 = arith.mulf %454, %29 : vector<8x8x128xf32>
    %cst_107 = arith.constant dense<0.000000e+00> : vector<8x8xf32>
    %456 = vector.multi_reduction <add>, %455, %cst_107 [2] : vector<8x8x128xf32> to vector<8x8xf32>
    %cst_108 = arith.constant dense<0.000000e+00> : vector<8xf32>
    %457 = vector.multi_reduction <add>, %456, %cst_108 [1] : vector<8x8xf32> to vector<8xf32>
    %458 = vector.shape_cast %457 : vector<8xf32> to vector<8x1xf32>
    %cst_109 = arith.constant 9.765625E-4 : f32
    %459 = vector.broadcast %cst_109 : f32 to vector<8x1xf32>
    %460 = arith.mulf %450, %459 : vector<8x1xf32>
    %cst_110 = arith.constant 9.765625E-4 : f32
    %461 = vector.broadcast %cst_110 : f32 to vector<8x1xf32>
    %462 = arith.mulf %458, %461 : vector<8x1xf32>
    %463 = arith.mulf %460, %462 : vector<8x1xf32>
    %464 = vector.shape_cast %463 : vector<8x1xf32> to vector<1x8x1xf32>
    %cst_111 = arith.constant dense<0.000000e+00> : vector<1xf32>
    %465 = vector.multi_reduction <add>, %464, %cst_111 [1, 2] : vector<1x8x1xf32> to vector<1xf32>
    %466 = vector.shape_cast %465 : vector<1xf32> to vector<1x1x1xf32>
    %467 = vector.extract %466[0, 0, 0] : f32 from vector<1x1x1xf32>
    %468 = vector.broadcast %467 : f32 to vector<1x1xf32>
    %469 = arith.addf %394, %468 : vector<1x1xf32>
    %470 = arith.mulf %460, %460 : vector<8x1xf32>
    %471 = vector.shape_cast %470 : vector<8x1xf32> to vector<1x8x1xf32>
    %cst_112 = arith.constant dense<0.000000e+00> : vector<1xf32>
    %472 = vector.multi_reduction <add>, %471, %cst_112 [1, 2] : vector<1x8x1xf32> to vector<1xf32>
    %473 = vector.shape_cast %472 : vector<1xf32> to vector<1x1x1xf32>
    %474 = vector.extract %473[0, 0, 0] : f32 from vector<1x1x1xf32>
    %475 = vector.broadcast %474 : f32 to vector<1x1xf32>
    %476 = arith.addf %401, %475 : vector<1x1xf32>
    %477 = arith.mulf %462, %462 : vector<8x1xf32>
    %478 = vector.shape_cast %477 : vector<8x1xf32> to vector<1x8x1xf32>
    %cst_113 = arith.constant dense<0.000000e+00> : vector<1xf32>
    %479 = vector.multi_reduction <add>, %478, %cst_113 [1, 2] : vector<1x8x1xf32> to vector<1xf32>
    %480 = vector.shape_cast %479 : vector<1xf32> to vector<1x1x1xf32>
    %481 = vector.extract %480[0, 0, 0] : f32 from vector<1x1x1xf32>
    %482 = vector.broadcast %481 : f32 to vector<1x1xf32>
    %483 = arith.addf %408, %482 : vector<1x1xf32>
    %484 = vector.extract_strided_slice %8 {offsets = [6, 0, 0], sizes = [1, 8, 128], strides = [1, 1, 1]} : vector<8x8x128xbf16> to vector<1x8x128xbf16>
    %485 = vector.shape_cast %484 : vector<1x8x128xbf16> to vector<8x128xbf16>
    %486 = vector.extract_strided_slice %23 {offsets = [6, 0, 0], sizes = [1, 8, 128], strides = [1, 1, 1]} : vector<8x8x128xbf16> to vector<1x8x128xbf16>
    %487 = vector.shape_cast %486 : vector<1x8x128xbf16> to vector<8x128xbf16>
    %cst_114 = arith.constant dense<0.000000e+00> : vector<8x8xf32>
    %488 = tpu.matmul %485, %485, %cst_114 {dimension_numbers = #tpu.dot_dimension_numbers<[1], [1], [0], [0], [0, 0, 1, 0], [], []>} : vector<8x128xbf16>, vector<8x128xbf16>, vector<8x8xf32> -> vector<8x8xf32>
    %cst_115 = arith.constant dense<0.000000e+00> : vector<8x8xf32>
    %489 = tpu.matmul %487, %487, %cst_115 {dimension_numbers = #tpu.dot_dimension_numbers<[1], [1], [0], [0], [0, 0, 1, 0], [], []>} : vector<8x128xbf16>, vector<8x128xbf16>, vector<8x8xf32> -> vector<8x8xf32>
    %490 = arith.mulf %488, %489 : vector<8x8xf32>
    %491 = vector.shape_cast %490 : vector<8x8xf32> to vector<1x8x8xf32>
    %cst_116 = arith.constant dense<0.000000e+00> : vector<1xf32>
    %492 = vector.multi_reduction <add>, %491, %cst_116 [1, 2] : vector<1x8x8xf32> to vector<1xf32>
    %493 = vector.shape_cast %492 : vector<1xf32> to vector<1x1x1xf32>
    %494 = vector.extract %493[0, 0, 0] : f32 from vector<1x1x1xf32>
    %495 = vector.broadcast %494 : f32 to vector<1x1xf32>
    %496 = arith.mulf %488, %488 : vector<8x8xf32>
    %497 = vector.shape_cast %496 : vector<8x8xf32> to vector<1x8x8xf32>
    %cst_117 = arith.constant dense<0.000000e+00> : vector<1xf32>
    %498 = vector.multi_reduction <add>, %497, %cst_117 [1, 2] : vector<1x8x8xf32> to vector<1xf32>
    %499 = vector.shape_cast %498 : vector<1xf32> to vector<1x1x1xf32>
    %500 = vector.extract %499[0, 0, 0] : f32 from vector<1x1x1xf32>
    %501 = vector.broadcast %500 : f32 to vector<1x1xf32>
    %502 = arith.mulf %489, %489 : vector<8x8xf32>
    %503 = vector.shape_cast %502 : vector<8x8xf32> to vector<1x8x8xf32>
    %cst_118 = arith.constant dense<0.000000e+00> : vector<1xf32>
    %504 = vector.multi_reduction <add>, %503, %cst_118 [1, 2] : vector<1x8x8xf32> to vector<1xf32>
    %505 = vector.shape_cast %504 : vector<1xf32> to vector<1x1x1xf32>
    %506 = vector.extract %505[0, 0, 0] : f32 from vector<1x1x1xf32>
    %507 = vector.broadcast %506 : f32 to vector<1x1xf32>
    %508 = math.absf %495 : vector<1x1xf32>
    %cst_119 = arith.constant 1.000000e-30 : f32
    %509 = vector.broadcast %cst_119 : f32 to vector<1x1xf32>
    %510 = arith.addf %501, %509 : vector<1x1xf32>
    %511 = math.rsqrt %510 : vector<1x1xf32>
    %512 = arith.mulf %508, %511 : vector<1x1xf32>
    %cst_120 = arith.constant 1.000000e-30 : f32
    %513 = vector.broadcast %cst_120 : f32 to vector<1x1xf32>
    %514 = arith.addf %507, %513 : vector<1x1xf32>
    %515 = math.rsqrt %514 : vector<1x1xf32>
    %516 = arith.mulf %512, %515 : vector<1x1xf32>
    %517 = arith.addf %442, %516 : vector<1x1xf32>
    %518 = vector.extract_strided_slice %14 {offsets = [6, 0, 0], sizes = [1, 8, 128], strides = [1, 1, 1]} : vector<8x8x128xf32> to vector<1x8x128xf32>
    %519 = vector.shape_cast %518 : vector<1x8x128xf32> to vector<8x128xf32>
    %520 = vector.shape_cast %519 : vector<8x128xf32> to vector<1x8x128xf32>
    %521 = vector.broadcast %520 : vector<1x8x128xf32> to vector<8x8x128xf32>
    %522 = arith.mulf %521, %14 : vector<8x8x128xf32>
    %cst_121 = arith.constant dense<0.000000e+00> : vector<8x8xf32>
    %523 = vector.multi_reduction <add>, %522, %cst_121 [2] : vector<8x8x128xf32> to vector<8x8xf32>
    %cst_122 = arith.constant dense<0.000000e+00> : vector<8xf32>
    %524 = vector.multi_reduction <add>, %523, %cst_122 [1] : vector<8x8xf32> to vector<8xf32>
    %525 = vector.shape_cast %524 : vector<8xf32> to vector<8x1xf32>
    %526 = vector.extract_strided_slice %29 {offsets = [6, 0, 0], sizes = [1, 8, 128], strides = [1, 1, 1]} : vector<8x8x128xf32> to vector<1x8x128xf32>
    %527 = vector.shape_cast %526 : vector<1x8x128xf32> to vector<8x128xf32>
    %528 = vector.shape_cast %527 : vector<8x128xf32> to vector<1x8x128xf32>
    %529 = vector.broadcast %528 : vector<1x8x128xf32> to vector<8x8x128xf32>
    %530 = arith.mulf %529, %29 : vector<8x8x128xf32>
    %cst_123 = arith.constant dense<0.000000e+00> : vector<8x8xf32>
    %531 = vector.multi_reduction <add>, %530, %cst_123 [2] : vector<8x8x128xf32> to vector<8x8xf32>
    %cst_124 = arith.constant dense<0.000000e+00> : vector<8xf32>
    %532 = vector.multi_reduction <add>, %531, %cst_124 [1] : vector<8x8xf32> to vector<8xf32>
    %533 = vector.shape_cast %532 : vector<8xf32> to vector<8x1xf32>
    %cst_125 = arith.constant 9.765625E-4 : f32
    %534 = vector.broadcast %cst_125 : f32 to vector<8x1xf32>
    %535 = arith.mulf %525, %534 : vector<8x1xf32>
    %cst_126 = arith.constant 9.765625E-4 : f32
    %536 = vector.broadcast %cst_126 : f32 to vector<8x1xf32>
    %537 = arith.mulf %533, %536 : vector<8x1xf32>
    %538 = arith.mulf %535, %537 : vector<8x1xf32>
    %539 = vector.shape_cast %538 : vector<8x1xf32> to vector<1x8x1xf32>
    %cst_127 = arith.constant dense<0.000000e+00> : vector<1xf32>
    %540 = vector.multi_reduction <add>, %539, %cst_127 [1, 2] : vector<1x8x1xf32> to vector<1xf32>
    %541 = vector.shape_cast %540 : vector<1xf32> to vector<1x1x1xf32>
    %542 = vector.extract %541[0, 0, 0] : f32 from vector<1x1x1xf32>
    %543 = vector.broadcast %542 : f32 to vector<1x1xf32>
    %544 = arith.addf %469, %543 : vector<1x1xf32>
    %545 = arith.mulf %535, %535 : vector<8x1xf32>
    %546 = vector.shape_cast %545 : vector<8x1xf32> to vector<1x8x1xf32>
    %cst_128 = arith.constant dense<0.000000e+00> : vector<1xf32>
    %547 = vector.multi_reduction <add>, %546, %cst_128 [1, 2] : vector<1x8x1xf32> to vector<1xf32>
    %548 = vector.shape_cast %547 : vector<1xf32> to vector<1x1x1xf32>
    %549 = vector.extract %548[0, 0, 0] : f32 from vector<1x1x1xf32>
    %550 = vector.broadcast %549 : f32 to vector<1x1xf32>
    %551 = arith.addf %476, %550 : vector<1x1xf32>
    %552 = arith.mulf %537, %537 : vector<8x1xf32>
    %553 = vector.shape_cast %552 : vector<8x1xf32> to vector<1x8x1xf32>
    %cst_129 = arith.constant dense<0.000000e+00> : vector<1xf32>
    %554 = vector.multi_reduction <add>, %553, %cst_129 [1, 2] : vector<1x8x1xf32> to vector<1xf32>
    %555 = vector.shape_cast %554 : vector<1xf32> to vector<1x1x1xf32>
    %556 = vector.extract %555[0, 0, 0] : f32 from vector<1x1x1xf32>
    %557 = vector.broadcast %556 : f32 to vector<1x1xf32>
    %558 = arith.addf %483, %557 : vector<1x1xf32>
    %559 = vector.extract_strided_slice %8 {offsets = [7, 0, 0], sizes = [1, 8, 128], strides = [1, 1, 1]} : vector<8x8x128xbf16> to vector<1x8x128xbf16>
    %560 = vector.shape_cast %559 : vector<1x8x128xbf16> to vector<8x128xbf16>
    %561 = vector.extract_strided_slice %23 {offsets = [7, 0, 0], sizes = [1, 8, 128], strides = [1, 1, 1]} : vector<8x8x128xbf16> to vector<1x8x128xbf16>
    %562 = vector.shape_cast %561 : vector<1x8x128xbf16> to vector<8x128xbf16>
    %cst_130 = arith.constant dense<0.000000e+00> : vector<8x8xf32>
    %563 = tpu.matmul %560, %560, %cst_130 {dimension_numbers = #tpu.dot_dimension_numbers<[1], [1], [0], [0], [0, 0, 1, 0], [], []>} : vector<8x128xbf16>, vector<8x128xbf16>, vector<8x8xf32> -> vector<8x8xf32>
    %cst_131 = arith.constant dense<0.000000e+00> : vector<8x8xf32>
    %564 = tpu.matmul %562, %562, %cst_131 {dimension_numbers = #tpu.dot_dimension_numbers<[1], [1], [0], [0], [0, 0, 1, 0], [], []>} : vector<8x128xbf16>, vector<8x128xbf16>, vector<8x8xf32> -> vector<8x8xf32>
    %565 = arith.mulf %563, %564 : vector<8x8xf32>
    %566 = vector.shape_cast %565 : vector<8x8xf32> to vector<1x8x8xf32>
    %cst_132 = arith.constant dense<0.000000e+00> : vector<1xf32>
    %567 = vector.multi_reduction <add>, %566, %cst_132 [1, 2] : vector<1x8x8xf32> to vector<1xf32>
    %568 = vector.shape_cast %567 : vector<1xf32> to vector<1x1x1xf32>
    %569 = vector.extract %568[0, 0, 0] : f32 from vector<1x1x1xf32>
    %570 = vector.broadcast %569 : f32 to vector<1x1xf32>
    %571 = arith.mulf %563, %563 : vector<8x8xf32>
    %572 = vector.shape_cast %571 : vector<8x8xf32> to vector<1x8x8xf32>
    %cst_133 = arith.constant dense<0.000000e+00> : vector<1xf32>
    %573 = vector.multi_reduction <add>, %572, %cst_133 [1, 2] : vector<1x8x8xf32> to vector<1xf32>
    %574 = vector.shape_cast %573 : vector<1xf32> to vector<1x1x1xf32>
    %575 = vector.extract %574[0, 0, 0] : f32 from vector<1x1x1xf32>
    %576 = vector.broadcast %575 : f32 to vector<1x1xf32>
    %577 = arith.mulf %564, %564 : vector<8x8xf32>
    %578 = vector.shape_cast %577 : vector<8x8xf32> to vector<1x8x8xf32>
    %cst_134 = arith.constant dense<0.000000e+00> : vector<1xf32>
    %579 = vector.multi_reduction <add>, %578, %cst_134 [1, 2] : vector<1x8x8xf32> to vector<1xf32>
    %580 = vector.shape_cast %579 : vector<1xf32> to vector<1x1x1xf32>
    %581 = vector.extract %580[0, 0, 0] : f32 from vector<1x1x1xf32>
    %582 = vector.broadcast %581 : f32 to vector<1x1xf32>
    %583 = math.absf %570 : vector<1x1xf32>
    %cst_135 = arith.constant 1.000000e-30 : f32
    %584 = vector.broadcast %cst_135 : f32 to vector<1x1xf32>
    %585 = arith.addf %576, %584 : vector<1x1xf32>
    %586 = math.rsqrt %585 : vector<1x1xf32>
    %587 = arith.mulf %583, %586 : vector<1x1xf32>
    %cst_136 = arith.constant 1.000000e-30 : f32
    %588 = vector.broadcast %cst_136 : f32 to vector<1x1xf32>
    %589 = arith.addf %582, %588 : vector<1x1xf32>
    %590 = math.rsqrt %589 : vector<1x1xf32>
    %591 = arith.mulf %587, %590 : vector<1x1xf32>
    %592 = arith.addf %517, %591 : vector<1x1xf32>
    %593 = vector.extract_strided_slice %14 {offsets = [7, 0, 0], sizes = [1, 8, 128], strides = [1, 1, 1]} : vector<8x8x128xf32> to vector<1x8x128xf32>
    %594 = vector.shape_cast %593 : vector<1x8x128xf32> to vector<8x128xf32>
    %595 = vector.shape_cast %594 : vector<8x128xf32> to vector<1x8x128xf32>
    %596 = vector.broadcast %595 : vector<1x8x128xf32> to vector<8x8x128xf32>
    %597 = arith.mulf %596, %14 : vector<8x8x128xf32>
    %cst_137 = arith.constant dense<0.000000e+00> : vector<8x8xf32>
    %598 = vector.multi_reduction <add>, %597, %cst_137 [2] : vector<8x8x128xf32> to vector<8x8xf32>
    %cst_138 = arith.constant dense<0.000000e+00> : vector<8xf32>
    %599 = vector.multi_reduction <add>, %598, %cst_138 [1] : vector<8x8xf32> to vector<8xf32>
    %600 = vector.shape_cast %599 : vector<8xf32> to vector<8x1xf32>
    %601 = vector.extract_strided_slice %29 {offsets = [7, 0, 0], sizes = [1, 8, 128], strides = [1, 1, 1]} : vector<8x8x128xf32> to vector<1x8x128xf32>
    %602 = vector.shape_cast %601 : vector<1x8x128xf32> to vector<8x128xf32>
    %603 = vector.shape_cast %602 : vector<8x128xf32> to vector<1x8x128xf32>
    %604 = vector.broadcast %603 : vector<1x8x128xf32> to vector<8x8x128xf32>
    %605 = arith.mulf %604, %29 : vector<8x8x128xf32>
    %cst_139 = arith.constant dense<0.000000e+00> : vector<8x8xf32>
    %606 = vector.multi_reduction <add>, %605, %cst_139 [2] : vector<8x8x128xf32> to vector<8x8xf32>
    %cst_140 = arith.constant dense<0.000000e+00> : vector<8xf32>
    %607 = vector.multi_reduction <add>, %606, %cst_140 [1] : vector<8x8xf32> to vector<8xf32>
    %608 = vector.shape_cast %607 : vector<8xf32> to vector<8x1xf32>
    %cst_141 = arith.constant 9.765625E-4 : f32
    %609 = vector.broadcast %cst_141 : f32 to vector<8x1xf32>
    %610 = arith.mulf %600, %609 : vector<8x1xf32>
    %cst_142 = arith.constant 9.765625E-4 : f32
    %611 = vector.broadcast %cst_142 : f32 to vector<8x1xf32>
    %612 = arith.mulf %608, %611 : vector<8x1xf32>
    %613 = arith.mulf %610, %612 : vector<8x1xf32>
    %614 = vector.shape_cast %613 : vector<8x1xf32> to vector<1x8x1xf32>
    %cst_143 = arith.constant dense<0.000000e+00> : vector<1xf32>
    %615 = vector.multi_reduction <add>, %614, %cst_143 [1, 2] : vector<1x8x1xf32> to vector<1xf32>
    %616 = vector.shape_cast %615 : vector<1xf32> to vector<1x1x1xf32>
    %617 = vector.extract %616[0, 0, 0] : f32 from vector<1x1x1xf32>
    %618 = vector.broadcast %617 : f32 to vector<1x1xf32>
    %619 = arith.addf %544, %618 : vector<1x1xf32>
    %620 = arith.mulf %610, %610 : vector<8x1xf32>
    %621 = vector.shape_cast %620 : vector<8x1xf32> to vector<1x8x1xf32>
    %cst_144 = arith.constant dense<0.000000e+00> : vector<1xf32>
    %622 = vector.multi_reduction <add>, %621, %cst_144 [1, 2] : vector<1x8x1xf32> to vector<1xf32>
    %623 = vector.shape_cast %622 : vector<1xf32> to vector<1x1x1xf32>
    %624 = vector.extract %623[0, 0, 0] : f32 from vector<1x1x1xf32>
    %625 = vector.broadcast %624 : f32 to vector<1x1xf32>
    %626 = arith.addf %551, %625 : vector<1x1xf32>
    %627 = arith.mulf %612, %612 : vector<8x1xf32>
    %628 = vector.shape_cast %627 : vector<8x1xf32> to vector<1x8x1xf32>
    %cst_145 = arith.constant dense<0.000000e+00> : vector<1xf32>
    %629 = vector.multi_reduction <add>, %628, %cst_145 [1, 2] : vector<1x8x1xf32> to vector<1xf32>
    %630 = vector.shape_cast %629 : vector<1xf32> to vector<1x1x1xf32>
    %631 = vector.extract %630[0, 0, 0] : f32 from vector<1x1x1xf32>
    %632 = vector.broadcast %631 : f32 to vector<1x1xf32>
    %633 = arith.addf %558, %632 : vector<1x1xf32>
    %cst_146 = arith.constant 1.250000e-01 : f32
    %634 = vector.broadcast %cst_146 : f32 to vector<1x1xf32>
    %635 = arith.mulf %592, %634 : vector<1x1xf32>
    %cst_147 = arith.constant 9.99999993E-9 : f32
    %636 = vector.broadcast %cst_147 : f32 to vector<1x1xf32>
    %637 = arith.addf %635, %636 : vector<1x1xf32>
    %638 = math.log %637 : vector<1x1xf32>
    %cst_148 = arith.constant 0.000000e+00 : f32
    %639 = vector.broadcast %cst_148 : f32 to vector<1x1xf32>
    %640 = arith.subf %639, %638 : vector<1x1xf32>
    %641 = math.absf %619 : vector<1x1xf32>
    %cst_149 = arith.constant 1.000000e-30 : f32
    %642 = vector.broadcast %cst_149 : f32 to vector<1x1xf32>
    %643 = arith.addf %626, %642 : vector<1x1xf32>
    %644 = math.rsqrt %643 : vector<1x1xf32>
    %645 = arith.mulf %641, %644 : vector<1x1xf32>
    %cst_150 = arith.constant 1.000000e-30 : f32
    %646 = vector.broadcast %cst_150 : f32 to vector<1x1xf32>
    %647 = arith.addf %633, %646 : vector<1x1xf32>
    %648 = math.rsqrt %647 : vector<1x1xf32>
    %649 = arith.mulf %645, %648 : vector<1x1xf32>
    %cst_151 = arith.constant 9.99999993E-9 : f32
    %650 = vector.broadcast %cst_151 : f32 to vector<1x1xf32>
    %651 = arith.addf %649, %650 : vector<1x1xf32>
    %652 = math.log %651 : vector<1x1xf32>
    %cst_152 = arith.constant 0.000000e+00 : f32
    %653 = vector.broadcast %cst_152 : f32 to vector<1x1xf32>
    %654 = arith.subf %653, %652 : vector<1x1xf32>
    %655 = vector.shape_cast %640 : vector<1x1xf32> to vector<1x1x1xf32>
    %c0_153 = arith.constant 0 : index
    %c0_154 = arith.constant 0 : index
    %c0_155 = arith.constant 0 : index
    %656 = vector.load %arg3[%c0_153, %c0_154, %c0_155] : memref<1x1x1xf32, #tpu.memory_space<vmem>>, vector<1x1x1xf32>
    tpu.vector_store %arg3[%c0_153, %c0_154, %c0_155], %655 {strides = array<i32>} : memref<1x1x1xf32, #tpu.memory_space<vmem>>, vector<1x1x1xf32>,
    %657 = vector.shape_cast %654 : vector<1x1xf32> to vector<1x1x1xf32>
    %c0_156 = arith.constant 0 : index
    %c0_157 = arith.constant 0 : index
    %c0_158 = arith.constant 0 : index
    %658 = vector.load %arg4[%c0_156, %c0_157, %c0_158] : memref<1x1x1xf32, #tpu.memory_space<vmem>>, vector<1x1x1xf32>
    tpu.vector_store %arg4[%c0_156, %c0_157, %c0_158], %657 {strides = array<i32>} : memref<1x1x1xf32, #tpu.memory_space<vmem>>, vector<1x1x1xf32>,
    return
  }
  func.func @transform_0(%arg0: i32) -> (i32, i32, i32, i32) {
    %c0_i32 = arith.constant 0 : i32
    %c0_i32_0 = arith.constant 0 : i32
    %c0_i32_1 = arith.constant 0 : i32
    %c0_i32_2 = arith.constant 0 : i32
    return %arg0, %c0_i32, %c0_i32_0, %c0_i32_1 : i32, i32, i32, i32
  }
  func.func @transform_1(%arg0: i32) -> (i32, i32, i32, i32) {
    %c0_i32 = arith.constant 0 : i32
    %c0_i32_0 = arith.constant 0 : i32
    %c0_i32_1 = arith.constant 0 : i32
    %c0_i32_2 = arith.constant 0 : i32
    return %arg0, %c0_i32, %c0_i32_0, %c0_i32_1 : i32, i32, i32, i32
  }
  func.func @transform_2(%arg0: i32) -> (i32, i32, i32) {
    %c0_i32 = arith.constant 0 : i32
    %c0_i32_0 = arith.constant 0 : i32
    %c0_i32_1 = arith.constant 0 : i32
    return %arg0, %c0_i32, %c0_i32_0 : i32, i32, i32
  }
  func.func @transform_3(%arg0: i32) -> (i32, i32, i32) {
    %c0_i32 = arith.constant 0 : i32
    %c0_i32_0 = arith.constant 0 : i32
    %c0_i32_1 = arith.constant 0 : i32
    return %arg0, %c0_i32, %c0_i32_0 : i32, i32, i32
  }
}

</mosaic_0001>

<llo_original>
// kernel: tpu_custom_call.1
$region0: #{tpu_custom_call.1}
  #allocation0 [shape = 'u32[]', space=smem, size = 0x4, offset = 0x4, fixed_abs, tag = 'smem constant byte address 0x4 - core index']
  #allocation1 [shape = 'u32[144,128]{1,0:T(1,128)}', space=vmem, size = 0x12000, scoped, tag = 'internal scratch']
  %s0 = inlined_call_operand.hbm [shape: f32[5,8,8,128], index: 0, kind: input, shape index: {}]
  %s1 = inlined_call_operand.hbm [shape: f32[5,8,8,128], index: 1, kind: input, shape index: {}]
  %s2 = inlined_call_operand.vmem [shape: f32[5,1,1], index: 2, kind: output, shape index: {0}]
  %s3 = inlined_call_operand.vmem [shape: f32[5,1,1], index: 3, kind: output, shape index: {1}]
  %4 = xla_tuple %s2, %s3
  %s5 = sld [smem:[#allocation0]]
  $region57: #{tpu_custom_call.1} parent=0
    _
  %s7 = ssub.s32 1, %s5
  %s8 = scalar_select 0, %s7, %s5
  $region1: #{tpu_custom_call.1} parent=0
    #allocation2 [shape = 'u8[65536]{0}', space=vmem, size = 0x10000, scoped, tag = 'input window, operand 0']
    #allocation3 [shape = 's32[2]{0}', space=sflag, size = 0x8, scoped, tag = 'scoped memory for tpu_custom_call.1']
    #allocation4 [shape = 'u8[65536]{0}', space=vmem, size = 0x10000, scoped, tag = 'input window, operand 1']
    #allocation5 [shape = 's32[2]{0}', space=sflag, size = 0x8, scoped, tag = 'scoped memory for tpu_custom_call.1']
    %9 = vsyncpa [#allocation3], 0
    %s10 = scalar_lea.sflag [#allocation3], 1
    %11 = vsyncpa %s10, 0
    %12 = vsyncpa [#allocation5], 0
    %s13 = scalar_lea.sflag [#allocation5], 1
    %14 = vsyncpa %s13, 0
    loop: start=0, step=1, limit=7
    $region2: #{tpu_custom_call.1} parent=1 // loop_pre_header
      _
    $region3: #{tpu_custom_call.1} parent=1 // loop_header
      %s16 = sphi 0, %s20
      %p17 = scmp.ge.s32.totalorder %s16, 7
      %s26 = sphi 0, %s28
      %s29 = sphi 0, %s26
      %s30 = sphi 0, %s29
      %s46 = sphi 0, %s30
      %s52 = sphi 0, %s54
      %s55 = sphi 0, %s52
      %s56 = sphi 0, %s55
      %s72 = sphi 0, %s56
      %s78 = sphi 0, %s80
      %s81 = sphi 0, %s78
      %s82 = sphi 0, %s81
      %s98 = sphi 0, %s82
      %s104 = sphi 0, %s106
      %s107 = sphi 0, %s104
      %s108 = sphi 0, %s107
      %s124 = sphi 0, %s108
    $region4: #{tpu_custom_call.1} parent=1 // loop_header_branch
      %19 = sbr.rel (%p17) target = $region8
    $region5: #{tpu_custom_call.1} parent=1 // loop_body
      %s21 = ssub.s32 %s16, 1
      %s22 = ssub.s32 %s16, 2
      %s23 = sadd.s32 %s16, 1
      %s24 = ssub.s32 %s16, %s23
      %p25 = scmp.eq.s32.totalorder %s24, 0
      %s27 = sadd.s32 %s26, 1
      %s28 = scalar_select %p25, %s26, %s27
      %p31 = pneg %p25
      %p32 = scmp.eq.s32.totalorder %s16, 4
      %p33 = por %p31, %p32
      %p34 = scmp.ne.s32.totalorder %s26, %s29
      %p35 = scmp.eq.s32.totalorder %s16, 0
      %p36 = por %p34, %p35
      %p37 = scmp.ne.s32.totalorder %s26, %s29
      %p38 = scmp.eq.s32.totalorder %s21, 4
      %p39 = por %p37, %p38
      %p40 = scmp.ne.s32.totalorder %s29, %s30
      %p41 = scmp.eq.s32.totalorder %s21, 0
      %p42 = por %p40, %p41
      %p43 = scmp.ne.s32.totalorder %s29, %s30
      %p44 = scmp.eq.s32.totalorder %s22, 4
      %p45 = por %p43, %p44
      %p47 = scmp.ne.s32.totalorder %s30, %s46
      %p48 = scmp.eq.s32.totalorder %s22, 0
      %p49 = por %p47, %p48
      %s50 = ssub.s32 %s16, %s23
      %p51 = scmp.eq.s32.totalorder %s50, 0
      %s53 = sadd.s32 %s52, 1
      %s54 = scalar_select %p51, %s52, %s53
      %p57 = pneg %p51
      %p58 = scmp.eq.s32.totalorder %s16, 4
      %p59 = por %p57, %p58
      %p60 = scmp.ne.s32.totalorder %s52, %s55
      %p61 = scmp.eq.s32.totalorder %s16, 0
      %p62 = por %p60, %p61
      %p63 = scmp.ne.s32.totalorder %s52, %s55
      %p64 = scmp.eq.s32.totalorder %s21, 4
      %p65 = por %p63, %p64
      %p66 = scmp.ne.s32.totalorder %s55, %s56
      %p67 = scmp.eq.s32.totalorder %s21, 0
      %p68 = por %p66, %p67
      %p69 = scmp.ne.s32.totalorder %s55, %s56
      %p70 = scmp.eq.s32.totalorder %s22, 4
      %p71 = por %p69, %p70
      %p73 = scmp.ne.s32.totalorder %s56, %s72
      %p74 = scmp.eq.s32.totalorder %s22, 0
      %p75 = por %p73, %p74
      %s76 = ssub.s32 %s16, %s23
      %p77 = scmp.eq.s32.totalorder %s76, 0
      %s79 = sadd.s32 %s78, 1
      %s80 = scalar_select %p77, %s78, %s79
      %p83 = pneg %p77
      %p84 = scmp.eq.s32.totalorder %s16, 4
      %p85 = por %p83, %p84
      %p86 = scmp.ne.s32.totalorder %s78, %s81
      %p87 = scmp.eq.s32.totalorder %s16, 0
      %p88 = por %p86, %p87
      %p89 = scmp.ne.s32.totalorder %s78, %s81
      %p90 = scmp.eq.s32.totalorder %s21, 4
      %p91 = por %p89, %p90
      %p92 = scmp.ne.s32.totalorder %s81, %s82
      %p93 = scmp.eq.s32.totalorder %s21, 0
      %p94 = por %p92, %p93
      %p95 = scmp.ne.s32.totalorder %s81, %s82
      %p96 = scmp.eq.s32.totalorder %s22, 4
      %p97 = por %p95, %p96
      %p99 = scmp.ne.s32.totalorder %s82, %s98
      %p100 = scmp.eq.s32.totalorder %s22, 0
      %p101 = por %p99, %p100
      %s102 = ssub.s32 %s16, %s23
      %p103 = scmp.eq.s32.totalorder %s102, 0
      %s105 = sadd.s32 %s104, 1
      %s106 = scalar_select %p103, %s104, %s105
      %p109 = pneg %p103
      %p110 = scmp.eq.s32.totalorder %s16, 4
      %p111 = por %p109, %p110
      %p112 = scmp.ne.s32.totalorder %s104, %s107
      %p113 = scmp.eq.s32.totalorder %s16, 0
      %p114 = por %p112, %p113
      %p115 = scmp.ne.s32.totalorder %s104, %s107
      %p116 = scmp.eq.s32.totalorder %s21, 4
      %p117 = por %p115, %p116
      %p118 = scmp.ne.s32.totalorder %s107, %s108
      %p119 = scmp.eq.s32.totalorder %s21, 0
      %p120 = por %p118, %p119
      %p121 = scmp.ne.s32.totalorder %s107, %s108
      %p122 = scmp.eq.s32.totalorder %s22, 4
      %p123 = por %p121, %p122
      %p125 = scmp.ne.s32.totalorder %s108, %s124
      %p126 = scmp.eq.s32.totalorder %s22, 0
      %p127 = por %p125, %p126
      %p128 = scmp.le.s32.totalorder 1, %s16
      %p129 = scmp.lt.s32.totalorder %s16, 6
      %p130 = pnand %p128, %p129
      %p131 = pneg %p130
      // Predicated region
      $region9: #{tpu_custom_call.1} parent=5 // pred_check
        _
      $region10: #{tpu_custom_call.1} parent=5 // pred_check_branch
        %133 = sbr.rel (%p130) target = $region12
      $region11: #{tpu_custom_call.1} parent=5 // pred_region
        %s134 = ssub.s32 %s16, 1
      $region12: #{tpu_custom_call.1} parent=5 // pred_fallthru
        _
      %p135 = scmp.lt.s32.totalorder %s16, 5
      // Predicated region
      $region13: #{tpu_custom_call.1} parent=5 // pred_check
        %p136 = pneg %p135
      $region14: #{tpu_custom_call.1} parent=5 // pred_check_branch
        %138 = sbr.rel (%p136) target = $region16
      $region15: #{tpu_custom_call.1} parent=5 // pred_region
        // Predicated region
        $region17: #{tpu_custom_call.1} parent=15 // pred_check
          %p139 = pneg %p36
        $region18: #{tpu_custom_call.1} parent=15 // pred_check_branch
          %141 = sbr.rel (%p139) target = $region20
        $region19: #{tpu_custom_call.1} parent=15 // pred_region
          %s142 = sand.u32 %s26, 1
          %s143 = scalar_lea.sflag [#allocation3], %s142
          %s144 = sand.u32 %s26, 1
          %s145 = smul.addr %s144, 64
          %s146 = scalar_lea.vmem [#allocation2], %s145
          %s148 = ssub.s32 1024, 1024
          %149 = vsyncadd %s143, %s148
          %s150 = smul.addr %s16, 8
          %s151 = smul.addr %s150, 128
          %s152 = scalar_lea.hbm %s0, %s151
          %s153 = sshll.u32 %s146, 4
          %s154 = int_to_ptr.vmem [resolvable:$true] %s153
          %159 = dma.hbm_to_vmem [thread:$0]  %s152, 1024, %s154, %s143, 128, 128, 8
        $region20: #{tpu_custom_call.1} parent=15 // pred_fallthru
          _
        // Predicated region
        $region21: #{tpu_custom_call.1} parent=15 // pred_check
          %p160 = pneg %p62
        $region22: #{tpu_custom_call.1} parent=15 // pred_check_branch
          %162 = sbr.rel (%p160) target = $region24
        $region23: #{tpu_custom_call.1} parent=15 // pred_region
          %s163 = sand.u32 %s52, 1
          %s164 = scalar_lea.sflag [#allocation5], %s163
          %s165 = sand.u32 %s52, 1
          %s166 = smul.addr %s165, 64
          %s167 = scalar_lea.vmem [#allocation4], %s166
          %s169 = ssub.s32 1024, 1024
          %170 = vsyncadd %s164, %s169
          %s171 = smul.addr %s16, 8
          %s172 = smul.addr %s171, 128
          %s173 = scalar_lea.hbm %s1, %s172
          %s174 = sshll.u32 %s167, 4
          %s175 = int_to_ptr.vmem [resolvable:$true] %s174
          %180 = dma.hbm_to_vmem [thread:$0]  %s173, 1024, %s175, %s164, 128, 128, 8
        $region24: #{tpu_custom_call.1} parent=15 // pred_fallthru
          _
      $region16: #{tpu_custom_call.1} parent=5 // pred_fallthru
        _
      %p181 = scmp.le.s32.totalorder 1, %s16
      %p182 = scmp.lt.s32.totalorder %s16, 6
      %p183 = pnand %p181, %p182
      %p184 = pneg %p183
      // Predicated region
      $region25: #{tpu_custom_call.1} parent=5 // pred_check
        _
      $region26: #{tpu_custom_call.1} parent=5 // pred_check_branch
        %186 = sbr.rel (%p183) target = $region28
      $region27: #{tpu_custom_call.1} parent=5 // pred_region
        %s187 = ssub.s32 %s16, 1
        %s188 = sand.u32 %s29, 1
        %s189 = scalar_lea.sflag [#allocation3], %s188
        %s190 = sand.u32 %s29, 1
        %s191 = smul.addr %s190, 64
        %s192 = scalar_lea.vmem [#allocation2], %s191
        // Predicated region
        $region29: #{tpu_custom_call.1} parent=27 // pred_check
          %p193 = pneg %p42
        $region30: #{tpu_custom_call.1} parent=27 // pred_check_branch
          %195 = sbr.rel (%p193) target = $region32
        $region31: #{tpu_custom_call.1} parent=27 // pred_region
          %196 = dma.done %s189, 1024
        $region32: #{tpu_custom_call.1} parent=27 // pred_fallthru
          _
        %s197 = sand.u32 %s55, 1
        %s198 = scalar_lea.sflag [#allocation5], %s197
        %s199 = sand.u32 %s55, 1
        %s200 = smul.addr %s199, 64
        %s201 = scalar_lea.vmem [#allocation4], %s200
        // Predicated region
        $region33: #{tpu_custom_call.1} parent=27 // pred_check
          %p202 = pneg %p68
        $region34: #{tpu_custom_call.1} parent=27 // pred_check_branch
          %204 = sbr.rel (%p202) target = $region36
        $region35: #{tpu_custom_call.1} parent=27 // pred_region
          %205 = dma.done %s198, 1024
        $region36: #{tpu_custom_call.1} parent=27 // pred_fallthru
          _
        %s206 = sand.u32 %s29, 1
        %s207 = scalar_lea.sflag [#allocation3], %s206
        %s208 = sand.u32 %s29, 1
        %s209 = smul.addr %s208, 64
        %s210 = scalar_lea.vmem [#allocation2], %s209
        %p211 = pneg %p42
        %p212 = pneg %p39
        %s213 = sand.u32 %s55, 1
        %s214 = scalar_lea.sflag [#allocation5], %s213
        %s215 = sand.u32 %s55, 1
        %s216 = smul.addr %s215, 64
        %s217 = scalar_lea.vmem [#allocation4], %s216
        %p218 = pneg %p68
        %p219 = pneg %p65
        %p220 = pneg %p94
        %p221 = pneg %p91
        %p222 = scmp.lt.s32.totalorder %s21, 4
        %s223 = scalar_select %p222, %s21, 4
        %s224 = scalar_lea.vmem %s2, %s223
        %p225 = pneg %p120
        %p226 = pneg %p117
        %p227 = scmp.lt.s32.totalorder %s21, 4
        %s228 = scalar_select %p227, %s21, 4
        %s229 = scalar_lea.vmem %s3, %s228
        %p230 = scmp.lt.s32.totalorder %s21, 4
        %s231 = scalar_select %p230, %s21, 4
        %s232 = scalar_lea.vmem %s2, %s231
        %p233 = scmp.lt.s32.totalorder %s21, 4
        %s234 = scalar_select %p233, %s21, 4
        %s235 = scalar_lea.vmem %s3, %s234
        %v237 = vld [vmem:[%s192] sm:$0xff]
        %v238 = vld [vmem:[%s192 + $0x8] sm:$0xff]
        %v239 = vld [vmem:[%s192 + $0x10] sm:$0xff]
        %v240 = vld [vmem:[%s192 + $0x18] sm:$0xff]
        %v241 = vld [vmem:[%s192 + $0x20] sm:$0xff]
        %v242 = vld [vmem:[%s192 + $0x28] sm:$0xff]
        %v243 = vld [vmem:[%s192 + $0x30] sm:$0xff]
        %v244 = vld [vmem:[%s192 + $0x38] sm:$0xff]
        %v245 = vrot.slane %v237, 4
        %v246 = vadd.f32 %v237, %v245
        %v247 = vrot.slane %v246, 2
        %v248 = vadd.f32 %v246, %v247
        %v249 = vrot.slane %v248, 1
        %v250 = vadd.f32 %v248, %v249
        %v251 = vrot.slane %v238, 4
        %v252 = vadd.f32 %v238, %v251
        %v253 = vrot.slane %v252, 2
        %v254 = vadd.f32 %v252, %v253
        %v255 = vrot.slane %v254, 1
        %v256 = vadd.f32 %v254, %v255
        %v257 = vrot.slane %v239, 4
        %v258 = vadd.f32 %v239, %v257
        %v259 = vrot.slane %v258, 2
        %v260 = vadd.f32 %v258, %v259
        %v261 = vrot.slane %v260, 1
        %v262 = vadd.f32 %v260, %v261
        %v263 = vrot.slane %v240, 4
        %v264 = vadd.f32 %v240, %v263
        %v265 = vrot.slane %v264, 2
        %v266 = vadd.f32 %v264, %v265
        %v267 = vrot.slane %v266, 1
        %v268 = vadd.f32 %v266, %v267
        %v269 = vrot.slane %v241, 4
        %v270 = vadd.f32 %v241, %v269
        %v271 = vrot.slane %v270, 2
        %v272 = vadd.f32 %v270, %v271
        %v273 = vrot.slane %v272, 1
        %v274 = vadd.f32 %v272, %v273
        %v275 = vrot.slane %v242, 4
        %v276 = vadd.f32 %v242, %v275
        %v277 = vrot.slane %v276, 2
        %v278 = vadd.f32 %v276, %v277
        %v279 = vrot.slane %v278, 1
        %v280 = vadd.f32 %v278, %v279
        %v281 = vrot.slane %v243, 4
        %v282 = vadd.f32 %v243, %v281
        %v283 = vrot.slane %v282, 2
        %v284 = vadd.f32 %v282, %v283
        %v285 = vrot.slane %v284, 1
        %v286 = vadd.f32 %v284, %v285
        %v287 = vrot.slane %v244, 4
        %v288 = vadd.f32 %v244, %v287
        %v289 = vrot.slane %v288, 2
        %v290 = vadd.f32 %v288, %v289
        %v291 = vrot.slane %v290, 1
        %v292 = vadd.f32 %v290, %v291
        %v293 = vrcp.pop 8.0
        %v294 = vmul.f32 %v250, %v293
        %v295 = vmul.f32 %v256, %v293
        %v296 = vmul.f32 %v262, %v293
        %v297 = vmul.f32 %v268, %v293
        %v298 = vmul.f32 %v274, %v293
        %v299 = vmul.f32 %v280, %v293
        %v300 = vmul.f32 %v286, %v293
        %v301 = vmul.f32 %v292, %v293
        %v302 = vsub.f32 %v237, %v294
        %v303 = vsub.f32 %v238, %v295
        %v304 = vsub.f32 %v239, %v296
        %v305 = vsub.f32 %v240, %v297
        %v306 = vsub.f32 %v241, %v298
        %v307 = vsub.f32 %v242, %v299
        %v308 = vsub.f32 %v243, %v300
        %v309 = vsub.f32 %v244, %v301
        %v310 = vpack.c.bf16 %v302, %v302
        %v311 = vpack.c.bf16 %v303, %v303
        %v312 = vpack.c.bf16 %v304, %v304
        %v313 = vpack.c.bf16 %v305, %v305
        %v314 = vpack.c.bf16 %v306, %v306
        %v315 = vpack.c.bf16 %v307, %v307
        %v316 = vpack.c.bf16 %v308, %v308
        %v317 = vpack.c.bf16 %v309, %v309
        %v318 = vadd.f32 %v237, %v238
        %v319 = vadd.f32 %v318, %v239
        %v320 = vadd.f32 %v319, %v240
        %v321 = vadd.f32 %v320, %v241
        %v322 = vadd.f32 %v321, %v242
        %v323 = vadd.f32 %v322, %v243
        %v324 = vadd.f32 %v323, %v244
        %v325 = vmul.f32 %v324, %v293
        %v326 = vsub.f32 %v237, %v325
        %v327 = vsub.f32 %v238, %v325
        %v328 = vsub.f32 %v239, %v325
        %v329 = vsub.f32 %v240, %v325
        %v330 = vsub.f32 %v241, %v325
        %v331 = vsub.f32 %v242, %v325
        %v332 = vsub.f32 %v243, %v325
        %v333 = vsub.f32 %v244, %v325
        %v334 = vld [vmem:[%s201] sm:$0xff]
        %v335 = vld [vmem:[%s201 + $0x8] sm:$0xff]
        %v336 = vld [vmem:[%s201 + $0x10] sm:$0xff]
        %v337 = vld [vmem:[%s201 + $0x18] sm:$0xff]
        %v338 = vld [vmem:[%s201 + $0x20] sm:$0xff]
        %v339 = vld [vmem:[%s201 + $0x28] sm:$0xff]
        %v340 = vld [vmem:[%s201 + $0x30] sm:$0xff]
        %v341 = vld [vmem:[%s201 + $0x38] sm:$0xff]
        %v342 = vrot.slane %v334, 4
        %v343 = vadd.f32 %v334, %v342
        %v344 = vrot.slane %v343, 2
        %v345 = vadd.f32 %v343, %v344
        %v346 = vrot.slane %v345, 1
        %v347 = vadd.f32 %v345, %v346
        %v348 = vrot.slane %v335, 4
        %v349 = vadd.f32 %v335, %v348
        %v350 = vrot.slane %v349, 2
        %v351 = vadd.f32 %v349, %v350
        %v352 = vrot.slane %v351, 1
        %v353 = vadd.f32 %v351, %v352
        %v354 = vrot.slane %v336, 4
        %v355 = vadd.f32 %v336, %v354
        %v356 = vrot.slane %v355, 2
        %v357 = vadd.f32 %v355, %v356
        %v358 = vrot.slane %v357, 1
        %v359 = vadd.f32 %v357, %v358
        %v360 = vrot.slane %v337, 4
        %v361 = vadd.f32 %v337, %v360
        %v362 = vrot.slane %v361, 2
        %v363 = vadd.f32 %v361, %v362
        %v364 = vrot.slane %v363, 1
        %v365 = vadd.f32 %v363, %v364
        %v366 = vrot.slane %v338, 4
        %v367 = vadd.f32 %v338, %v366
        %v368 = vrot.slane %v367, 2
        %v369 = vadd.f32 %v367, %v368
        %v370 = vrot.slane %v369, 1
        %v371 = vadd.f32 %v369, %v370
        %v372 = vrot.slane %v339, 4
        %v373 = vadd.f32 %v339, %v372
        %v374 = vrot.slane %v373, 2
        %v375 = vadd.f32 %v373, %v374
        %v376 = vrot.slane %v375, 1
        %v377 = vadd.f32 %v375, %v376
        %v378 = vrot.slane %v340, 4
        %v379 = vadd.f32 %v340, %v378
        %v380 = vrot.slane %v379, 2
        %v381 = vadd.f32 %v379, %v380
        %v382 = vrot.slane %v381, 1
        %v383 = vadd.f32 %v381, %v382
        %v384 = vrot.slane %v341, 4
        %v385 = vadd.f32 %v341, %v384
        %v386 = vrot.slane %v385, 2
        %v387 = vadd.f32 %v385, %v386
        %v388 = vrot.slane %v387, 1
        %v389 = vadd.f32 %v387, %v388
        %v390 = vmul.f32 %v347, %v293
        %v391 = vmul.f32 %v353, %v293
        %v392 = vmul.f32 %v359, %v293
        %v393 = vmul.f32 %v365, %v293
        %v394 = vmul.f32 %v371, %v293
        %v395 = vmul.f32 %v377, %v293
        %v396 = vmul.f32 %v383, %v293
        %v397 = vmul.f32 %v389, %v293
        %v398 = vsub.f32 %v334, %v390
        %v399 = vsub.f32 %v335, %v391
        %v400 = vsub.f32 %v336, %v392
        %v401 = vsub.f32 %v337, %v393
        %v402 = vsub.f32 %v338, %v394
        %v403 = vsub.f32 %v339, %v395
        %v404 = vsub.f32 %v340, %v396
        %v405 = vsub.f32 %v341, %v397
        %v406 = vpack.c.bf16 %v398, %v398
        %v407 = vpack.c.bf16 %v399, %v399
        %v408 = vpack.c.bf16 %v400, %v400
        %v409 = vpack.c.bf16 %v401, %v401
        %v410 = vpack.c.bf16 %v402, %v402
        %v411 = vpack.c.bf16 %v403, %v403
        %v412 = vpack.c.bf16 %v404, %v404
        %v413 = vpack.c.bf16 %v405, %v405
        %v414 = vadd.f32 %v334, %v335
        %v415 = vadd.f32 %v414, %v336
        %v416 = vadd.f32 %v415, %v337
        %v417 = vadd.f32 %v416, %v338
        %v418 = vadd.f32 %v417, %v339
        %v419 = vadd.f32 %v418, %v340
        %v420 = vadd.f32 %v419, %v341
        %v421 = vmul.f32 %v420, %v293
        %v422 = vsub.f32 %v334, %v421
        %v423 = vsub.f32 %v335, %v421
        %v424 = vsub.f32 %v336, %v421
        %v425 = vsub.f32 %v337, %v421
        %v426 = vsub.f32 %v338, %v421
        %v427 = vsub.f32 %v339, %v421
        %v428 = vsub.f32 %v340, %v421
        %v429 = vsub.f32 %v341, %v421
        %430 = vmatprep.subr.bf16.mxu0 0
        %431 = vmatpush1.bf16.xpose.msra.mxu0 0
        %432 = vmatprep.subr.bf16.mxu0 0
        %433 = vmatpush1.bf16.xpose.msra.mxu0 0
        %434 = vmatprep.subr.bf16.mxu0 0
        %435 = vmatpush1.bf16.xpose.msra.mxu0 0
        %436 = vmatprep.subr.bf16.mxu0 0
        %437 = vmatpush1.bf16.xpose.msra.mxu0 0
        %438 = vmatprep.subr.bf16.mxu0 0
        %439 = vmatpush1.bf16.xpose.msra.mxu0 0
        %440 = vmatprep.subr.bf16.mxu0 0
        %441 = vmatpush1.bf16.xpose.msra.mxu0 0
        %442 = vmatprep.subr.bf16.mxu0 0
        %443 = vmatpush1.bf16.xpose.msra.mxu0 0
        %444 = vmatprep.subr.bf16.mxu0 0
        %445 = vmatpush1.bf16.xpose.msra.mxu0 %v310
        %446 = vmatprep.subr.bf16.mxu0 0
        %447 = vmatpush2.bf16.xpose.msra.mxu0 0
        %448 = vmatprep.subr.bf16.mxu0 0
        %449 = vmatpush2.bf16.xpose.msra.mxu0 0
        %450 = vmatprep.subr.bf16.mxu0 0
        %451 = vmatpush2.bf16.xpose.msra.mxu0 0
        %452 = vmatprep.subr.bf16.mxu0 0
        %453 = vmatpush2.bf16.xpose.msra.mxu0 0
        %454 = vmatprep.subr.bf16.mxu0 0
        %455 = vmatpush2.bf16.xpose.msra.mxu0 0
        %456 = vmatprep.subr.bf16.mxu0 0
        %457 = vmatpush2.bf16.xpose.msra.mxu0 0
        %458 = vmatprep.subr.bf16.mxu0 0
        %459 = vmatpush2.bf16.xpose.msra.mxu0 0
        %460 = vmatprep.subr.bf16.mxu0 0
        %461 = vmatpush2.bf16.xpose.msra.mxu0 0
        %462 = vmatprep.mubr.bf16.mxu0 0
        %463 = vmatmul.mubr.bf16.gmra.mxu0 %v310
        %v464 = vpop.f32.mrf.mxu0
        %v465 = vadd.f32 0.0, %v464
        %v466 = vpop.f32.mrf.mxu0
        %v467 = vpop.f32.mrf.mxu0
        %v468 = vpop.f32.mrf.mxu0
        %469 = vdwg.mxu0
        %470 = vmatprep.subr.bf16.mxu0 0
        %471 = vmatpush1.bf16.xpose.msra.mxu0 0
        %472 = vmatprep.subr.bf16.mxu0 0
        %473 = vmatpush1.bf16.xpose.msra.mxu0 0
        %474 = vmatprep.subr.bf16.mxu0 0
        %475 = vmatpush1.bf16.xpose.msra.mxu0 0
        %476 = vmatprep.subr.bf16.mxu0 0
        %477 = vmatpush1.bf16.xpose.msra.mxu0 0
        %478 = vmatprep.subr.bf16.mxu0 0
        %479 = vmatpush1.bf16.xpose.msra.mxu0 0
        %480 = vmatprep.subr.bf16.mxu0 0
        %481 = vmatpush1.bf16.xpose.msra.mxu0 0
        %482 = vmatprep.subr.bf16.mxu0 0
        %483 = vmatpush1.bf16.xpose.msra.mxu0 0
        %484 = vmatprep.subr.bf16.mxu0 0
        %485 = vmatpush1.bf16.xpose.msra.mxu0 %v406
        %486 = vmatprep.subr.bf16.mxu0 0
        %487 = vmatpush2.bf16.xpose.msra.mxu0 0
        %488 = vmatprep.subr.bf16.mxu0 0
        %489 = vmatpush2.bf16.xpose.msra.mxu0 0
        %490 = vmatprep.subr.bf16.mxu0 0
        %491 = vmatpush2.bf16.xpose.msra.mxu0 0
        %492 = vmatprep.subr.bf16.mxu0 0
        %493 = vmatpush2.bf16.xpose.msra.mxu0 0
        %494 = vmatprep.subr.bf16.mxu0 0
        %495 = vmatpush2.bf16.xpose.msra.mxu0 0
        %496 = vmatprep.subr.bf16.mxu0 0
        %497 = vmatpush2.bf16.xpose.msra.mxu0 0
        %498 = vmatprep.subr.bf16.mxu0 0
        %499 = vmatpush2.bf16.xpose.msra.mxu0 0
        %500 = vmatprep.subr.bf16.mxu0 0
        %501 = vmatpush2.bf16.xpose.msra.mxu0 0
        %502 = vmatprep.mubr.bf16.mxu0 0
        %503 = vmatmul.mubr.bf16.gmra.mxu0 %v406
        %v504 = vpop.f32.mrf.mxu0
        %v505 = vadd.f32 0.0, %v504
        %v506 = vpop.f32.mrf.mxu0
        %v507 = vpop.f32.mrf.mxu0
        %v508 = vpop.f32.mrf.mxu0
        %509 = vdwg.mxu0
        %v510 = vmul.f32 %v465, %v505
        %vm511 = vcmask 64512
        %v512 = vsel %vm511, %v510, 0.0
        %513 = vadd.xlane.f32.xlu0 %v512
        %v514 = vpop.xlane.xlu0 %513
        %v515 = vrot.slane %v514, 4
        %v516 = vadd.f32 %v514, %v515
        %v517 = vrot.slane %v516, 2
        %v518 = vadd.f32 %v516, %v517
        %v519 = vrot.slane %v518, 1
        %v520 = vadd.f32 %v518, %v519
        %s521 = vtos %v520
        %v522 = vstv %s521
        %v523 = vmul.f32 %v465, %v465
        %v524 = vsel %vm511, %v523, 0.0
        %525 = vadd.xlane.f32.xlu0 %v524
        %v526 = vpop.xlane.xlu0 %525
        %v527 = vrot.slane %v526, 4
        %v528 = vadd.f32 %v526, %v527
        %v529 = vrot.slane %v528, 2
        %v530 = vadd.f32 %v528, %v529
        %v531 = vrot.slane %v530, 1
        %v532 = vadd.f32 %v530, %v531
        %s533 = vtos %v532
        %v534 = vstv %s533
        %v535 = vmul.f32 %v505, %v505
        %v536 = vsel %vm511, %v535, 0.0
        %537 = vadd.xlane.f32.xlu0 %v536
        %v538 = vpop.xlane.xlu0 %537
        %v539 = vrot.slane %v538, 4
        %v540 = vadd.f32 %v538, %v539
        %v541 = vrot.slane %v540, 2
        %v542 = vadd.f32 %v540, %v541
        %v543 = vrot.slane %v542, 1
        %v544 = vadd.f32 %v542, %v543
        %s545 = vtos %v544
        %v546 = vstv %s545
        %v547 = vand.u32 2147483647, %v522
        %v548 = vadd.f32 %v534, 1e-30
        %v549 = vrsqrt.pop %v548
        %v550 = vmul.f32 %v547, %v549
        %v551 = vadd.f32 %v546, 1e-30
        %v552 = vrsqrt.pop %v551
        %v553 = vmul.f32 %v550, %v552
        %v554 = vadd.f32 %v553, 0.0
        %v555 = vmul.f32 %v326, %v326
        %v556 = vmul.f32 %v326, %v327
        %v557 = vmul.f32 %v326, %v328
        %v558 = vmul.f32 %v326, %v329
        %v559 = vmul.f32 %v326, %v330
        %v560 = vmul.f32 %v326, %v331
        %v561 = vmul.f32 %v326, %v332
        %v562 = vmul.f32 %v326, %v333
        %563 = vadd.xlane.f32.xlu0 %v555
        %v564 = vpop.xlane.xlu0 %563
        %565 = vadd.xlane.f32.xlu0 %v556
        %v566 = vpop.xlane.xlu0 %565
        %567 = vadd.xlane.f32.xlu0 %v557
        %v568 = vpop.xlane.xlu0 %567
        %569 = vadd.xlane.f32.xlu0 %v558
        %v570 = vpop.xlane.xlu0 %569
        %571 = vadd.xlane.f32.xlu0 %v559
        %v572 = vpop.xlane.xlu0 %571
        %573 = vadd.xlane.f32.xlu0 %v560
        %v574 = vpop.xlane.xlu0 %573
        %575 = vadd.xlane.f32.xlu0 %v561
        %v576 = vpop.xlane.xlu0 %575
        %577 = vadd.xlane.f32.xlu0 %v562
        %v578 = vpop.xlane.xlu0 %577
        %v587 = vlaneseq
        %v588 = vand.u32 %v587, 127
        %v589 = vlaneseq
        %v590 = vshrl.u32 %v589, 7
        %v591 = vsub.s32 %v588, %v590
        %v592 = vrot.slane %v564, %v591
        %v593 = vlaneseq
        %v594 = vshrl.u32 %v593, 7
        %v595 = vsub.s32 %v588, %v594
        %v596 = vrot.slane %v566, %v595
        %v597 = vlaneseq
        %v598 = vshrl.u32 %v597, 7
        %v599 = vsub.s32 %v588, %v598
        %v600 = vrot.slane %v568, %v599
        %v601 = vlaneseq
        %v602 = vshrl.u32 %v601, 7
        %v603 = vsub.s32 %v588, %v602
        %v604 = vrot.slane %v570, %v603
        %v605 = vlaneseq
        %v606 = vshrl.u32 %v605, 7
        %v607 = vsub.s32 %v588, %v606
        %v608 = vrot.slane %v572, %v607
        %v609 = vlaneseq
        %v610 = vshrl.u32 %v609, 7
        %v611 = vsub.s32 %v588, %v610
        %v612 = vrot.slane %v574, %v611
        %v613 = vlaneseq
        %v614 = vshrl.u32 %v613, 7
        %v615 = vsub.s32 %v588, %v614
        %v616 = vrot.slane %v576, %v615
        %v617 = vlaneseq
        %v618 = vshrl.u32 %v617, 7
        %v619 = vsub.s32 %v588, %v618
        %v620 = vrot.slane %v578, %v619
        %vm621 = vcmask 1041409
        %v622 = vsel %vm621, %v596, %v592
        %vm623 = vcmask 1042434
        %v624 = vsel %vm623, %v600, %v622
        %vm625 = vcmask 1043459
        %v626 = vsel %vm625, %v604, %v624
        %vm627 = vcmask 1044484
        %v628 = vsel %vm627, %v608, %v626
        %vm629 = vcmask 1045509
        %v630 = vsel %vm629, %v612, %v628
        %vm631 = vcmask 1046534
        %v632 = vsel %vm631, %v616, %v630
        %vm633 = vcmask 1047559
        %v634 = vsel %vm633, %v620, %v632
        %v636 = vsel %vm511, %v634, 0.0
        %637 = vadd.xlane.f32.xlu0 %v636
        %v638 = vpop.xlane.xlu0 %637
        %v639 = vmul.f32 %v422, %v422
        %v640 = vmul.f32 %v422, %v423
        %v641 = vmul.f32 %v422, %v424
        %v642 = vmul.f32 %v422, %v425
        %v643 = vmul.f32 %v422, %v426
        %v644 = vmul.f32 %v422, %v427
        %v645 = vmul.f32 %v422, %v428
        %v646 = vmul.f32 %v422, %v429
        %647 = vadd.xlane.f32.xlu0 %v639
        %v648 = vpop.xlane.xlu0 %647
        %649 = vadd.xlane.f32.xlu0 %v640
        %v650 = vpop.xlane.xlu0 %649
        %651 = vadd.xlane.f32.xlu0 %v641
        %v652 = vpop.xlane.xlu0 %651
        %653 = vadd.xlane.f32.xlu0 %v642
        %v654 = vpop.xlane.xlu0 %653
        %655 = vadd.xlane.f32.xlu0 %v643
        %v656 = vpop.xlane.xlu0 %655
        %657 = vadd.xlane.f32.xlu0 %v644
        %v658 = vpop.xlane.xlu0 %657
        %659 = vadd.xlane.f32.xlu0 %v645
        %v660 = vpop.xlane.xlu0 %659
        %661 = vadd.xlane.f32.xlu0 %v646
        %v662 = vpop.xlane.xlu0 %661
        %v671 = vlaneseq
        %v672 = vshrl.u32 %v671, 7
        %v673 = vsub.s32 %v588, %v672
        %v674 = vrot.slane %v648, %v673
        %v675 = vlaneseq
        %v676 = vshrl.u32 %v675, 7
        %v677 = vsub.s32 %v588, %v676
        %v678 = vrot.slane %v650, %v677
        %v679 = vlaneseq
        %v680 = vshrl.u32 %v679, 7
        %v681 = vsub.s32 %v588, %v680
        %v682 = vrot.slane %v652, %v681
        %v683 = vlaneseq
        %v684 = vshrl.u32 %v683, 7
        %v685 = vsub.s32 %v588, %v684
        %v686 = vrot.slane %v654, %v685
        %v687 = vlaneseq
        %v688 = vshrl.u32 %v687, 7
        %v689 = vsub.s32 %v588, %v688
        %v690 = vrot.slane %v656, %v689
        %v691 = vlaneseq
        %v692 = vshrl.u32 %v691, 7
        %v693 = vsub.s32 %v588, %v692
        %v694 = vrot.slane %v658, %v693
        %v695 = vlaneseq
        %v696 = vshrl.u32 %v695, 7
        %v697 = vsub.s32 %v588, %v696
        %v698 = vrot.slane %v660, %v697
        %v699 = vlaneseq
        %v700 = vshrl.u32 %v699, 7
        %v701 = vsub.s32 %v588, %v700
        %v702 = vrot.slane %v662, %v701
        %v703 = vsel %vm621, %v678, %v674
        %v704 = vsel %vm623, %v682, %v703
        %v705 = vsel %vm625, %v686, %v704
        %v706 = vsel %vm627, %v690, %v705
        %v707 = vsel %vm629, %v694, %v706
        %v708 = vsel %vm631, %v698, %v707
        %v709 = vsel %vm633, %v702, %v708
        %v711 = vsel %vm511, %v709, 0.0
        %712 = vadd.xlane.f32.xlu0 %v711
        %v713 = vpop.xlane.xlu0 %712
        %v714 = vmul.f32 %v638, 0.0009765625
        %v715 = vmul.f32 %v713, 0.0009765625
        %v716 = vmul.f32 %v714, %v715
        %vm717 = vcmask 7168
        %v718 = vsel %vm717, %v716, 0.0
        %719 = vadd.xlane.f32.xlu0 %v718
        %v720 = vpop.xlane.xlu0 %719
        %v721 = vrot.slane %v720, 4
        %v722 = vadd.f32 %v720, %v721
        %v723 = vrot.slane %v722, 2
        %v724 = vadd.f32 %v722, %v723
        %v725 = vrot.slane %v724, 1
        %v726 = vadd.f32 %v724, %v725
        %s727 = vtos %v726
        %v728 = vstv %s727
        %v729 = vadd.f32 %v728, 0.0
        %v730 = vmul.f32 %v714, %v714
        %v731 = vsel %vm717, %v730, 0.0
        %732 = vadd.xlane.f32.xlu0 %v731
        %v733 = vpop.xlane.xlu0 %732
        %v734 = vrot.slane %v733, 4
        %v735 = vadd.f32 %v733, %v734
        %v736 = vrot.slane %v735, 2
        %v737 = vadd.f32 %v735, %v736
        %v738 = vrot.slane %v737, 1
        %v739 = vadd.f32 %v737, %v738
        %s740 = vtos %v739
        %v741 = vstv %s740
        %v742 = vadd.f32 %v741, 0.0
        %v743 = vmul.f32 %v715, %v715
        %v744 = vsel %vm717, %v743, 0.0
        %745 = vadd.xlane.f32.xlu0 %v744
        %v746 = vpop.xlane.xlu0 %745
        %v747 = vrot.slane %v746, 4
        %v748 = vadd.f32 %v746, %v747
        %v749 = vrot.slane %v748, 2
        %v750 = vadd.f32 %v748, %v749
        %v751 = vrot.slane %v750, 1
        %v752 = vadd.f32 %v750, %v751
        %s753 = vtos %v752
        %v754 = vstv %s753
        %v755 = vadd.f32 %v754, 0.0
        %756 = vmatprep.subr.bf16.mxu0 0
        %757 = vmatpush1.bf16.xpose.msra.mxu0 0
        %758 = vmatprep.subr.bf16.mxu0 0
        %759 = vmatpush1.bf16.xpose.msra.mxu0 0
        %760 = vmatprep.subr.bf16.mxu0 0
        %761 = vmatpush1.bf16.xpose.msra.mxu0 0
        %762 = vmatprep.subr.bf16.mxu0 0
        %763 = vmatpush1.bf16.xpose.msra.mxu0 0
        %764 = vmatprep.subr.bf16.mxu0 0
        %765 = vmatpush1.bf16.xpose.msra.mxu0 0
        %766 = vmatprep.subr.bf16.mxu0 0
        %767 = vmatpush1.bf16.xpose.msra.mxu0 0
        %768 = vmatprep.subr.bf16.mxu0 0
        %769 = vmatpush1.bf16.xpose.msra.mxu0 0
        %770 = vmatprep.subr.bf16.mxu0 0
        %771 = vmatpush1.bf16.xpose.msra.mxu0 %v311
        %772 = vmatprep.subr.bf16.mxu0 0
        %773 = vmatpush2.bf16.xpose.msra.mxu0 0
        %774 = vmatprep.subr.bf16.mxu0 0
        %775 = vmatpush2.bf16.xpose.msra.mxu0 0
        %776 = vmatprep.subr.bf16.mxu0 0
        %777 = vmatpush2.bf16.xpose.msra.mxu0 0
        %778 = vmatprep.subr.bf16.mxu0 0
        %779 = vmatpush2.bf16.xpose.msra.mxu0 0
        %780 = vmatprep.subr.bf16.mxu0 0
        %781 = vmatpush2.bf16.xpose.msra.mxu0 0
        %782 = vmatprep.subr.bf16.mxu0 0
        %783 = vmatpush2.bf16.xpose.msra.mxu0 0
        %784 = vmatprep.subr.bf16.mxu0 0
        %785 = vmatpush2.bf16.xpose.msra.mxu0 0
        %786 = vmatprep.subr.bf16.mxu0 0
        %787 = vmatpush2.bf16.xpose.msra.mxu0 0
        %788 = vmatprep.mubr.bf16.mxu0 0
        %789 = vmatmul.mubr.bf16.gmra.mxu0 %v311
        %v790 = vpop.f32.mrf.mxu0
        %v791 = vadd.f32 0.0, %v790
        %v792 = vpop.f32.mrf.mxu0
        %v793 = vpop.f32.mrf.mxu0
        %v794 = vpop.f32.mrf.mxu0
        %795 = vdwg.mxu0
        %796 = vmatprep.subr.bf16.mxu0 0
        %797 = vmatpush1.bf16.xpose.msra.mxu0 0
        %798 = vmatprep.subr.bf16.mxu0 0
        %799 = vmatpush1.bf16.xpose.msra.mxu0 0
        %800 = vmatprep.subr.bf16.mxu0 0
        %801 = vmatpush1.bf16.xpose.msra.mxu0 0
        %802 = vmatprep.subr.bf16.mxu0 0
        %803 = vmatpush1.bf16.xpose.msra.mxu0 0
        %804 = vmatprep.subr.bf16.mxu0 0
        %805 = vmatpush1.bf16.xpose.msra.mxu0 0
        %806 = vmatprep.subr.bf16.mxu0 0
        %807 = vmatpush1.bf16.xpose.msra.mxu0 0
        %808 = vmatprep.subr.bf16.mxu0 0
        %809 = vmatpush1.bf16.xpose.msra.mxu0 0
        %810 = vmatprep.subr.bf16.mxu0 0
        %811 = vmatpush1.bf16.xpose.msra.mxu0 %v407
        %812 = vmatprep.subr.bf16.mxu0 0
        %813 = vmatpush2.bf16.xpose.msra.mxu0 0
        %814 = vmatprep.subr.bf16.mxu0 0
        %815 = vmatpush2.bf16.xpose.msra.mxu0 0
        %816 = vmatprep.subr.bf16.mxu0 0
        %817 = vmatpush2.bf16.xpose.msra.mxu0 0
        %818 = vmatprep.subr.bf16.mxu0 0
        %819 = vmatpush2.bf16.xpose.msra.mxu0 0
        %820 = vmatprep.subr.bf16.mxu0 0
        %821 = vmatpush2.bf16.xpose.msra.mxu0 0
        %822 = vmatprep.subr.bf16.mxu0 0
        %823 = vmatpush2.bf16.xpose.msra.mxu0 0
        %824 = vmatprep.subr.bf16.mxu0 0
        %825 = vmatpush2.bf16.xpose.msra.mxu0 0
        %826 = vmatprep.subr.bf16.mxu0 0
        %827 = vmatpush2.bf16.xpose.msra.mxu0 0
        %828 = vmatprep.mubr.bf16.mxu0 0
        %829 = vmatmul.mubr.bf16.gmra.mxu0 %v407
        %v830 = vpop.f32.mrf.mxu0
        %v831 = vadd.f32 0.0, %v830
        %v832 = vpop.f32.mrf.mxu0
        %v833 = vpop.f32.mrf.mxu0
        %v834 = vpop.f32.mrf.mxu0
        %835 = vdwg.mxu0
        %v836 = vmul.f32 %v791, %v831
        %v837 = vsel %vm511, %v836, 0.0
        %838 = vadd.xlane.f32.xlu0 %v837
        %v839 = vpop.xlane.xlu0 %838
        %v840 = vrot.slane %v839, 4
        %v841 = vadd.f32 %v839, %v840
        %v842 = vrot.slane %v841, 2
        %v843 = vadd.f32 %v841, %v842
        %v844 = vrot.slane %v843, 1
        %v845 = vadd.f32 %v843, %v844
        %s846 = vtos %v845
        %v847 = vstv %s846
        %v848 = vmul.f32 %v791, %v791
        %v849 = vsel %vm511, %v848, 0.0
        %850 = vadd.xlane.f32.xlu0 %v849
        %v851 = vpop.xlane.xlu0 %850
        %v852 = vrot.slane %v851, 4
        %v853 = vadd.f32 %v851, %v852
        %v854 = vrot.slane %v853, 2
        %v855 = vadd.f32 %v853, %v854
        %v856 = vrot.slane %v855, 1
        %v857 = vadd.f32 %v855, %v856
        %s858 = vtos %v857
        %v859 = vstv %s858
        %v860 = vmul.f32 %v831, %v831
        %v861 = vsel %vm511, %v860, 0.0
        %862 = vadd.xlane.f32.xlu0 %v861
        %v863 = vpop.xlane.xlu0 %862
        %v864 = vrot.slane %v863, 4
        %v865 = vadd.f32 %v863, %v864
        %v866 = vrot.slane %v865, 2
        %v867 = vadd.f32 %v865, %v866
        %v868 = vrot.slane %v867, 1
        %v869 = vadd.f32 %v867, %v868
        %s870 = vtos %v869
        %v871 = vstv %s870
        %v872 = vand.u32 2147483647, %v847
        %v873 = vadd.f32 %v859, 1e-30
        %v874 = vrsqrt.pop %v873
        %v875 = vmul.f32 %v872, %v874
        %v876 = vadd.f32 %v871, 1e-30
        %v877 = vrsqrt.pop %v876
        %v878 = vmul.f32 %v875, %v877
        %v879 = vadd.f32 %v554, %v878
        %v880 = vmul.f32 %v327, %v327
        %v881 = vmul.f32 %v327, %v328
        %v882 = vmul.f32 %v327, %v329
        %v883 = vmul.f32 %v327, %v330
        %v884 = vmul.f32 %v327, %v331
        %v885 = vmul.f32 %v327, %v332
        %v886 = vmul.f32 %v327, %v333
        %887 = vadd.xlane.f32.xlu0 %v880
        %v888 = vpop.xlane.xlu0 %887
        %889 = vadd.xlane.f32.xlu0 %v881
        %v890 = vpop.xlane.xlu0 %889
        %891 = vadd.xlane.f32.xlu0 %v882
        %v892 = vpop.xlane.xlu0 %891
        %893 = vadd.xlane.f32.xlu0 %v883
        %v894 = vpop.xlane.xlu0 %893
        %895 = vadd.xlane.f32.xlu0 %v884
        %v896 = vpop.xlane.xlu0 %895
        %897 = vadd.xlane.f32.xlu0 %v885
        %v898 = vpop.xlane.xlu0 %897
        %899 = vadd.xlane.f32.xlu0 %v886
        %v900 = vpop.xlane.xlu0 %899
        %v908 = vlaneseq
        %v909 = vshrl.u32 %v908, 7
        %v910 = vsub.s32 %v588, %v909
        %v911 = vrot.slane %v888, %v910
        %v912 = vlaneseq
        %v913 = vshrl.u32 %v912, 7
        %v914 = vsub.s32 %v588, %v913
        %v915 = vrot.slane %v890, %v914
        %v916 = vlaneseq
        %v917 = vshrl.u32 %v916, 7
        %v918 = vsub.s32 %v588, %v917
        %v919 = vrot.slane %v892, %v918
        %v920 = vlaneseq
        %v921 = vshrl.u32 %v920, 7
        %v922 = vsub.s32 %v588, %v921
        %v923 = vrot.slane %v894, %v922
        %v924 = vlaneseq
        %v925 = vshrl.u32 %v924, 7
        %v926 = vsub.s32 %v588, %v925
        %v927 = vrot.slane %v896, %v926
        %v928 = vlaneseq
        %v929 = vshrl.u32 %v928, 7
        %v930 = vsub.s32 %v588, %v929
        %v931 = vrot.slane %v898, %v930
        %v932 = vlaneseq
        %v933 = vshrl.u32 %v932, 7
        %v934 = vsub.s32 %v588, %v933
        %v935 = vrot.slane %v900, %v934
        %v936 = vsel %vm621, %v911, %v596
        %v937 = vsel %vm623, %v915, %v936
        %v938 = vsel %vm625, %v919, %v937
        %v939 = vsel %vm627, %v923, %v938
        %v940 = vsel %vm629, %v927, %v939
        %v941 = vsel %vm631, %v931, %v940
        %v942 = vsel %vm633, %v935, %v941
        %v944 = vsel %vm511, %v942, 0.0
        %945 = vadd.xlane.f32.xlu0 %v944
        %v946 = vpop.xlane.xlu0 %945
        %v947 = vmul.f32 %v423, %v423
        %v948 = vmul.f32 %v423, %v424
        %v949 = vmul.f32 %v423, %v425
        %v950 = vmul.f32 %v423, %v426
        %v951 = vmul.f32 %v423, %v427
        %v952 = vmul.f32 %v423, %v428
        %v953 = vmul.f32 %v423, %v429
        %954 = vadd.xlane.f32.xlu0 %v947
        %v955 = vpop.xlane.xlu0 %954
        %956 = vadd.xlane.f32.xlu0 %v948
        %v957 = vpop.xlane.xlu0 %956
        %958 = vadd.xlane.f32.xlu0 %v949
        %v959 = vpop.xlane.xlu0 %958
        %960 = vadd.xlane.f32.xlu0 %v950
        %v961 = vpop.xlane.xlu0 %960
        %962 = vadd.xlane.f32.xlu0 %v951
        %v963 = vpop.xlane.xlu0 %962
        %964 = vadd.xlane.f32.xlu0 %v952
        %v965 = vpop.xlane.xlu0 %964
        %966 = vadd.xlane.f32.xlu0 %v953
        %v967 = vpop.xlane.xlu0 %966
        %v975 = vlaneseq
        %v976 = vshrl.u32 %v975, 7
        %v977 = vsub.s32 %v588, %v976
        %v978 = vrot.slane %v955, %v977
        %v979 = vlaneseq
        %v980 = vshrl.u32 %v979, 7
        %v981 = vsub.s32 %v588, %v980
        %v982 = vrot.slane %v957, %v981
        %v983 = vlaneseq
        %v984 = vshrl.u32 %v983, 7
        %v985 = vsub.s32 %v588, %v984
        %v986 = vrot.slane %v959, %v985
        %v987 = vlaneseq
        %v988 = vshrl.u32 %v987, 7
        %v989 = vsub.s32 %v588, %v988
        %v990 = vrot.slane %v961, %v989
        %v991 = vlaneseq
        %v992 = vshrl.u32 %v991, 7
        %v993 = vsub.s32 %v588, %v992
        %v994 = vrot.slane %v963, %v993
        %v995 = vlaneseq
        %v996 = vshrl.u32 %v995, 7
        %v997 = vsub.s32 %v588, %v996
        %v998 = vrot.slane %v965, %v997
        %v999 = vlaneseq
        %v1000 = vshrl.u32 %v999, 7
        %v1001 = vsub.s32 %v588, %v1000
        %v1002 = vrot.slane %v967, %v1001
        %v1003 = vsel %vm621, %v978, %v678
        %v1004 = vsel %vm623, %v982, %v1003
        %v1005 = vsel %vm625, %v986, %v1004
        %v1006 = vsel %vm627, %v990, %v1005
        %v1007 = vsel %vm629, %v994, %v1006
        %v1008 = vsel %vm631, %v998, %v1007
        %v1009 = vsel %vm633, %v1002, %v1008
        %v1011 = vsel %vm511, %v1009, 0.0
        %1012 = vadd.xlane.f32.xlu0 %v1011
        %v1013 = vpop.xlane.xlu0 %1012
        %v1014 = vmul.f32 %v946, 0.0009765625
        %v1015 = vmul.f32 %v1013, 0.0009765625
        %v1016 = vmul.f32 %v1014, %v1015
        %v1017 = vsel %vm717, %v1016, 0.0
        %1018 = vadd.xlane.f32.xlu0 %v1017
        %v1019 = vpop.xlane.xlu0 %1018
        %v1020 = vrot.slane %v1019, 4
        %v1021 = vadd.f32 %v1019, %v1020
        %v1022 = vrot.slane %v1021, 2
        %v1023 = vadd.f32 %v1021, %v1022
        %v1024 = vrot.slane %v1023, 1
        %v1025 = vadd.f32 %v1023, %v1024
        %s1026 = vtos %v1025
        %v1027 = vstv %s1026
        %v1028 = vadd.f32 %v729, %v1027
        %v1029 = vmul.f32 %v1014, %v1014
        %v1030 = vsel %vm717, %v1029, 0.0
        %1031 = vadd.xlane.f32.xlu0 %v1030
        %v1032 = vpop.xlane.xlu0 %1031
        %v1033 = vrot.slane %v1032, 4
        %v1034 = vadd.f32 %v1032, %v1033
        %v1035 = vrot.slane %v1034, 2
        %v1036 = vadd.f32 %v1034, %v1035
        %v1037 = vrot.slane %v1036, 1
        %v1038 = vadd.f32 %v1036, %v1037
        %s1039 = vtos %v1038
        %v1040 = vstv %s1039
        %v1041 = vadd.f32 %v742, %v1040
        %v1042 = vmul.f32 %v1015, %v1015
        %v1043 = vsel %vm717, %v1042, 0.0
        %1044 = vadd.xlane.f32.xlu0 %v1043
        %v1045 = vpop.xlane.xlu0 %1044
        %v1046 = vrot.slane %v1045, 4
        %v1047 = vadd.f32 %v1045, %v1046
        %v1048 = vrot.slane %v1047, 2
        %v1049 = vadd.f32 %v1047, %v1048
        %v1050 = vrot.slane %v1049, 1
        %v1051 = vadd.f32 %v1049, %v1050
        %s1052 = vtos %v1051
        %v1053 = vstv %s1052
        %v1054 = vadd.f32 %v755, %v1053
        %1055 = vmatprep.subr.bf16.mxu0 0
        %1056 = vmatpush1.bf16.xpose.msra.mxu0 0
        %1057 = vmatprep.subr.bf16.mxu0 0
        %1058 = vmatpush1.bf16.xpose.msra.mxu0 0
        %1059 = vmatprep.subr.bf16.mxu0 0
        %1060 = vmatpush1.bf16.xpose.msra.mxu0 0
        %1061 = vmatprep.subr.bf16.mxu0 0
        %1062 = vmatpush1.bf16.xpose.msra.mxu0 0
        %1063 = vmatprep.subr.bf16.mxu0 0
        %1064 = vmatpush1.bf16.xpose.msra.mxu0 0
        %1065 = vmatprep.subr.bf16.mxu0 0
        %1066 = vmatpush1.bf16.xpose.msra.mxu0 0
        %1067 = vmatprep.subr.bf16.mxu0 0
        %1068 = vmatpush1.bf16.xpose.msra.mxu0 0
        %1069 = vmatprep.subr.bf16.mxu0 0
        %1070 = vmatpush1.bf16.xpose.msra.mxu0 %v312
        %1071 = vmatprep.subr.bf16.mxu0 0
        %1072 = vmatpush2.bf16.xpose.msra.mxu0 0
        %1073 = vmatprep.subr.bf16.mxu0 0
        %1074 = vmatpush2.bf16.xpose.msra.mxu0 0
        %1075 = vmatprep.subr.bf16.mxu0 0
        %1076 = vmatpush2.bf16.xpose.msra.mxu0 0
        %1077 = vmatprep.subr.bf16.mxu0 0
        %1078 = vmatpush2.bf16.xpose.msra.mxu0 0
        %1079 = vmatprep.subr.bf16.mxu0 0
        %1080 = vmatpush2.bf16.xpose.msra.mxu0 0
        %1081 = vmatprep.subr.bf16.mxu0 0
        %1082 = vmatpush2.bf16.xpose.msra.mxu0 0
        %1083 = vmatprep.subr.bf16.mxu0 0
        %1084 = vmatpush2.bf16.xpose.msra.mxu0 0
        %1085 = vmatprep.subr.bf16.mxu0 0
        %1086 = vmatpush2.bf16.xpose.msra.mxu0 0
        %1087 = vmatprep.mubr.bf16.mxu0 0
        %1088 = vmatmul.mubr.bf16.gmra.mxu0 %v312
        %v1089 = vpop.f32.mrf.mxu0
        %v1090 = vadd.f32 0.0, %v1089
        %v1091 = vpop.f32.mrf.mxu0
        %v1092 = vpop.f32.mrf.mxu0
        %v1093 = vpop.f32.mrf.mxu0
        %1094 = vdwg.mxu0
        %1095 = vmatprep.subr.bf16.mxu0 0
        %1096 = vmatpush1.bf16.xpose.msra.mxu0 0
        %1097 = vmatprep.subr.bf16.mxu0 0
        %1098 = vmatpush1.bf16.xpose.msra.mxu0 0
        %1099 = vmatprep.subr.bf16.mxu0 0
        %1100 = vmatpush1.bf16.xpose.msra.mxu0 0
        %1101 = vmatprep.subr.bf16.mxu0 0
        %1102 = vmatpush1.bf16.xpose.msra.mxu0 0
        %1103 = vmatprep.subr.bf16.mxu0 0
        %1104 = vmatpush1.bf16.xpose.msra.mxu0 0
        %1105 = vmatprep.subr.bf16.mxu0 0
        %1106 = vmatpush1.bf16.xpose.msra.mxu0 0
        %1107 = vmatprep.subr.bf16.mxu0 0
        %1108 = vmatpush1.bf16.xpose.msra.mxu0 0
        %1109 = vmatprep.subr.bf16.mxu0 0
        %1110 = vmatpush1.bf16.xpose.msra.mxu0 %v408
        %1111 = vmatprep.subr.bf16.mxu0 0
        %1112 = vmatpush2.bf16.xpose.msra.mxu0 0
        %1113 = vmatprep.subr.bf16.mxu0 0
        %1114 = vmatpush2.bf16.xpose.msra.mxu0 0
        %1115 = vmatprep.subr.bf16.mxu0 0
        %1116 = vmatpush2.bf16.xpose.msra.mxu0 0
        %1117 = vmatprep.subr.bf16.mxu0 0
        %1118 = vmatpush2.bf16.xpose.msra.mxu0 0
        %1119 = vmatprep.subr.bf16.mxu0 0
        %1120 = vmatpush2.bf16.xpose.msra.mxu0 0
        %1121 = vmatprep.subr.bf16.mxu0 0
        %1122 = vmatpush2.bf16.xpose.msra.mxu0 0
        %1123 = vmatprep.subr.bf16.mxu0 0
        %1124 = vmatpush2.bf16.xpose.msra.mxu0 0
        %1125 = vmatprep.subr.bf16.mxu0 0
        %1126 = vmatpush2.bf16.xpose.msra.mxu0 0
        %1127 = vmatprep.mubr.bf16.mxu0 0
        %1128 = vmatmul.mubr.bf16.gmra.mxu0 %v408
        %v1129 = vpop.f32.mrf.mxu0
        %v1130 = vadd.f32 0.0, %v1129
        %v1131 = vpop.f32.mrf.mxu0
        %v1132 = vpop.f32.mrf.mxu0
        %v1133 = vpop.f32.mrf.mxu0
        %1134 = vdwg.mxu0
        %v1135 = vmul.f32 %v1090, %v1130
        %v1136 = vsel %vm511, %v1135, 0.0
        %1137 = vadd.xlane.f32.xlu0 %v1136
        %v1138 = vpop.xlane.xlu0 %1137
        %v1139 = vrot.slane %v1138, 4
        %v1140 = vadd.f32 %v1138, %v1139
        %v1141 = vrot.slane %v1140, 2
        %v1142 = vadd.f32 %v1140, %v1141
        %v1143 = vrot.slane %v1142, 1
        %v1144 = vadd.f32 %v1142, %v1143
        %s1145 = vtos %v1144
        %v1146 = vstv %s1145
        %v1147 = vmul.f32 %v1090, %v1090
        %v1148 = vsel %vm511, %v1147, 0.0
        %1149 = vadd.xlane.f32.xlu0 %v1148
        %v1150 = vpop.xlane.xlu0 %1149
        %v1151 = vrot.slane %v1150, 4
        %v1152 = vadd.f32 %v1150, %v1151
        %v1153 = vrot.slane %v1152, 2
        %v1154 = vadd.f32 %v1152, %v1153
        %v1155 = vrot.slane %v1154, 1
        %v1156 = vadd.f32 %v1154, %v1155
        %s1157 = vtos %v1156
        %v1158 = vstv %s1157
        %v1159 = vmul.f32 %v1130, %v1130
        %v1160 = vsel %vm511, %v1159, 0.0
        %1161 = vadd.xlane.f32.xlu0 %v1160
        %v1162 = vpop.xlane.xlu0 %1161
        %v1163 = vrot.slane %v1162, 4
        %v1164 = vadd.f32 %v1162, %v1163
        %v1165 = vrot.slane %v1164, 2
        %v1166 = vadd.f32 %v1164, %v1165
        %v1167 = vrot.slane %v1166, 1
        %v1168 = vadd.f32 %v1166, %v1167
        %s1169 = vtos %v1168
        %v1170 = vstv %s1169
        %v1171 = vand.u32 2147483647, %v1146
        %v1172 = vadd.f32 %v1158, 1e-30
        %v1173 = vrsqrt.pop %v1172
        %v1174 = vmul.f32 %v1171, %v1173
        %v1175 = vadd.f32 %v1170, 1e-30
        %v1176 = vrsqrt.pop %v1175
        %v1177 = vmul.f32 %v1174, %v1176
        %v1178 = vadd.f32 %v879, %v1177
        %v1179 = vmul.f32 %v328, %v328
        %v1180 = vmul.f32 %v328, %v329
        %v1181 = vmul.f32 %v328, %v330
        %v1182 = vmul.f32 %v328, %v331
        %v1183 = vmul.f32 %v328, %v332
        %v1184 = vmul.f32 %v328, %v333
        %1185 = vadd.xlane.f32.xlu0 %v1179
        %v1186 = vpop.xlane.xlu0 %1185
        %1187 = vadd.xlane.f32.xlu0 %v1180
        %v1188 = vpop.xlane.xlu0 %1187
        %1189 = vadd.xlane.f32.xlu0 %v1181
        %v1190 = vpop.xlane.xlu0 %1189
        %1191 = vadd.xlane.f32.xlu0 %v1182
        %v1192 = vpop.xlane.xlu0 %1191
        %1193 = vadd.xlane.f32.xlu0 %v1183
        %v1194 = vpop.xlane.xlu0 %1193
        %1195 = vadd.xlane.f32.xlu0 %v1184
        %v1196 = vpop.xlane.xlu0 %1195
        %v1203 = vlaneseq
        %v1204 = vshrl.u32 %v1203, 7
        %v1205 = vsub.s32 %v588, %v1204
        %v1206 = vrot.slane %v1186, %v1205
        %v1207 = vlaneseq
        %v1208 = vshrl.u32 %v1207, 7
        %v1209 = vsub.s32 %v588, %v1208
        %v1210 = vrot.slane %v1188, %v1209
        %v1211 = vlaneseq
        %v1212 = vshrl.u32 %v1211, 7
        %v1213 = vsub.s32 %v588, %v1212
        %v1214 = vrot.slane %v1190, %v1213
        %v1215 = vlaneseq
        %v1216 = vshrl.u32 %v1215, 7
        %v1217 = vsub.s32 %v588, %v1216
        %v1218 = vrot.slane %v1192, %v1217
        %v1219 = vlaneseq
        %v1220 = vshrl.u32 %v1219, 7
        %v1221 = vsub.s32 %v588, %v1220
        %v1222 = vrot.slane %v1194, %v1221
        %v1223 = vlaneseq
        %v1224 = vshrl.u32 %v1223, 7
        %v1225 = vsub.s32 %v588, %v1224
        %v1226 = vrot.slane %v1196, %v1225
        %v1227 = vsel %vm621, %v915, %v600
        %v1228 = vsel %vm623, %v1206, %v1227
        %v1229 = vsel %vm625, %v1210, %v1228
        %v1230 = vsel %vm627, %v1214, %v1229
        %v1231 = vsel %vm629, %v1218, %v1230
        %v1232 = vsel %vm631, %v1222, %v1231
        %v1233 = vsel %vm633, %v1226, %v1232
        %v1235 = vsel %vm511, %v1233, 0.0
        %1236 = vadd.xlane.f32.xlu0 %v1235
        %v1237 = vpop.xlane.xlu0 %1236
        %v1238 = vmul.f32 %v424, %v424
        %v1239 = vmul.f32 %v424, %v425
        %v1240 = vmul.f32 %v424, %v426
        %v1241 = vmul.f32 %v424, %v427
        %v1242 = vmul.f32 %v424, %v428
        %v1243 = vmul.f32 %v424, %v429
        %1244 = vadd.xlane.f32.xlu0 %v1238
        %v1245 = vpop.xlane.xlu0 %1244
        %1246 = vadd.xlane.f32.xlu0 %v1239
        %v1247 = vpop.xlane.xlu0 %1246
        %1248 = vadd.xlane.f32.xlu0 %v1240
        %v1249 = vpop.xlane.xlu0 %1248
        %1250 = vadd.xlane.f32.xlu0 %v1241
        %v1251 = vpop.xlane.xlu0 %1250
        %1252 = vadd.xlane.f32.xlu0 %v1242
        %v1253 = vpop.xlane.xlu0 %1252
        %1254 = vadd.xlane.f32.xlu0 %v1243
        %v1255 = vpop.xlane.xlu0 %1254
        %v1262 = vlaneseq
        %v1263 = vshrl.u32 %v1262, 7
        %v1264 = vsub.s32 %v588, %v1263
        %v1265 = vrot.slane %v1245, %v1264
        %v1266 = vlaneseq
        %v1267 = vshrl.u32 %v1266, 7
        %v1268 = vsub.s32 %v588, %v1267
        %v1269 = vrot.slane %v1247, %v1268
        %v1270 = vlaneseq
        %v1271 = vshrl.u32 %v1270, 7
        %v1272 = vsub.s32 %v588, %v1271
        %v1273 = vrot.slane %v1249, %v1272
        %v1274 = vlaneseq
        %v1275 = vshrl.u32 %v1274, 7
        %v1276 = vsub.s32 %v588, %v1275
        %v1277 = vrot.slane %v1251, %v1276
        %v1278 = vlaneseq
        %v1279 = vshrl.u32 %v1278, 7
        %v1280 = vsub.s32 %v588, %v1279
        %v1281 = vrot.slane %v1253, %v1280
        %v1282 = vlaneseq
        %v1283 = vshrl.u32 %v1282, 7
        %v1284 = vsub.s32 %v588, %v1283
        %v1285 = vrot.slane %v1255, %v1284
        %v1286 = vsel %vm621, %v982, %v682
        %v1287 = vsel %vm623, %v1265, %v1286
        %v1288 = vsel %vm625, %v1269, %v1287
        %v1289 = vsel %vm627, %v1273, %v1288
        %v1290 = vsel %vm629, %v1277, %v1289
        %v1291 = vsel %vm631, %v1281, %v1290
        %v1292 = vsel %vm633, %v1285, %v1291
        %v1294 = vsel %vm511, %v1292, 0.0
        %1295 = vadd.xlane.f32.xlu0 %v1294
        %v1296 = vpop.xlane.xlu0 %1295
        %v1297 = vmul.f32 %v1237, 0.0009765625
        %v1298 = vmul.f32 %v1296, 0.0009765625
        %v1299 = vmul.f32 %v1297, %v1298
        %v1300 = vsel %vm717, %v1299, 0.0
        %1301 = vadd.xlane.f32.xlu0 %v1300
        %v1302 = vpop.xlane.xlu0 %1301
        %v1303 = vrot.slane %v1302, 4
        %v1304 = vadd.f32 %v1302, %v1303
        %v1305 = vrot.slane %v1304, 2
        %v1306 = vadd.f32 %v1304, %v1305
        %v1307 = vrot.slane %v1306, 1
        %v1308 = vadd.f32 %v1306, %v1307
        %s1309 = vtos %v1308
        %v1310 = vstv %s1309
        %v1311 = vadd.f32 %v1028, %v1310
        %v1312 = vmul.f32 %v1297, %v1297
        %v1313 = vsel %vm717, %v1312, 0.0
        %1314 = vadd.xlane.f32.xlu0 %v1313
        %v1315 = vpop.xlane.xlu0 %1314
        %v1316 = vrot.slane %v1315, 4
        %v1317 = vadd.f32 %v1315, %v1316
        %v1318 = vrot.slane %v1317, 2
        %v1319 = vadd.f32 %v1317, %v1318
        %v1320 = vrot.slane %v1319, 1
        %v1321 = vadd.f32 %v1319, %v1320
        %s1322 = vtos %v1321
        %v1323 = vstv %s1322
        %v1324 = vadd.f32 %v1041, %v1323
        %v1325 = vmul.f32 %v1298, %v1298
        %v1326 = vsel %vm717, %v1325, 0.0
        %1327 = vadd.xlane.f32.xlu0 %v1326
        %v1328 = vpop.xlane.xlu0 %1327
        %v1329 = vrot.slane %v1328, 4
        %v1330 = vadd.f32 %v1328, %v1329
        %v1331 = vrot.slane %v1330, 2
        %v1332 = vadd.f32 %v1330, %v1331
        %v1333 = vrot.slane %v1332, 1
        %v1334 = vadd.f32 %v1332, %v1333
        %s1335 = vtos %v1334
        %v1336 = vstv %s1335
        %v1337 = vadd.f32 %v1054, %v1336
        %1338 = vmatprep.subr.bf16.mxu0 0
        %1339 = vmatpush1.bf16.xpose.msra.mxu0 0
        %1340 = vmatprep.subr.bf16.mxu0 0
        %1341 = vmatpush1.bf16.xpose.msra.mxu0 0
        %1342 = vmatprep.subr.bf16.mxu0 0
        %1343 = vmatpush1.bf16.xpose.msra.mxu0 0
        %1344 = vmatprep.subr.bf16.mxu0 0
        %1345 = vmatpush1.bf16.xpose.msra.mxu0 0
        %1346 = vmatprep.subr.bf16.mxu0 0
        %1347 = vmatpush1.bf16.xpose.msra.mxu0 0
        %1348 = vmatprep.subr.bf16.mxu0 0
        %1349 = vmatpush1.bf16.xpose.msra.mxu0 0
        %1350 = vmatprep.subr.bf16.mxu0 0
        %1351 = vmatpush1.bf16.xpose.msra.mxu0 0
        %1352 = vmatprep.subr.bf16.mxu0 0
        %1353 = vmatpush1.bf16.xpose.msra.mxu0 %v313
        %1354 = vmatprep.subr.bf16.mxu0 0
        %1355 = vmatpush2.bf16.xpose.msra.mxu0 0
        %1356 = vmatprep.subr.bf16.mxu0 0
        %1357 = vmatpush2.bf16.xpose.msra.mxu0 0
        %1358 = vmatprep.subr.bf16.mxu0 0
        %1359 = vmatpush2.bf16.xpose.msra.mxu0 0
        %1360 = vmatprep.subr.bf16.mxu0 0
        %1361 = vmatpush2.bf16.xpose.msra.mxu0 0
        %1362 = vmatprep.subr.bf16.mxu0 0
        %1363 = vmatpush2.bf16.xpose.msra.mxu0 0
        %1364 = vmatprep.subr.bf16.mxu0 0
        %1365 = vmatpush2.bf16.xpose.msra.mxu0 0
        %1366 = vmatprep.subr.bf16.mxu0 0
        %1367 = vmatpush2.bf16.xpose.msra.mxu0 0
        %1368 = vmatprep.subr.bf16.mxu0 0
        %1369 = vmatpush2.bf16.xpose.msra.mxu0 0
        %1370 = vmatprep.mubr.bf16.mxu0 0
        %1371 = vmatmul.mubr.bf16.gmra.mxu0 %v313
        %v1372 = vpop.f32.mrf.mxu0
        %v1373 = vadd.f32 0.0, %v1372
        %v1374 = vpop.f32.mrf.mxu0
        %v1375 = vpop.f32.mrf.mxu0
        %v1376 = vpop.f32.mrf.mxu0
        %1377 = vdwg.mxu0
        %1378 = vmatprep.subr.bf16.mxu0 0
        %1379 = vmatpush1.bf16.xpose.msra.mxu0 0
        %1380 = vmatprep.subr.bf16.mxu0 0
        %1381 = vmatpush1.bf16.xpose.msra.mxu0 0
        %1382 = vmatprep.subr.bf16.mxu0 0
        %1383 = vmatpush1.bf16.xpose.msra.mxu0 0
        %1384 = vmatprep.subr.bf16.mxu0 0
        %1385 = vmatpush1.bf16.xpose.msra.mxu0 0
        %1386 = vmatprep.subr.bf16.mxu0 0
        %1387 = vmatpush1.bf16.xpose.msra.mxu0 0
        %1388 = vmatprep.subr.bf16.mxu0 0
        %1389 = vmatpush1.bf16.xpose.msra.mxu0 0
        %1390 = vmatprep.subr.bf16.mxu0 0
        %1391 = vmatpush1.bf16.xpose.msra.mxu0 0
        %1392 = vmatprep.subr.bf16.mxu0 0
        %1393 = vmatpush1.bf16.xpose.msra.mxu0 %v409
        %1394 = vmatprep.subr.bf16.mxu0 0
        %1395 = vmatpush2.bf16.xpose.msra.mxu0 0
        %1396 = vmatprep.subr.bf16.mxu0 0
        %1397 = vmatpush2.bf16.xpose.msra.mxu0 0
        %1398 = vmatprep.subr.bf16.mxu0 0
        %1399 = vmatpush2.bf16.xpose.msra.mxu0 0
        %1400 = vmatprep.subr.bf16.mxu0 0
        %1401 = vmatpush2.bf16.xpose.msra.mxu0 0
        %1402 = vmatprep.subr.bf16.mxu0 0
        %1403 = vmatpush2.bf16.xpose.msra.mxu0 0
        %1404 = vmatprep.subr.bf16.mxu0 0
        %1405 = vmatpush2.bf16.xpose.msra.mxu0 0
        %1406 = vmatprep.subr.bf16.mxu0 0
        %1407 = vmatpush2.bf16.xpose.msra.mxu0 0
        %1408 = vmatprep.subr.bf16.mxu0 0
        %1409 = vmatpush2.bf16.xpose.msra.mxu0 0
        %1410 = vmatprep.mubr.bf16.mxu0 0
        %1411 = vmatmul.mubr.bf16.gmra.mxu0 %v409
        %v1412 = vpop.f32.mrf.mxu0
        %v1413 = vadd.f32 0.0, %v1412
        %v1414 = vpop.f32.mrf.mxu0
        %v1415 = vpop.f32.mrf.mxu0
        %v1416 = vpop.f32.mrf.mxu0
        %1417 = vdwg.mxu0
        %v1418 = vmul.f32 %v1373, %v1413
        %v1419 = vsel %vm511, %v1418, 0.0
        %1420 = vadd.xlane.f32.xlu0 %v1419
        %v1421 = vpop.xlane.xlu0 %1420
        %v1422 = vrot.slane %v1421, 4
        %v1423 = vadd.f32 %v1421, %v1422
        %v1424 = vrot.slane %v1423, 2
        %v1425 = vadd.f32 %v1423, %v1424
        %v1426 = vrot.slane %v1425, 1
        %v1427 = vadd.f32 %v1425, %v1426
        %s1428 = vtos %v1427
        %v1429 = vstv %s1428
        %v1430 = vmul.f32 %v1373, %v1373
        %v1431 = vsel %vm511, %v1430, 0.0
        %1432 = vadd.xlane.f32.xlu0 %v1431
        %v1433 = vpop.xlane.xlu0 %1432
        %v1434 = vrot.slane %v1433, 4
        %v1435 = vadd.f32 %v1433, %v1434
        %v1436 = vrot.slane %v1435, 2
        %v1437 = vadd.f32 %v1435, %v1436
        %v1438 = vrot.slane %v1437, 1
        %v1439 = vadd.f32 %v1437, %v1438
        %s1440 = vtos %v1439
        %v1441 = vstv %s1440
        %v1442 = vmul.f32 %v1413, %v1413
        %v1443 = vsel %vm511, %v1442, 0.0
        %1444 = vadd.xlane.f32.xlu0 %v1443
        %v1445 = vpop.xlane.xlu0 %1444
        %v1446 = vrot.slane %v1445, 4
        %v1447 = vadd.f32 %v1445, %v1446
        %v1448 = vrot.slane %v1447, 2
        %v1449 = vadd.f32 %v1447, %v1448
        %v1450 = vrot.slane %v1449, 1
        %v1451 = vadd.f32 %v1449, %v1450
        %s1452 = vtos %v1451
        %v1453 = vstv %s1452
        %v1454 = vand.u32 2147483647, %v1429
        %v1455 = vadd.f32 %v1441, 1e-30
        %v1456 = vrsqrt.pop %v1455
        %v1457 = vmul.f32 %v1454, %v1456
        %v1458 = vadd.f32 %v1453, 1e-30
        %v1459 = vrsqrt.pop %v1458
        %v1460 = vmul.f32 %v1457, %v1459
        %v1461 = vadd.f32 %v1178, %v1460
        %v1462 = vmul.f32 %v329, %v329
        %v1463 = vmul.f32 %v329, %v330
        %v1464 = vmul.f32 %v329, %v331
        %v1465 = vmul.f32 %v329, %v332
        %v1466 = vmul.f32 %v329, %v333
        %1467 = vadd.xlane.f32.xlu0 %v1462
        %v1468 = vpop.xlane.xlu0 %1467
        %1469 = vadd.xlane.f32.xlu0 %v1463
        %v1470 = vpop.xlane.xlu0 %1469
        %1471 = vadd.xlane.f32.xlu0 %v1464
        %v1472 = vpop.xlane.xlu0 %1471
        %1473 = vadd.xlane.f32.xlu0 %v1465
        %v1474 = vpop.xlane.xlu0 %1473
        %1475 = vadd.xlane.f32.xlu0 %v1466
        %v1476 = vpop.xlane.xlu0 %1475
        %v1482 = vlaneseq
        %v1483 = vshrl.u32 %v1482, 7
        %v1484 = vsub.s32 %v588, %v1483
        %v1485 = vrot.slane %v1468, %v1484
        %v1486 = vlaneseq
        %v1487 = vshrl.u32 %v1486, 7
        %v1488 = vsub.s32 %v588, %v1487
        %v1489 = vrot.slane %v1470, %v1488
        %v1490 = vlaneseq
        %v1491 = vshrl.u32 %v1490, 7
        %v1492 = vsub.s32 %v588, %v1491
        %v1493 = vrot.slane %v1472, %v1492
        %v1494 = vlaneseq
        %v1495 = vshrl.u32 %v1494, 7
        %v1496 = vsub.s32 %v588, %v1495
        %v1497 = vrot.slane %v1474, %v1496
        %v1498 = vlaneseq
        %v1499 = vshrl.u32 %v1498, 7
        %v1500 = vsub.s32 %v588, %v1499
        %v1501 = vrot.slane %v1476, %v1500
        %v1502 = vsel %vm621, %v919, %v604
        %v1503 = vsel %vm623, %v1210, %v1502
        %v1504 = vsel %vm625, %v1485, %v1503
        %v1505 = vsel %vm627, %v1489, %v1504
        %v1506 = vsel %vm629, %v1493, %v1505
        %v1507 = vsel %vm631, %v1497, %v1506
        %v1508 = vsel %vm633, %v1501, %v1507
        %v1510 = vsel %vm511, %v1508, 0.0
        %1511 = vadd.xlane.f32.xlu0 %v1510
        %v1512 = vpop.xlane.xlu0 %1511
        %v1513 = vmul.f32 %v425, %v425
        %v1514 = vmul.f32 %v425, %v426
        %v1515 = vmul.f32 %v425, %v427
        %v1516 = vmul.f32 %v425, %v428
        %v1517 = vmul.f32 %v425, %v429
        %1518 = vadd.xlane.f32.xlu0 %v1513
        %v1519 = vpop.xlane.xlu0 %1518
        %1520 = vadd.xlane.f32.xlu0 %v1514
        %v1521 = vpop.xlane.xlu0 %1520
        %1522 = vadd.xlane.f32.xlu0 %v1515
        %v1523 = vpop.xlane.xlu0 %1522
        %1524 = vadd.xlane.f32.xlu0 %v1516
        %v1525 = vpop.xlane.xlu0 %1524
        %1526 = vadd.xlane.f32.xlu0 %v1517
        %v1527 = vpop.xlane.xlu0 %1526
        %v1533 = vlaneseq
        %v1534 = vshrl.u32 %v1533, 7
        %v1535 = vsub.s32 %v588, %v1534
        %v1536 = vrot.slane %v1519, %v1535
        %v1537 = vlaneseq
        %v1538 = vshrl.u32 %v1537, 7
        %v1539 = vsub.s32 %v588, %v1538
        %v1540 = vrot.slane %v1521, %v1539
        %v1541 = vlaneseq
        %v1542 = vshrl.u32 %v1541, 7
        %v1543 = vsub.s32 %v588, %v1542
        %v1544 = vrot.slane %v1523, %v1543
        %v1545 = vlaneseq
        %v1546 = vshrl.u32 %v1545, 7
        %v1547 = vsub.s32 %v588, %v1546
        %v1548 = vrot.slane %v1525, %v1547
        %v1549 = vlaneseq
        %v1550 = vshrl.u32 %v1549, 7
        %v1551 = vsub.s32 %v588, %v1550
        %v1552 = vrot.slane %v1527, %v1551
        %v1553 = vsel %vm621, %v986, %v686
        %v1554 = vsel %vm623, %v1269, %v1553
        %v1555 = vsel %vm625, %v1536, %v1554
        %v1556 = vsel %vm627, %v1540, %v1555
        %v1557 = vsel %vm629, %v1544, %v1556
        %v1558 = vsel %vm631, %v1548, %v1557
        %v1559 = vsel %vm633, %v1552, %v1558
        %v1561 = vsel %vm511, %v1559, 0.0
        %1562 = vadd.xlane.f32.xlu0 %v1561
        %v1563 = vpop.xlane.xlu0 %1562
        %v1564 = vmul.f32 %v1512, 0.0009765625
        %v1565 = vmul.f32 %v1563, 0.0009765625
        %v1566 = vmul.f32 %v1564, %v1565
        %v1567 = vsel %vm717, %v1566, 0.0
        %1568 = vadd.xlane.f32.xlu0 %v1567
        %v1569 = vpop.xlane.xlu0 %1568
        %v1570 = vrot.slane %v1569, 4
        %v1571 = vadd.f32 %v1569, %v1570
        %v1572 = vrot.slane %v1571, 2
        %v1573 = vadd.f32 %v1571, %v1572
        %v1574 = vrot.slane %v1573, 1
        %v1575 = vadd.f32 %v1573, %v1574
        %s1576 = vtos %v1575
        %v1577 = vstv %s1576
        %v1578 = vadd.f32 %v1311, %v1577
        %v1579 = vmul.f32 %v1564, %v1564
        %v1580 = vsel %vm717, %v1579, 0.0
        %1581 = vadd.xlane.f32.xlu0 %v1580
        %v1582 = vpop.xlane.xlu0 %1581
        %v1583 = vrot.slane %v1582, 4
        %v1584 = vadd.f32 %v1582, %v1583
        %v1585 = vrot.slane %v1584, 2
        %v1586 = vadd.f32 %v1584, %v1585
        %v1587 = vrot.slane %v1586, 1
        %v1588 = vadd.f32 %v1586, %v1587
        %s1589 = vtos %v1588
        %v1590 = vstv %s1589
        %v1591 = vadd.f32 %v1324, %v1590
        %v1592 = vmul.f32 %v1565, %v1565
        %v1593 = vsel %vm717, %v1592, 0.0
        %1594 = vadd.xlane.f32.xlu0 %v1593
        %v1595 = vpop.xlane.xlu0 %1594
        %v1596 = vrot.slane %v1595, 4
        %v1597 = vadd.f32 %v1595, %v1596
        %v1598 = vrot.slane %v1597, 2
        %v1599 = vadd.f32 %v1597, %v1598
        %v1600 = vrot.slane %v1599, 1
        %v1601 = vadd.f32 %v1599, %v1600
        %s1602 = vtos %v1601
        %v1603 = vstv %s1602
        %v1604 = vadd.f32 %v1337, %v1603
        %1605 = vmatprep.subr.bf16.mxu0 0
        %1606 = vmatpush1.bf16.xpose.msra.mxu0 0
        %1607 = vmatprep.subr.bf16.mxu0 0
        %1608 = vmatpush1.bf16.xpose.msra.mxu0 0
        %1609 = vmatprep.subr.bf16.mxu0 0
        %1610 = vmatpush1.bf16.xpose.msra.mxu0 0
        %1611 = vmatprep.subr.bf16.mxu0 0
        %1612 = vmatpush1.bf16.xpose.msra.mxu0 0
        %1613 = vmatprep.subr.bf16.mxu0 0
        %1614 = vmatpush1.bf16.xpose.msra.mxu0 0
        %1615 = vmatprep.subr.bf16.mxu0 0
        %1616 = vmatpush1.bf16.xpose.msra.mxu0 0
        %1617 = vmatprep.subr.bf16.mxu0 0
        %1618 = vmatpush1.bf16.xpose.msra.mxu0 0
        %1619 = vmatprep.subr.bf16.mxu0 0
        %1620 = vmatpush1.bf16.xpose.msra.mxu0 %v314
        %1621 = vmatprep.subr.bf16.mxu0 0
        %1622 = vmatpush2.bf16.xpose.msra.mxu0 0
        %1623 = vmatprep.subr.bf16.mxu0 0
        %1624 = vmatpush2.bf16.xpose.msra.mxu0 0
        %1625 = vmatprep.subr.bf16.mxu0 0
        %1626 = vmatpush2.bf16.xpose.msra.mxu0 0
        %1627 = vmatprep.subr.bf16.mxu0 0
        %1628 = vmatpush2.bf16.xpose.msra.mxu0 0
        %1629 = vmatprep.subr.bf16.mxu0 0
        %1630 = vmatpush2.bf16.xpose.msra.mxu0 0
        %1631 = vmatprep.subr.bf16.mxu0 0
        %1632 = vmatpush2.bf16.xpose.msra.mxu0 0
        %1633 = vmatprep.subr.bf16.mxu0 0
        %1634 = vmatpush2.bf16.xpose.msra.mxu0 0
        %1635 = vmatprep.subr.bf16.mxu0 0
        %1636 = vmatpush2.bf16.xpose.msra.mxu0 0
        %1637 = vmatprep.mubr.bf16.mxu0 0
        %1638 = vmatmul.mubr.bf16.gmra.mxu0 %v314
        %v1639 = vpop.f32.mrf.mxu0
        %v1640 = vadd.f32 0.0, %v1639
        %v1641 = vpop.f32.mrf.mxu0
        %v1642 = vpop.f32.mrf.mxu0
        %v1643 = vpop.f32.mrf.mxu0
        %1644 = vdwg.mxu0
        %1645 = vmatprep.subr.bf16.mxu0 0
        %1646 = vmatpush1.bf16.xpose.msra.mxu0 0
        %1647 = vmatprep.subr.bf16.mxu0 0
        %1648 = vmatpush1.bf16.xpose.msra.mxu0 0
        %1649 = vmatprep.subr.bf16.mxu0 0
        %1650 = vmatpush1.bf16.xpose.msra.mxu0 0
        %1651 = vmatprep.subr.bf16.mxu0 0
        %1652 = vmatpush1.bf16.xpose.msra.mxu0 0
        %1653 = vmatprep.subr.bf16.mxu0 0
        %1654 = vmatpush1.bf16.xpose.msra.mxu0 0
        %1655 = vmatprep.subr.bf16.mxu0 0
        %1656 = vmatpush1.bf16.xpose.msra.mxu0 0
        %1657 = vmatprep.subr.bf16.mxu0 0
        %1658 = vmatpush1.bf16.xpose.msra.mxu0 0
        %1659 = vmatprep.subr.bf16.mxu0 0
        %1660 = vmatpush1.bf16.xpose.msra.mxu0 %v410
        %1661 = vmatprep.subr.bf16.mxu0 0
        %1662 = vmatpush2.bf16.xpose.msra.mxu0 0
        %1663 = vmatprep.subr.bf16.mxu0 0
        %1664 = vmatpush2.bf16.xpose.msra.mxu0 0
        %1665 = vmatprep.subr.bf16.mxu0 0
        %1666 = vmatpush2.bf16.xpose.msra.mxu0 0
        %1667 = vmatprep.subr.bf16.mxu0 0
        %1668 = vmatpush2.bf16.xpose.msra.mxu0 0
        %1669 = vmatprep.subr.bf16.mxu0 0
        %1670 = vmatpush2.bf16.xpose.msra.mxu0 0
        %1671 = vmatprep.subr.bf16.mxu0 0
        %1672 = vmatpush2.bf16.xpose.msra.mxu0 0
        %1673 = vmatprep.subr.bf16.mxu0 0
        %1674 = vmatpush2.bf16.xpose.msra.mxu0 0
        %1675 = vmatprep.subr.bf16.mxu0 0
        %1676 = vmatpush2.bf16.xpose.msra.mxu0 0
        %1677 = vmatprep.mubr.bf16.mxu0 0
        %1678 = vmatmul.mubr.bf16.gmra.mxu0 %v410
        %v1679 = vpop.f32.mrf.mxu0
        %v1680 = vadd.f32 0.0, %v1679
        %v1681 = vpop.f32.mrf.mxu0
        %v1682 = vpop.f32.mrf.mxu0
        %v1683 = vpop.f32.mrf.mxu0
        %1684 = vdwg.mxu0
        %v1685 = vmul.f32 %v1640, %v1680
        %v1686 = vsel %vm511, %v1685, 0.0
        %1687 = vadd.xlane.f32.xlu0 %v1686
        %v1688 = vpop.xlane.xlu0 %1687
        %v1689 = vrot.slane %v1688, 4
        %v1690 = vadd.f32 %v1688, %v1689
        %v1691 = vrot.slane %v1690, 2
        %v1692 = vadd.f32 %v1690, %v1691
        %v1693 = vrot.slane %v1692, 1
        %v1694 = vadd.f32 %v1692, %v1693
        %s1695 = vtos %v1694
        %v1696 = vstv %s1695
        %v1697 = vmul.f32 %v1640, %v1640
        %v1698 = vsel %vm511, %v1697, 0.0
        %1699 = vadd.xlane.f32.xlu0 %v1698
        %v1700 = vpop.xlane.xlu0 %1699
        %v1701 = vrot.slane %v1700, 4
        %v1702 = vadd.f32 %v1700, %v1701
        %v1703 = vrot.slane %v1702, 2
        %v1704 = vadd.f32 %v1702, %v1703
        %v1705 = vrot.slane %v1704, 1
        %v1706 = vadd.f32 %v1704, %v1705
        %s1707 = vtos %v1706
        %v1708 = vstv %s1707
        %v1709 = vmul.f32 %v1680, %v1680
        %v1710 = vsel %vm511, %v1709, 0.0
        %1711 = vadd.xlane.f32.xlu0 %v1710
        %v1712 = vpop.xlane.xlu0 %1711
        %v1713 = vrot.slane %v1712, 4
        %v1714 = vadd.f32 %v1712, %v1713
        %v1715 = vrot.slane %v1714, 2
        %v1716 = vadd.f32 %v1714, %v1715
        %v1717 = vrot.slane %v1716, 1
        %v1718 = vadd.f32 %v1716, %v1717
        %s1719 = vtos %v1718
        %v1720 = vstv %s1719
        %v1721 = vand.u32 2147483647, %v1696
        %v1722 = vadd.f32 %v1708, 1e-30
        %v1723 = vrsqrt.pop %v1722
        %v1724 = vmul.f32 %v1721, %v1723
        %v1725 = vadd.f32 %v1720, 1e-30
        %v1726 = vrsqrt.pop %v1725
        %v1727 = vmul.f32 %v1724, %v1726
        %v1728 = vadd.f32 %v1461, %v1727
        %v1729 = vmul.f32 %v330, %v330
        %v1730 = vmul.f32 %v330, %v331
        %v1731 = vmul.f32 %v330, %v332
        %v1732 = vmul.f32 %v330, %v333
        %1733 = vadd.xlane.f32.xlu0 %v1729
        %v1734 = vpop.xlane.xlu0 %1733
        %1735 = vadd.xlane.f32.xlu0 %v1730
        %v1736 = vpop.xlane.xlu0 %1735
        %1737 = vadd.xlane.f32.xlu0 %v1731
        %v1738 = vpop.xlane.xlu0 %1737
        %1739 = vadd.xlane.f32.xlu0 %v1732
        %v1740 = vpop.xlane.xlu0 %1739
        %v1745 = vlaneseq
        %v1746 = vshrl.u32 %v1745, 7
        %v1747 = vsub.s32 %v588, %v1746
        %v1748 = vrot.slane %v1734, %v1747
        %v1749 = vlaneseq
        %v1750 = vshrl.u32 %v1749, 7
        %v1751 = vsub.s32 %v588, %v1750
        %v1752 = vrot.slane %v1736, %v1751
        %v1753 = vlaneseq
        %v1754 = vshrl.u32 %v1753, 7
        %v1755 = vsub.s32 %v588, %v1754
        %v1756 = vrot.slane %v1738, %v1755
        %v1757 = vlaneseq
        %v1758 = vshrl.u32 %v1757, 7
        %v1759 = vsub.s32 %v588, %v1758
        %v1760 = vrot.slane %v1740, %v1759
        %v1761 = vsel %vm621, %v923, %v608
        %v1762 = vsel %vm623, %v1214, %v1761
        %v1763 = vsel %vm625, %v1489, %v1762
        %v1764 = vsel %vm627, %v1748, %v1763
        %v1765 = vsel %vm629, %v1752, %v1764
        %v1766 = vsel %vm631, %v1756, %v1765
        %v1767 = vsel %vm633, %v1760, %v1766
        %v1769 = vsel %vm511, %v1767, 0.0
        %1770 = vadd.xlane.f32.xlu0 %v1769
        %v1771 = vpop.xlane.xlu0 %1770
        %v1772 = vmul.f32 %v426, %v426
        %v1773 = vmul.f32 %v426, %v427
        %v1774 = vmul.f32 %v426, %v428
        %v1775 = vmul.f32 %v426, %v429
        %1776 = vadd.xlane.f32.xlu0 %v1772
        %v1777 = vpop.xlane.xlu0 %1776
        %1778 = vadd.xlane.f32.xlu0 %v1773
        %v1779 = vpop.xlane.xlu0 %1778
        %1780 = vadd.xlane.f32.xlu0 %v1774
        %v1781 = vpop.xlane.xlu0 %1780
        %1782 = vadd.xlane.f32.xlu0 %v1775
        %v1783 = vpop.xlane.xlu0 %1782
        %v1788 = vlaneseq
        %v1789 = vshrl.u32 %v1788, 7
        %v1790 = vsub.s32 %v588, %v1789
        %v1791 = vrot.slane %v1777, %v1790
        %v1792 = vlaneseq
        %v1793 = vshrl.u32 %v1792, 7
        %v1794 = vsub.s32 %v588, %v1793
        %v1795 = vrot.slane %v1779, %v1794
        %v1796 = vlaneseq
        %v1797 = vshrl.u32 %v1796, 7
        %v1798 = vsub.s32 %v588, %v1797
        %v1799 = vrot.slane %v1781, %v1798
        %v1800 = vlaneseq
        %v1801 = vshrl.u32 %v1800, 7
        %v1802 = vsub.s32 %v588, %v1801
        %v1803 = vrot.slane %v1783, %v1802
        %v1804 = vsel %vm621, %v990, %v690
        %v1805 = vsel %vm623, %v1273, %v1804
        %v1806 = vsel %vm625, %v1540, %v1805
        %v1807 = vsel %vm627, %v1791, %v1806
        %v1808 = vsel %vm629, %v1795, %v1807
        %v1809 = vsel %vm631, %v1799, %v1808
        %v1810 = vsel %vm633, %v1803, %v1809
        %v1812 = vsel %vm511, %v1810, 0.0
        %1813 = vadd.xlane.f32.xlu0 %v1812
        %v1814 = vpop.xlane.xlu0 %1813
        %v1815 = vmul.f32 %v1771, 0.0009765625
        %v1816 = vmul.f32 %v1814, 0.0009765625
        %v1817 = vmul.f32 %v1815, %v1816
        %v1818 = vsel %vm717, %v1817, 0.0
        %1819 = vadd.xlane.f32.xlu0 %v1818
        %v1820 = vpop.xlane.xlu0 %1819
        %v1821 = vrot.slane %v1820, 4
        %v1822 = vadd.f32 %v1820, %v1821
        %v1823 = vrot.slane %v1822, 2
        %v1824 = vadd.f32 %v1822, %v1823
        %v1825 = vrot.slane %v1824, 1
        %v1826 = vadd.f32 %v1824, %v1825
        %s1827 = vtos %v1826
        %v1828 = vstv %s1827
        %v1829 = vadd.f32 %v1578, %v1828
        %v1830 = vmul.f32 %v1815, %v1815
        %v1831 = vsel %vm717, %v1830, 0.0
        %1832 = vadd.xlane.f32.xlu0 %v1831
        %v1833 = vpop.xlane.xlu0 %1832
        %v1834 = vrot.slane %v1833, 4
        %v1835 = vadd.f32 %v1833, %v1834
        %v1836 = vrot.slane %v1835, 2
        %v1837 = vadd.f32 %v1835, %v1836
        %v1838 = vrot.slane %v1837, 1
        %v1839 = vadd.f32 %v1837, %v1838
        %s1840 = vtos %v1839
        %v1841 = vstv %s1840
        %v1842 = vadd.f32 %v1591, %v1841
        %v1843 = vmul.f32 %v1816, %v1816
        %v1844 = vsel %vm717, %v1843, 0.0
        %1845 = vadd.xlane.f32.xlu0 %v1844
        %v1846 = vpop.xlane.xlu0 %1845
        %v1847 = vrot.slane %v1846, 4
        %v1848 = vadd.f32 %v1846, %v1847
        %v1849 = vrot.slane %v1848, 2
        %v1850 = vadd.f32 %v1848, %v1849
        %v1851 = vrot.slane %v1850, 1
        %v1852 = vadd.f32 %v1850, %v1851
        %s1853 = vtos %v1852
        %v1854 = vstv %s1853
        %v1855 = vadd.f32 %v1604, %v1854
        %1856 = vmatprep.subr.bf16.mxu0 0
        %1857 = vmatpush1.bf16.xpose.msra.mxu0 0
        %1858 = vmatprep.subr.bf16.mxu0 0
        %1859 = vmatpush1.bf16.xpose.msra.mxu0 0
        %1860 = vmatprep.subr.bf16.mxu0 0
        %1861 = vmatpush1.bf16.xpose.msra.mxu0 0
        %1862 = vmatprep.subr.bf16.mxu0 0
        %1863 = vmatpush1.bf16.xpose.msra.mxu0 0
        %1864 = vmatprep.subr.bf16.mxu0 0
        %1865 = vmatpush1.bf16.xpose.msra.mxu0 0
        %1866 = vmatprep.subr.bf16.mxu0 0
        %1867 = vmatpush1.bf16.xpose.msra.mxu0 0
        %1868 = vmatprep.subr.bf16.mxu0 0
        %1869 = vmatpush1.bf16.xpose.msra.mxu0 0
        %1870 = vmatprep.subr.bf16.mxu0 0
        %1871 = vmatpush1.bf16.xpose.msra.mxu0 %v315
        %1872 = vmatprep.subr.bf16.mxu0 0
        %1873 = vmatpush2.bf16.xpose.msra.mxu0 0
        %1874 = vmatprep.subr.bf16.mxu0 0
        %1875 = vmatpush2.bf16.xpose.msra.mxu0 0
        %1876 = vmatprep.subr.bf16.mxu0 0
        %1877 = vmatpush2.bf16.xpose.msra.mxu0 0
        %1878 = vmatprep.subr.bf16.mxu0 0
        %1879 = vmatpush2.bf16.xpose.msra.mxu0 0
        %1880 = vmatprep.subr.bf16.mxu0 0
        %1881 = vmatpush2.bf16.xpose.msra.mxu0 0
        %1882 = vmatprep.subr.bf16.mxu0 0
        %1883 = vmatpush2.bf16.xpose.msra.mxu0 0
        %1884 = vmatprep.subr.bf16.mxu0 0
        %1885 = vmatpush2.bf16.xpose.msra.mxu0 0
        %1886 = vmatprep.subr.bf16.mxu0 0
        %1887 = vmatpush2.bf16.xpose.msra.mxu0 0
        %1888 = vmatprep.mubr.bf16.mxu0 0
        %1889 = vmatmul.mubr.bf16.gmra.mxu0 %v315
        %v1890 = vpop.f32.mrf.mxu0
        %v1891 = vadd.f32 0.0, %v1890
        %v1892 = vpop.f32.mrf.mxu0
        %v1893 = vpop.f32.mrf.mxu0
        %v1894 = vpop.f32.mrf.mxu0
        %1895 = vdwg.mxu0
        %1896 = vmatprep.subr.bf16.mxu0 0
        %1897 = vmatpush1.bf16.xpose.msra.mxu0 0
        %1898 = vmatprep.subr.bf16.mxu0 0
        %1899 = vmatpush1.bf16.xpose.msra.mxu0 0
        %1900 = vmatprep.subr.bf16.mxu0 0
        %1901 = vmatpush1.bf16.xpose.msra.mxu0 0
        %1902 = vmatprep.subr.bf16.mxu0 0
        %1903 = vmatpush1.bf16.xpose.msra.mxu0 0
        %1904 = vmatprep.subr.bf16.mxu0 0
        %1905 = vmatpush1.bf16.xpose.msra.mxu0 0
        %1906 = vmatprep.subr.bf16.mxu0 0
        %1907 = vmatpush1.bf16.xpose.msra.mxu0 0
        %1908 = vmatprep.subr.bf16.mxu0 0
        %1909 = vmatpush1.bf16.xpose.msra.mxu0 0
        %1910 = vmatprep.subr.bf16.mxu0 0
        %1911 = vmatpush1.bf16.xpose.msra.mxu0 %v411
        %1912 = vmatprep.subr.bf16.mxu0 0
        %1913 = vmatpush2.bf16.xpose.msra.mxu0 0
        %1914 = vmatprep.subr.bf16.mxu0 0
        %1915 = vmatpush2.bf16.xpose.msra.mxu0 0
        %1916 = vmatprep.subr.bf16.mxu0 0
        %1917 = vmatpush2.bf16.xpose.msra.mxu0 0
        %1918 = vmatprep.subr.bf16.mxu0 0
        %1919 = vmatpush2.bf16.xpose.msra.mxu0 0
        %1920 = vmatprep.subr.bf16.mxu0 0
        %1921 = vmatpush2.bf16.xpose.msra.mxu0 0
        %1922 = vmatprep.subr.bf16.mxu0 0
        %1923 = vmatpush2.bf16.xpose.msra.mxu0 0
        %1924 = vmatprep.subr.bf16.mxu0 0
        %1925 = vmatpush2.bf16.xpose.msra.mxu0 0
        %1926 = vmatprep.subr.bf16.mxu0 0
        %1927 = vmatpush2.bf16.xpose.msra.mxu0 0
        %1928 = vmatprep.mubr.bf16.mxu0 0
        %1929 = vmatmul.mubr.bf16.gmra.mxu0 %v411
        %v1930 = vpop.f32.mrf.mxu0
        %v1931 = vadd.f32 0.0, %v1930
        %v1932 = vpop.f32.mrf.mxu0
        %v1933 = vpop.f32.mrf.mxu0
        %v1934 = vpop.f32.mrf.mxu0
        %1935 = vdwg.mxu0
        %v1936 = vmul.f32 %v1891, %v1931
        %v1937 = vsel %vm511, %v1936, 0.0
        %1938 = vadd.xlane.f32.xlu0 %v1937
        %v1939 = vpop.xlane.xlu0 %1938
        %v1940 = vrot.slane %v1939, 4
        %v1941 = vadd.f32 %v1939, %v1940
        %v1942 = vrot.slane %v1941, 2
        %v1943 = vadd.f32 %v1941, %v1942
        %v1944 = vrot.slane %v1943, 1
        %v1945 = vadd.f32 %v1943, %v1944
        %s1946 = vtos %v1945
        %v1947 = vstv %s1946
        %v1948 = vmul.f32 %v1891, %v1891
        %v1949 = vsel %vm511, %v1948, 0.0
        %1950 = vadd.xlane.f32.xlu0 %v1949
        %v1951 = vpop.xlane.xlu0 %1950
        %v1952 = vrot.slane %v1951, 4
        %v1953 = vadd.f32 %v1951, %v1952
        %v1954 = vrot.slane %v1953, 2
        %v1955 = vadd.f32 %v1953, %v1954
        %v1956 = vrot.slane %v1955, 1
        %v1957 = vadd.f32 %v1955, %v1956
        %s1958 = vtos %v1957
        %v1959 = vstv %s1958
        %v1960 = vmul.f32 %v1931, %v1931
        %v1961 = vsel %vm511, %v1960, 0.0
        %1962 = vadd.xlane.f32.xlu0 %v1961
        %v1963 = vpop.xlane.xlu0 %1962
        %v1964 = vrot.slane %v1963, 4
        %v1965 = vadd.f32 %v1963, %v1964
        %v1966 = vrot.slane %v1965, 2
        %v1967 = vadd.f32 %v1965, %v1966
        %v1968 = vrot.slane %v1967, 1
        %v1969 = vadd.f32 %v1967, %v1968
        %s1970 = vtos %v1969
        %v1971 = vstv %s1970
        %v1972 = vand.u32 2147483647, %v1947
        %v1973 = vadd.f32 %v1959, 1e-30
        %v1974 = vrsqrt.pop %v1973
        %v1975 = vmul.f32 %v1972, %v1974
        %v1976 = vadd.f32 %v1971, 1e-30
        %v1977 = vrsqrt.pop %v1976
        %v1978 = vmul.f32 %v1975, %v1977
        %v1979 = vadd.f32 %v1728, %v1978
        %v1980 = vmul.f32 %v331, %v331
        %v1981 = vmul.f32 %v331, %v332
        %v1982 = vmul.f32 %v331, %v333
        %1983 = vadd.xlane.f32.xlu0 %v1980
        %v1984 = vpop.xlane.xlu0 %1983
        %1985 = vadd.xlane.f32.xlu0 %v1981
        %v1986 = vpop.xlane.xlu0 %1985
        %1987 = vadd.xlane.f32.xlu0 %v1982
        %v1988 = vpop.xlane.xlu0 %1987
        %v1992 = vlaneseq
        %v1993 = vshrl.u32 %v1992, 7
        %v1994 = vsub.s32 %v588, %v1993
        %v1995 = vrot.slane %v1984, %v1994
        %v1996 = vlaneseq
        %v1997 = vshrl.u32 %v1996, 7
        %v1998 = vsub.s32 %v588, %v1997
        %v1999 = vrot.slane %v1986, %v1998
        %v2000 = vlaneseq
        %v2001 = vshrl.u32 %v2000, 7
        %v2002 = vsub.s32 %v588, %v2001
        %v2003 = vrot.slane %v1988, %v2002
        %v2004 = vsel %vm621, %v927, %v612
        %v2005 = vsel %vm623, %v1218, %v2004
        %v2006 = vsel %vm625, %v1493, %v2005
        %v2007 = vsel %vm627, %v1752, %v2006
        %v2008 = vsel %vm629, %v1995, %v2007
        %v2009 = vsel %vm631, %v1999, %v2008
        %v2010 = vsel %vm633, %v2003, %v2009
        %v2012 = vsel %vm511, %v2010, 0.0
        %2013 = vadd.xlane.f32.xlu0 %v2012
        %v2014 = vpop.xlane.xlu0 %2013
        %v2015 = vmul.f32 %v427, %v427
        %v2016 = vmul.f32 %v427, %v428
        %v2017 = vmul.f32 %v427, %v429
        %2018 = vadd.xlane.f32.xlu0 %v2015
        %v2019 = vpop.xlane.xlu0 %2018
        %2020 = vadd.xlane.f32.xlu0 %v2016
        %v2021 = vpop.xlane.xlu0 %2020
        %2022 = vadd.xlane.f32.xlu0 %v2017
        %v2023 = vpop.xlane.xlu0 %2022
        %v2027 = vlaneseq
        %v2028 = vshrl.u32 %v2027, 7
        %v2029 = vsub.s32 %v588, %v2028
        %v2030 = vrot.slane %v2019, %v2029
        %v2031 = vlaneseq
        %v2032 = vshrl.u32 %v2031, 7
        %v2033 = vsub.s32 %v588, %v2032
        %v2034 = vrot.slane %v2021, %v2033
        %v2035 = vlaneseq
        %v2036 = vshrl.u32 %v2035, 7
        %v2037 = vsub.s32 %v588, %v2036
        %v2038 = vrot.slane %v2023, %v2037
        %v2039 = vsel %vm621, %v994, %v694
        %v2040 = vsel %vm623, %v1277, %v2039
        %v2041 = vsel %vm625, %v1544, %v2040
        %v2042 = vsel %vm627, %v1795, %v2041
        %v2043 = vsel %vm629, %v2030, %v2042
        %v2044 = vsel %vm631, %v2034, %v2043
        %v2045 = vsel %vm633, %v2038, %v2044
        %v2047 = vsel %vm511, %v2045, 0.0
        %2048 = vadd.xlane.f32.xlu0 %v2047
        %v2049 = vpop.xlane.xlu0 %2048
        %v2050 = vmul.f32 %v2014, 0.0009765625
        %v2051 = vmul.f32 %v2049, 0.0009765625
        %v2052 = vmul.f32 %v2050, %v2051
        %v2053 = vsel %vm717, %v2052, 0.0
        %2054 = vadd.xlane.f32.xlu0 %v2053
        %v2055 = vpop.xlane.xlu0 %2054
        %v2056 = vrot.slane %v2055, 4
        %v2057 = vadd.f32 %v2055, %v2056
        %v2058 = vrot.slane %v2057, 2
        %v2059 = vadd.f32 %v2057, %v2058
        %v2060 = vrot.slane %v2059, 1
        %v2061 = vadd.f32 %v2059, %v2060
        %s2062 = vtos %v2061
        %v2063 = vstv %s2062
        %v2064 = vadd.f32 %v1829, %v2063
        %v2065 = vmul.f32 %v2050, %v2050
        %v2066 = vsel %vm717, %v2065, 0.0
        %2067 = vadd.xlane.f32.xlu0 %v2066
        %v2068 = vpop.xlane.xlu0 %2067
        %v2069 = vrot.slane %v2068, 4
        %v2070 = vadd.f32 %v2068, %v2069
        %v2071 = vrot.slane %v2070, 2
        %v2072 = vadd.f32 %v2070, %v2071
        %v2073 = vrot.slane %v2072, 1
        %v2074 = vadd.f32 %v2072, %v2073
        %s2075 = vtos %v2074
        %v2076 = vstv %s2075
        %v2077 = vadd.f32 %v1842, %v2076
        %v2078 = vmul.f32 %v2051, %v2051
        %v2079 = vsel %vm717, %v2078, 0.0
        %2080 = vadd.xlane.f32.xlu0 %v2079
        %v2081 = vpop.xlane.xlu0 %2080
        %v2082 = vrot.slane %v2081, 4
        %v2083 = vadd.f32 %v2081, %v2082
        %v2084 = vrot.slane %v2083, 2
        %v2085 = vadd.f32 %v2083, %v2084
        %v2086 = vrot.slane %v2085, 1
        %v2087 = vadd.f32 %v2085, %v2086
        %s2088 = vtos %v2087
        %v2089 = vstv %s2088
        %v2090 = vadd.f32 %v1855, %v2089
        %2091 = vmatprep.subr.bf16.mxu0 0
        %2092 = vmatpush1.bf16.xpose.msra.mxu0 0
        %2093 = vmatprep.subr.bf16.mxu0 0
        %2094 = vmatpush1.bf16.xpose.msra.mxu0 0
        %2095 = vmatprep.subr.bf16.mxu0 0
        %2096 = vmatpush1.bf16.xpose.msra.mxu0 0
        %2097 = vmatprep.subr.bf16.mxu0 0
        %2098 = vmatpush1.bf16.xpose.msra.mxu0 0
        %2099 = vmatprep.subr.bf16.mxu0 0
        %2100 = vmatpush1.bf16.xpose.msra.mxu0 0
        %2101 = vmatprep.subr.bf16.mxu0 0
        %2102 = vmatpush1.bf16.xpose.msra.mxu0 0
        %2103 = vmatprep.subr.bf16.mxu0 0
        %2104 = vmatpush1.bf16.xpose.msra.mxu0 0
        %2105 = vmatprep.subr.bf16.mxu0 0
        %2106 = vmatpush1.bf16.xpose.msra.mxu0 %v316
        %2107 = vmatprep.subr.bf16.mxu0 0
        %2108 = vmatpush2.bf16.xpose.msra.mxu0 0
        %2109 = vmatprep.subr.bf16.mxu0 0
        %2110 = vmatpush2.bf16.xpose.msra.mxu0 0
        %2111 = vmatprep.subr.bf16.mxu0 0
        %2112 = vmatpush2.bf16.xpose.msra.mxu0 0
        %2113 = vmatprep.subr.bf16.mxu0 0
        %2114 = vmatpush2.bf16.xpose.msra.mxu0 0
        %2115 = vmatprep.subr.bf16.mxu0 0
        %2116 = vmatpush2.bf16.xpose.msra.mxu0 0
        %2117 = vmatprep.subr.bf16.mxu0 0
        %2118 = vmatpush2.bf16.xpose.msra.mxu0 0
        %2119 = vmatprep.subr.bf16.mxu0 0
        %2120 = vmatpush2.bf16.xpose.msra.mxu0 0
        %2121 = vmatprep.subr.bf16.mxu0 0
        %2122 = vmatpush2.bf16.xpose.msra.mxu0 0
        %2123 = vmatprep.mubr.bf16.mxu0 0
        %2124 = vmatmul.mubr.bf16.gmra.mxu0 %v316
        %v2125 = vpop.f32.mrf.mxu0
        %v2126 = vadd.f32 0.0, %v2125
        %v2127 = vpop.f32.mrf.mxu0
        %v2128 = vpop.f32.mrf.mxu0
        %v2129 = vpop.f32.mrf.mxu0
        %2130 = vdwg.mxu0
        %2131 = vmatprep.subr.bf16.mxu0 0
        %2132 = vmatpush1.bf16.xpose.msra.mxu0 0
        %2133 = vmatprep.subr.bf16.mxu0 0
        %2134 = vmatpush1.bf16.xpose.msra.mxu0 0
        %2135 = vmatprep.subr.bf16.mxu0 0
        %2136 = vmatpush1.bf16.xpose.msra.mxu0 0
        %2137 = vmatprep.subr.bf16.mxu0 0
        %2138 = vmatpush1.bf16.xpose.msra.mxu0 0
        %2139 = vmatprep.subr.bf16.mxu0 0
        %2140 = vmatpush1.bf16.xpose.msra.mxu0 0
        %2141 = vmatprep.subr.bf16.mxu0 0
        %2142 = vmatpush1.bf16.xpose.msra.mxu0 0
        %2143 = vmatprep.subr.bf16.mxu0 0
        %2144 = vmatpush1.bf16.xpose.msra.mxu0 0
        %2145 = vmatprep.subr.bf16.mxu0 0
        %2146 = vmatpush1.bf16.xpose.msra.mxu0 %v412
        %2147 = vmatprep.subr.bf16.mxu0 0
        %2148 = vmatpush2.bf16.xpose.msra.mxu0 0
        %2149 = vmatprep.subr.bf16.mxu0 0
        %2150 = vmatpush2.bf16.xpose.msra.mxu0 0
        %2151 = vmatprep.subr.bf16.mxu0 0
        %2152 = vmatpush2.bf16.xpose.msra.mxu0 0
        %2153 = vmatprep.subr.bf16.mxu0 0
        %2154 = vmatpush2.bf16.xpose.msra.mxu0 0
        %2155 = vmatprep.subr.bf16.mxu0 0
        %2156 = vmatpush2.bf16.xpose.msra.mxu0 0
        %2157 = vmatprep.subr.bf16.mxu0 0
        %2158 = vmatpush2.bf16.xpose.msra.mxu0 0
        %2159 = vmatprep.subr.bf16.mxu0 0
        %2160 = vmatpush2.bf16.xpose.msra.mxu0 0
        %2161 = vmatprep.subr.bf16.mxu0 0
        %2162 = vmatpush2.bf16.xpose.msra.mxu0 0
        %2163 = vmatprep.mubr.bf16.mxu0 0
        %2164 = vmatmul.mubr.bf16.gmra.mxu0 %v412
        %v2165 = vpop.f32.mrf.mxu0
        %v2166 = vadd.f32 0.0, %v2165
        %v2167 = vpop.f32.mrf.mxu0
        %v2168 = vpop.f32.mrf.mxu0
        %v2169 = vpop.f32.mrf.mxu0
        %2170 = vdwg.mxu0
        %v2171 = vmul.f32 %v2126, %v2166
        %v2172 = vsel %vm511, %v2171, 0.0
        %2173 = vadd.xlane.f32.xlu0 %v2172
        %v2174 = vpop.xlane.xlu0 %2173
        %v2175 = vrot.slane %v2174, 4
        %v2176 = vadd.f32 %v2174, %v2175
        %v2177 = vrot.slane %v2176, 2
        %v2178 = vadd.f32 %v2176, %v2177
        %v2179 = vrot.slane %v2178, 1
        %v2180 = vadd.f32 %v2178, %v2179
        %s2181 = vtos %v2180
        %v2182 = vstv %s2181
        %v2183 = vmul.f32 %v2126, %v2126
        %v2184 = vsel %vm511, %v2183, 0.0
        %2185 = vadd.xlane.f32.xlu0 %v2184
        %v2186 = vpop.xlane.xlu0 %2185
        %v2187 = vrot.slane %v2186, 4
        %v2188 = vadd.f32 %v2186, %v2187
        %v2189 = vrot.slane %v2188, 2
        %v2190 = vadd.f32 %v2188, %v2189
        %v2191 = vrot.slane %v2190, 1
        %v2192 = vadd.f32 %v2190, %v2191
        %s2193 = vtos %v2192
        %v2194 = vstv %s2193
        %v2195 = vmul.f32 %v2166, %v2166
        %v2196 = vsel %vm511, %v2195, 0.0
        %2197 = vadd.xlane.f32.xlu0 %v2196
        %v2198 = vpop.xlane.xlu0 %2197
        %v2199 = vrot.slane %v2198, 4
        %v2200 = vadd.f32 %v2198, %v2199
        %v2201 = vrot.slane %v2200, 2
        %v2202 = vadd.f32 %v2200, %v2201
        %v2203 = vrot.slane %v2202, 1
        %v2204 = vadd.f32 %v2202, %v2203
        %s2205 = vtos %v2204
        %v2206 = vstv %s2205
        %v2207 = vand.u32 2147483647, %v2182
        %v2208 = vadd.f32 %v2194, 1e-30
        %v2209 = vrsqrt.pop %v2208
        %v2210 = vmul.f32 %v2207, %v2209
        %v2211 = vadd.f32 %v2206, 1e-30
        %v2212 = vrsqrt.pop %v2211
        %v2213 = vmul.f32 %v2210, %v2212
        %v2214 = vadd.f32 %v1979, %v2213
        %v2215 = vmul.f32 %v332, %v332
        %v2216 = vmul.f32 %v332, %v333
        %2217 = vadd.xlane.f32.xlu0 %v2215
        %v2218 = vpop.xlane.xlu0 %2217
        %2219 = vadd.xlane.f32.xlu0 %v2216
        %v2220 = vpop.xlane.xlu0 %2219
        %v2223 = vlaneseq
        %v2224 = vshrl.u32 %v2223, 7
        %v2225 = vsub.s32 %v588, %v2224
        %v2226 = vrot.slane %v2218, %v2225
        %v2227 = vlaneseq
        %v2228 = vshrl.u32 %v2227, 7
        %v2229 = vsub.s32 %v588, %v2228
        %v2230 = vrot.slane %v2220, %v2229
        %v2231 = vsel %vm621, %v931, %v616
        %v2232 = vsel %vm623, %v1222, %v2231
        %v2233 = vsel %vm625, %v1497, %v2232
        %v2234 = vsel %vm627, %v1756, %v2233
        %v2235 = vsel %vm629, %v1999, %v2234
        %v2236 = vsel %vm631, %v2226, %v2235
        %v2237 = vsel %vm633, %v2230, %v2236
        %v2239 = vsel %vm511, %v2237, 0.0
        %2240 = vadd.xlane.f32.xlu0 %v2239
        %v2241 = vpop.xlane.xlu0 %2240
        %v2242 = vmul.f32 %v428, %v428
        %v2243 = vmul.f32 %v428, %v429
        %2244 = vadd.xlane.f32.xlu0 %v2242
        %v2245 = vpop.xlane.xlu0 %2244
        %2246 = vadd.xlane.f32.xlu0 %v2243
        %v2247 = vpop.xlane.xlu0 %2246
        %v2250 = vlaneseq
        %v2251 = vshrl.u32 %v2250, 7
        %v2252 = vsub.s32 %v588, %v2251
        %v2253 = vrot.slane %v2245, %v2252
        %v2254 = vlaneseq
        %v2255 = vshrl.u32 %v2254, 7
        %v2256 = vsub.s32 %v588, %v2255
        %v2257 = vrot.slane %v2247, %v2256
        %v2258 = vsel %vm621, %v998, %v698
        %v2259 = vsel %vm623, %v1281, %v2258
        %v2260 = vsel %vm625, %v1548, %v2259
        %v2261 = vsel %vm627, %v1799, %v2260
        %v2262 = vsel %vm629, %v2034, %v2261
        %v2263 = vsel %vm631, %v2253, %v2262
        %v2264 = vsel %vm633, %v2257, %v2263
        %v2266 = vsel %vm511, %v2264, 0.0
        %2267 = vadd.xlane.f32.xlu0 %v2266
        %v2268 = vpop.xlane.xlu0 %2267
        %v2269 = vmul.f32 %v2241, 0.0009765625
        %v2270 = vmul.f32 %v2268, 0.0009765625
        %v2271 = vmul.f32 %v2269, %v2270
        %v2272 = vsel %vm717, %v2271, 0.0
        %2273 = vadd.xlane.f32.xlu0 %v2272
        %v2274 = vpop.xlane.xlu0 %2273
        %v2275 = vrot.slane %v2274, 4
        %v2276 = vadd.f32 %v2274, %v2275
        %v2277 = vrot.slane %v2276, 2
        %v2278 = vadd.f32 %v2276, %v2277
        %v2279 = vrot.slane %v2278, 1
        %v2280 = vadd.f32 %v2278, %v2279
        %s2281 = vtos %v2280
        %v2282 = vstv %s2281
        %v2283 = vadd.f32 %v2064, %v2282
        %v2284 = vmul.f32 %v2269, %v2269
        %v2285 = vsel %vm717, %v2284, 0.0
        %2286 = vadd.xlane.f32.xlu0 %v2285
        %v2287 = vpop.xlane.xlu0 %2286
        %v2288 = vrot.slane %v2287, 4
        %v2289 = vadd.f32 %v2287, %v2288
        %v2290 = vrot.slane %v2289, 2
        %v2291 = vadd.f32 %v2289, %v2290
        %v2292 = vrot.slane %v2291, 1
        %v2293 = vadd.f32 %v2291, %v2292
        %s2294 = vtos %v2293
        %v2295 = vstv %s2294
        %v2296 = vadd.f32 %v2077, %v2295
        %v2297 = vmul.f32 %v2270, %v2270
        %v2298 = vsel %vm717, %v2297, 0.0
        %2299 = vadd.xlane.f32.xlu0 %v2298
        %v2300 = vpop.xlane.xlu0 %2299
        %v2301 = vrot.slane %v2300, 4
        %v2302 = vadd.f32 %v2300, %v2301
        %v2303 = vrot.slane %v2302, 2
        %v2304 = vadd.f32 %v2302, %v2303
        %v2305 = vrot.slane %v2304, 1
        %v2306 = vadd.f32 %v2304, %v2305
        %s2307 = vtos %v2306
        %v2308 = vstv %s2307
        %v2309 = vadd.f32 %v2090, %v2308
        %2310 = vmatprep.subr.bf16.mxu0 0
        %2311 = vmatpush1.bf16.xpose.msra.mxu0 0
        %2312 = vmatprep.subr.bf16.mxu0 0
        %2313 = vmatpush1.bf16.xpose.msra.mxu0 0
        %2314 = vmatprep.subr.bf16.mxu0 0
        %2315 = vmatpush1.bf16.xpose.msra.mxu0 0
        %2316 = vmatprep.subr.bf16.mxu0 0
        %2317 = vmatpush1.bf16.xpose.msra.mxu0 0
        %2318 = vmatprep.subr.bf16.mxu0 0
        %2319 = vmatpush1.bf16.xpose.msra.mxu0 0
        %2320 = vmatprep.subr.bf16.mxu0 0
        %2321 = vmatpush1.bf16.xpose.msra.mxu0 0
        %2322 = vmatprep.subr.bf16.mxu0 0
        %2323 = vmatpush1.bf16.xpose.msra.mxu0 0
        %2324 = vmatprep.subr.bf16.mxu0 0
        %2325 = vmatpush1.bf16.xpose.msra.mxu0 %v317
        %2326 = vmatprep.subr.bf16.mxu0 0
        %2327 = vmatpush2.bf16.xpose.msra.mxu0 0
        %2328 = vmatprep.subr.bf16.mxu0 0
        %2329 = vmatpush2.bf16.xpose.msra.mxu0 0
        %2330 = vmatprep.subr.bf16.mxu0 0
        %2331 = vmatpush2.bf16.xpose.msra.mxu0 0
        %2332 = vmatprep.subr.bf16.mxu0 0
        %2333 = vmatpush2.bf16.xpose.msra.mxu0 0
        %2334 = vmatprep.subr.bf16.mxu0 0
        %2335 = vmatpush2.bf16.xpose.msra.mxu0 0
        %2336 = vmatprep.subr.bf16.mxu0 0
        %2337 = vmatpush2.bf16.xpose.msra.mxu0 0
        %2338 = vmatprep.subr.bf16.mxu0 0
        %2339 = vmatpush2.bf16.xpose.msra.mxu0 0
        %2340 = vmatprep.subr.bf16.mxu0 0
        %2341 = vmatpush2.bf16.xpose.msra.mxu0 0
        %2342 = vmatprep.mubr.bf16.mxu0 0
        %2343 = vmatmul.mubr.bf16.gmra.mxu0 %v317
        %v2344 = vpop.f32.mrf.mxu0
        %v2345 = vadd.f32 0.0, %v2344
        %v2346 = vpop.f32.mrf.mxu0
        %v2347 = vpop.f32.mrf.mxu0
        %v2348 = vpop.f32.mrf.mxu0
        %2349 = vdwg.mxu0
        %2350 = vmatprep.subr.bf16.mxu0 0
        %2351 = vmatpush1.bf16.xpose.msra.mxu0 0
        %2352 = vmatprep.subr.bf16.mxu0 0
        %2353 = vmatpush1.bf16.xpose.msra.mxu0 0
        %2354 = vmatprep.subr.bf16.mxu0 0
        %2355 = vmatpush1.bf16.xpose.msra.mxu0 0
        %2356 = vmatprep.subr.bf16.mxu0 0
        %2357 = vmatpush1.bf16.xpose.msra.mxu0 0
        %2358 = vmatprep.subr.bf16.mxu0 0
        %2359 = vmatpush1.bf16.xpose.msra.mxu0 0
        %2360 = vmatprep.subr.bf16.mxu0 0
        %2361 = vmatpush1.bf16.xpose.msra.mxu0 0
        %2362 = vmatprep.subr.bf16.mxu0 0
        %2363 = vmatpush1.bf16.xpose.msra.mxu0 0
        %2364 = vmatprep.subr.bf16.mxu0 0
        %2365 = vmatpush1.bf16.xpose.msra.mxu0 %v413
        %2366 = vmatprep.subr.bf16.mxu0 0
        %2367 = vmatpush2.bf16.xpose.msra.mxu0 0
        %2368 = vmatprep.subr.bf16.mxu0 0
        %2369 = vmatpush2.bf16.xpose.msra.mxu0 0
        %2370 = vmatprep.subr.bf16.mxu0 0
        %2371 = vmatpush2.bf16.xpose.msra.mxu0 0
        %2372 = vmatprep.subr.bf16.mxu0 0
        %2373 = vmatpush2.bf16.xpose.msra.mxu0 0
        %2374 = vmatprep.subr.bf16.mxu0 0
        %2375 = vmatpush2.bf16.xpose.msra.mxu0 0
        %2376 = vmatprep.subr.bf16.mxu0 0
        %2377 = vmatpush2.bf16.xpose.msra.mxu0 0
        %2378 = vmatprep.subr.bf16.mxu0 0
        %2379 = vmatpush2.bf16.xpose.msra.mxu0 0
        %2380 = vmatprep.subr.bf16.mxu0 0
        %2381 = vmatpush2.bf16.xpose.msra.mxu0 0
        %2382 = vmatprep.mubr.bf16.mxu0 0
        %2383 = vmatmul.mubr.bf16.gmra.mxu0 %v413
        %v2384 = vpop.f32.mrf.mxu0
        %v2385 = vadd.f32 0.0, %v2384
        %v2386 = vpop.f32.mrf.mxu0
        %v2387 = vpop.f32.mrf.mxu0
        %v2388 = vpop.f32.mrf.mxu0
        %2389 = vdwg.mxu0
        %v2390 = vmul.f32 %v2345, %v2385
        %v2391 = vsel %vm511, %v2390, 0.0
        %2392 = vadd.xlane.f32.xlu0 %v2391
        %v2393 = vpop.xlane.xlu0 %2392
        %v2394 = vrot.slane %v2393, 4
        %v2395 = vadd.f32 %v2393, %v2394
        %v2396 = vrot.slane %v2395, 2
        %v2397 = vadd.f32 %v2395, %v2396
        %v2398 = vrot.slane %v2397, 1
        %v2399 = vadd.f32 %v2397, %v2398
        %s2400 = vtos %v2399
        %v2401 = vstv %s2400
        %v2402 = vmul.f32 %v2345, %v2345
        %v2403 = vsel %vm511, %v2402, 0.0
        %2404 = vadd.xlane.f32.xlu0 %v2403
        %v2405 = vpop.xlane.xlu0 %2404
        %v2406 = vrot.slane %v2405, 4
        %v2407 = vadd.f32 %v2405, %v2406
        %v2408 = vrot.slane %v2407, 2
        %v2409 = vadd.f32 %v2407, %v2408
        %v2410 = vrot.slane %v2409, 1
        %v2411 = vadd.f32 %v2409, %v2410
        %s2412 = vtos %v2411
        %v2413 = vstv %s2412
        %v2414 = vmul.f32 %v2385, %v2385
        %v2415 = vsel %vm511, %v2414, 0.0
        %2416 = vadd.xlane.f32.xlu0 %v2415
        %v2417 = vpop.xlane.xlu0 %2416
        %v2418 = vrot.slane %v2417, 4
        %v2419 = vadd.f32 %v2417, %v2418
        %v2420 = vrot.slane %v2419, 2
        %v2421 = vadd.f32 %v2419, %v2420
        %v2422 = vrot.slane %v2421, 1
        %v2423 = vadd.f32 %v2421, %v2422
        %s2424 = vtos %v2423
        %v2425 = vstv %s2424
        %v2426 = vand.u32 2147483647, %v2401
        %v2427 = vadd.f32 %v2413, 1e-30
        %v2428 = vrsqrt.pop %v2427
        %v2429 = vmul.f32 %v2426, %v2428
        %v2430 = vadd.f32 %v2425, 1e-30
        %v2431 = vrsqrt.pop %v2430
        %v2432 = vmul.f32 %v2429, %v2431
        %v2433 = vadd.f32 %v2214, %v2432
        %v2434 = vmul.f32 %v333, %v333
        %2435 = vadd.xlane.f32.xlu0 %v2434
        %v2436 = vpop.xlane.xlu0 %2435
        %v2438 = vlaneseq
        %v2439 = vshrl.u32 %v2438, 7
        %v2440 = vsub.s32 %v588, %v2439
        %v2441 = vrot.slane %v2436, %v2440
        %v2442 = vsel %vm621, %v935, %v620
        %v2443 = vsel %vm623, %v1226, %v2442
        %v2444 = vsel %vm625, %v1501, %v2443
        %v2445 = vsel %vm627, %v1760, %v2444
        %v2446 = vsel %vm629, %v2003, %v2445
        %v2447 = vsel %vm631, %v2230, %v2446
        %v2448 = vsel %vm633, %v2441, %v2447
        %v2450 = vsel %vm511, %v2448, 0.0
        %2451 = vadd.xlane.f32.xlu0 %v2450
        %v2452 = vpop.xlane.xlu0 %2451
        %v2453 = vmul.f32 %v429, %v429
        %2454 = vadd.xlane.f32.xlu0 %v2453
        %v2455 = vpop.xlane.xlu0 %2454
        %v2457 = vlaneseq
        %v2458 = vshrl.u32 %v2457, 7
        %v2459 = vsub.s32 %v588, %v2458
        %v2460 = vrot.slane %v2455, %v2459
        %v2461 = vsel %vm621, %v1002, %v702
        %v2462 = vsel %vm623, %v1285, %v2461
        %v2463 = vsel %vm625, %v1552, %v2462
        %v2464 = vsel %vm627, %v1803, %v2463
        %v2465 = vsel %vm629, %v2038, %v2464
        %v2466 = vsel %vm631, %v2257, %v2465
        %v2467 = vsel %vm633, %v2460, %v2466
        %v2469 = vsel %vm511, %v2467, 0.0
        %2470 = vadd.xlane.f32.xlu0 %v2469
        %v2471 = vpop.xlane.xlu0 %2470
        %v2472 = vmul.f32 %v2452, 0.0009765625
        %v2473 = vmul.f32 %v2471, 0.0009765625
        %v2474 = vmul.f32 %v2472, %v2473
        %v2475 = vsel %vm717, %v2474, 0.0
        %2476 = vadd.xlane.f32.xlu0 %v2475
        %v2477 = vpop.xlane.xlu0 %2476
        %v2478 = vrot.slane %v2477, 4
        %v2479 = vadd.f32 %v2477, %v2478
        %v2480 = vrot.slane %v2479, 2
        %v2481 = vadd.f32 %v2479, %v2480
        %v2482 = vrot.slane %v2481, 1
        %v2483 = vadd.f32 %v2481, %v2482
        %s2484 = vtos %v2483
        %v2485 = vstv %s2484
        %v2486 = vadd.f32 %v2283, %v2485
        %v2487 = vmul.f32 %v2472, %v2472
        %v2488 = vsel %vm717, %v2487, 0.0
        %2489 = vadd.xlane.f32.xlu0 %v2488
        %v2490 = vpop.xlane.xlu0 %2489
        %v2491 = vrot.slane %v2490, 4
        %v2492 = vadd.f32 %v2490, %v2491
        %v2493 = vrot.slane %v2492, 2
        %v2494 = vadd.f32 %v2492, %v2493
        %v2495 = vrot.slane %v2494, 1
        %v2496 = vadd.f32 %v2494, %v2495
        %s2497 = vtos %v2496
        %v2498 = vstv %s2497
        %v2499 = vadd.f32 %v2296, %v2498
        %v2500 = vmul.f32 %v2473, %v2473
        %v2501 = vsel %vm717, %v2500, 0.0
        %2502 = vadd.xlane.f32.xlu0 %v2501
        %v2503 = vpop.xlane.xlu0 %2502
        %v2504 = vrot.slane %v2503, 4
        %v2505 = vadd.f32 %v2503, %v2504
        %v2506 = vrot.slane %v2505, 2
        %v2507 = vadd.f32 %v2505, %v2506
        %v2508 = vrot.slane %v2507, 1
        %v2509 = vadd.f32 %v2507, %v2508
        %s2510 = vtos %v2509
        %v2511 = vstv %s2510
        %v2512 = vadd.f32 %v2309, %v2511
        %v2513 = vmul.f32 %v2433, 0.125
        %v2514 = vadd.f32 %v2513, 1e-08
        %v2515 = vlog2.pop %v2514
        %v2516 = vmul.f32 %v2515, 0.6931472
        %v2517 = vsub.f32 0.0, %v2516
        %v2518 = vand.u32 2147483647, %v2486
        %v2519 = vadd.f32 %v2499, 1e-30
        %v2520 = vrsqrt.pop %v2519
        %v2521 = vmul.f32 %v2518, %v2520
        %v2522 = vadd.f32 %v2512, 1e-30
        %v2523 = vrsqrt.pop %v2522
        %v2524 = vmul.f32 %v2521, %v2523
        %v2525 = vadd.f32 %v2524, 1e-08
        %v2526 = vlog2.pop %v2525
        %v2527 = vmul.f32 %v2526, 0.6931472
        %v2528 = vsub.f32 0.0, %v2527
        %vm2529 = vcmask 0
        %2530 = vst.msk [vmem:[%s232] sm:$0x1] %vm2529, %v2517
        %2531 = vst.msk [vmem:[%s235] sm:$0x1] %vm2529, %v2528
        %p2532 = scmp.lt.s32.totalorder %s21, 4
        %s2533 = scalar_select %p2532, %s21, 4
        %s2534 = scalar_lea.vmem %s2, %s2533
        %p2535 = scmp.lt.s32.totalorder %s21, 4
        %s2536 = scalar_select %p2535, %s21, 4
        %s2537 = scalar_lea.vmem %s3, %s2536
        // Predicated region
        $region37: #{tpu_custom_call.1} parent=27 // pred_check
          %p2538 = pneg %p91
        $region38: #{tpu_custom_call.1} parent=27 // pred_check_branch
          %2540 = sbr.rel (%p2538) target = $region40
        $region39: #{tpu_custom_call.1} parent=27 // pred_region
          _
        $region40: #{tpu_custom_call.1} parent=27 // pred_fallthru
          _
        // Predicated region
        $region41: #{tpu_custom_call.1} parent=27 // pred_check
          %p2541 = pneg %p117
        $region42: #{tpu_custom_call.1} parent=27 // pred_check_branch
          %2543 = sbr.rel (%p2541) target = $region44
        $region43: #{tpu_custom_call.1} parent=27 // pred_region
          _
        $region44: #{tpu_custom_call.1} parent=27 // pred_fallthru
          _
      $region28: #{tpu_custom_call.1} parent=5 // pred_fallthru
        _
      %p2544 = scmp.le.s32.totalorder 2, %s16
      // Predicated region
      $region45: #{tpu_custom_call.1} parent=5 // pred_check
        %p2545 = pneg %p2544
      $region46: #{tpu_custom_call.1} parent=5 // pred_check_branch
        %2547 = sbr.rel (%p2545) target = $region48
      $region47: #{tpu_custom_call.1} parent=5 // pred_region
        %s2548 = ssub.s32 %s16, 2
        // Predicated region
        $region49: #{tpu_custom_call.1} parent=47 // pred_check
          %p2549 = pneg %p97
        $region50: #{tpu_custom_call.1} parent=47 // pred_check_branch
          %2551 = sbr.rel (%p2549) target = $region52
        $region51: #{tpu_custom_call.1} parent=47 // pred_region
          %p2552 = scmp.lt.s32.totalorder %s22, 4
          %s2553 = scalar_select %p2552, %s22, 4
          %s2554 = scalar_lea.vmem %s2, %s2553
        $region52: #{tpu_custom_call.1} parent=47 // pred_fallthru
          _
        // Predicated region
        $region53: #{tpu_custom_call.1} parent=47 // pred_check
          %p2555 = pneg %p123
        $region54: #{tpu_custom_call.1} parent=47 // pred_check_branch
          %2557 = sbr.rel (%p2555) target = $region56
        $region55: #{tpu_custom_call.1} parent=47 // pred_region
          %p2558 = scmp.lt.s32.totalorder %s22, 4
          %s2559 = scalar_select %p2558, %s22, 4
          %s2560 = scalar_lea.vmem %s3, %s2559
        $region56: #{tpu_custom_call.1} parent=47 // pred_fallthru
          _
      $region48: #{tpu_custom_call.1} parent=5 // pred_fallthru
        _
    $region6: #{tpu_custom_call.1} parent=1 // loop_footer
      %s20 = sadd.s32 1, %s16
    $region7: #{tpu_custom_call.1} parent=1 // loop_footer_branch
      %15 = sbr.rel target = $region3
    $region8: #{tpu_custom_call.1} parent=1 // loop_exit
      _
    %2561 = vsyncpa [#allocation3], 1
    %s2562 = scalar_lea.sflag [#allocation3], 1
    %2563 = vsyncpa %s2562, 1
    %2564 = vsyncpa [#allocation5], 1
    %s2565 = scalar_lea.sflag [#allocation5], 1
    %2566 = vsyncpa %s2565, 1

</llo_original>
